<compile_context>
chip_gen: v5e
topology: v5e:2x2
jax: 0.10.0
libtpu: 0.0.40
codegen_flags: <defaults>
</compile_context>

<pallas_src>
import jax
import jax.numpy as jnp
from jax.experimental import pallas as pl
from jax.experimental.pallas import tpu as pltpu


def _round_up(x, m):
    return (x + m - 1) // m * m


def _vmem_bytes_estimate(B_BLK, T_BLK, I, Hp, Op):
    """Rough per-kernel VMEM footprint (bf16 weights, Buffered(1))."""
    bf = 2
    weights = (I * 3 * Hp + Hp * 3 * Hp + Hp * Op) * bf      # single-buffered
    x_blk = 2 * B_BLK * T_BLK * I * bf                       # double-buffered
    out_blk = 2 * B_BLK * T_BLK * Op * 4
    h0_blk = 2 * B_BLK * Hp * 4
    hfin_blk = 2 * B_BLK * Hp * 4
    scratch = (B_BLK * Hp + T_BLK * B_BLK * Hp) * 4          # h_sc + hs_sc
    temps = B_BLK * T_BLK * (3 * Hp + Op) * 4                # gi_all / out values
    return weights + x_blk + out_blk + h0_blk + hfin_blk + scratch + temps


def _pick_b_block(Bp, cap=64):
    """Multiple-of-8 divisor of Bp, capped; prefers >=2 blocks once Bp >= 16."""
    if Bp <= 8:
        return Bp
    limit = min(cap, Bp // 2)
    best = 8
    for bb in range(8, limit + 1, 8):
        if Bp % bb == 0:
            best = bb
    return best


def _pick_t_block(T, B_BLK, I, Hp, Op, budget, cap=64):
    """Largest time block (<= cap, multiple of 8, divides T, or T itself) in budget."""
    cands = []
    if T <= cap:
        cands.append(T)
    start = min(cap, T)
    start -= start % 8
    for c in range(start, 0, -8):
        if c != T and T % c == 0:
            cands.append(c)
    if not cands:
        return T
    for c in cands:
        if _vmem_bytes_estimate(B_BLK, c, I, Hp, Op) <= budget:
            return c
    return cands[-1]


def _gru_decoder_kernel(x_ref, wi_ref, wh_ref, wo_ref, h0_ref,
                        out_ref, hfin_ref, h_sc, hs_sc):
    t_blk = pl.program_id(1)
    T_BLK, B_BLK, Hp = hs_sc.shape

    # Load the recurrent state from the encoder hidden at the first time block.
    @pl.when(t_blk == 0)
    def _():
        h_sc[...] = h0_ref[...].astype(jnp.float32)

    # --- One big bf16 MXU matmul for the whole time block's input->hidden
    #     gates, staged TIME-MAJOR so each serial step reads a contiguous
    #     (B_BLK, 3*Hp) slab (no sublane-strided gathers on the serial path).
    x_tm = jnp.transpose(x_ref[...], (1, 0, 2))               # (T_BLK, B_BLK, I) bf16
    gi_all = jnp.dot(x_tm.reshape(T_BLK * B_BLK, x_tm.shape[-1]),
                     wi_ref[...],
                     preferred_element_type=jnp.float32)      # (T*B, 3*Hp) f32
    gi_all = gi_all.reshape(T_BLK, B_BLK, 3 * Hp)

    wh = wh_ref[...]                                          # (Hp, 3*Hp) bf16

    # --- Serial recurrence: only h @ W_hh + gate math per step.  T_BLK is a
    # small static int, so a fully unrolled loop keeps every index static.
    h = h_sc[...]                                             # (B_BLK, Hp) f32 carry
    for s in range(T_BLK):
        gi = gi_all[s]                                        # contiguous (B_BLK, 3*Hp)
        gh = jnp.dot(h.astype(jnp.bfloat16), wh,
                     preferred_element_type=jnp.float32)      # (B_BLK, 3*Hp)
        r = jax.nn.sigmoid(gi[:, 0 * Hp:1 * Hp] + gh[:, 0 * Hp:1 * Hp])
        z = jax.nn.sigmoid(gi[:, 1 * Hp:2 * Hp] + gh[:, 1 * Hp:2 * Hp])
        n = jnp.tanh(gi[:, 2 * Hp:3 * Hp] + r * gh[:, 2 * Hp:3 * Hp])
        h = n + z * (h - n)                                   # == (1-z)*n + z*h
        hs_sc[s] = h                                          # full (B_BLK, Hp) slab
    h_sc[...] = h

    # --- Batched Defc projection for the whole block; one in-VMEM transpose
    #     back to batch-major for the lane-dense (Op multiple of 128) store.
    hs = hs_sc[...].reshape(T_BLK * B_BLK, Hp).astype(jnp.bfloat16)
    out_tm = jnp.dot(hs, wo_ref[...], preferred_element_type=jnp.float32)
    out_tm = out_tm.reshape(T_BLK, B_BLK, -1)
    out_ref[...] = jnp.transpose(out_tm, (1, 0, 2)).astype(out_ref.dtype)

    # Final hidden state: written from the persistent scratch at the last block.
    @pl.when(t_blk == pl.num_programs(1) - 1)
    def _():
        hfin_ref[...] = h_sc[...].astype(hfin_ref.dtype)


def gru_decoder_forward(x_input, encoder_hidden_states, w_ih, w_hh, w_defc,
                        *, t_block=None):
    """Pallas equivalent of gru_decoder.forward.

    Args:
      x_input:               (B, T, input_size)           float32, batch_first
      encoder_hidden_states: (num_layers=1, B, hidden)    float32
      w_ih:    PyTorch gru.weight_ih_l0, (3*hidden, input_size)
      w_hh:    PyTorch gru.weight_hh_l0, (3*hidden, hidden)
      w_defc:  PyTorch Defc.weight,      (output_size, hidden)

    Returns:
      (output, hidden): output (B, T, output_size), hidden (1, B, hidden).
    """
    B, T, I = x_input.shape
    H = w_hh.shape[1]
    O = w_defc.shape[0]
    Hp = _round_up(H, 128)          # lane-aligned hidden (per gate)
    Op = _round_up(O, 128)          # lane-dense output slab
    Bp = _round_up(B, 8)            # sublane-aligned batch

    B_BLK = _pick_b_block(Bp)       # multiple of 8, >= 2 blocks when possible (v7x)

    # VMEM budget: leave headroom below the chip's physical capacity (64 MiB v7x).
    try:
        vmem_cap = int(pltpu.get_tpu_info().vmem_capacity_bytes)
    except Exception:
        vmem_cap = 64 * 1024 * 1024
    vmem_budget = min(int(vmem_cap * 0.85), 112 * 1024 * 1024)

    if t_block is None:
        T_BLK = _pick_t_block(T, B_BLK, I, Hp, Op, vmem_budget)
    else:
        T_BLK = t_block
        assert T % T_BLK == 0 and (T_BLK == T or T_BLK % 8 == 0), \
            "time block must divide T and be a multiple of 8 (or T itself)"

    n_b = Bp // B_BLK
    n_t = T // T_BLK

    bf16, f32 = jnp.bfloat16, jnp.float32

    # ---- Weight prep: transpose to (in, out), pad PER GATE so [r,z,n] slices
    #      land on 128-lane boundaries, cast to bf16 for the MXU.  Zero padding
    #      provably keeps padded hidden lanes exactly 0 through the recurrence.
    wi = jnp.transpose(w_ih.astype(f32).reshape(3, H, I), (2, 0, 1))      # (I, 3, H)
    wi = jnp.pad(wi, ((0, 0), (0, 0), (0, Hp - H))).reshape(I, 3 * Hp).astype(bf16)

    wh = jnp.transpose(w_hh.astype(f32).reshape(3, H, H), (2, 0, 1))      # (H, 3, H)
    wh = jnp.pad(wh, ((0, Hp - H), (0, 0), (0, Hp - H))).reshape(Hp, 3 * Hp).astype(bf16)

    wo = jnp.pad(jnp.transpose(w_defc.astype(f32)),
                 ((0, Hp - H), (0, Op - O))).astype(bf16)                 # (Hp, Op)

    # bf16 activations (half the HBM->VMEM DMA); batch padded to sublane multiple.
    x_p = jnp.pad(x_input, ((0, Bp - B), (0, 0), (0, 0))).astype(bf16)
    h0 = jnp.pad(encoder_hidden_states[0].astype(f32),
                 ((0, Bp - B), (0, Hp - H)))                              # (Bp, Hp) f32

    def _build(weight_mode):
        wkw = {} if weight_mode is None else {"pipeline_mode": weight_mode}
        grid_spec = pltpu.PrefetchScalarGridSpec(
            num_scalar_prefetch=0,
            grid=(n_b, n_t),   # b OUTER ("parallel"), t inner (serial recurrence)
            in_specs=[
                # TODO(synk): when I << 128, fetch x once per batch tile as
                # (B_BLK, T, I) with a constant-t index map to coalesce the
                # lane-sparse per-time-block DMAs.
                pl.BlockSpec((B_BLK, T_BLK, I), lambda b, t: (b, t, 0)),
                # Resident bf16 weights: constant index map + single buffer.
                pl.BlockSpec((I, 3 * Hp), lambda b, t: (0, 0), **wkw),
                pl.BlockSpec((Hp, 3 * Hp), lambda b, t: (0, 0), **wkw),
                pl.BlockSpec((Hp, Op), lambda b, t: (0, 0), **wkw),
                pl.BlockSpec((B_BLK, Hp), lambda b, t: (b, 0)),
            ],
            out_specs=[
                pl.BlockSpec((B_BLK, T_BLK, Op), lambda b, t: (b, t, 0)),
                pl.BlockSpec((B_BLK, Hp), lambda b, t: (b, 0)),   # revisited over t
            ],
            scratch_shapes=[
                pltpu.VMEM((B_BLK, Hp), jnp.float32),             # recurrent carry
                pltpu.VMEM((T_BLK, B_BLK, Hp), jnp.float32),      # time-major h history
            ],
        )
        return pl.pallas_call(
            _gru_decoder_kernel,
            out_shape=(
                jax.ShapeDtypeStruct((Bp, T, Op), jnp.float32),
                jax.ShapeDtypeStruct((Bp, Hp), jnp.float32),
            ),
            grid_spec=grid_spec,
            compiler_params=pltpu.CompilerParams(
                dimension_semantics=("parallel", "arbitrary"),
                vmem_limit_bytes=vmem_budget,
            ),
        )

    try:
        out_pad, hfin_pad = _build(pl.Buffered(1))(x_p, wi, wh, wo, h0)
    except Exception:
        # Fallback if single-buffered pipeline_mode is rejected by this jax build.
        out_pad, hfin_pad = _build(None)(x_p, wi, wh, wo, h0)

    # Slice logical shapes back out (batch + lane padding).
    # TODO(synk): fold the lane-padding slice into the consumer when O << Op to
    # avoid this extra HBM pass over the output.
    output = out_pad[:B, :, :O]
    hidden = hfin_pad[:B, :H][None]      # (1, B, H)
    return output, hidden


def _reference_forward(x_input, encoder_hidden_states, w_ih, w_hh, w_defc):
    """Pure-JAX reference matching PyTorch nn.GRU(bias=False) + Linear(bias=False)."""
    H = w_hh.shape[1]

    def step(h, x_t):
        gi = x_t @ w_ih.T
        gh = h @ w_hh.T
        r = jax.nn.sigmoid(gi[:, :H] + gh[:, :H])
        z = jax.nn.sigmoid(gi[:, H:2 * H] + gh[:, H:2 * H])
        n = jnp.tanh(gi[:, 2 * H:] + r * gh[:, 2 * H:])
        h_new = (1.0 - z) * n + z * h
        return h_new, h_new

    h0 = encoder_hidden_states[0]
    x_tm = jnp.transpose(x_input, (1, 0, 2))
    h_last, hs = jax.lax.scan(step, h0, x_tm)
    gru_out = jnp.transpose(hs, (1, 0, 2))             # (B, T, H)
    output = gru_out @ w_defc.T
    return output, h_last[None]


if __name__ == "__main__":
    # Small, module-consistent shapes; T=16 with T_BLK=8 exercises the
    # cross-block recurrence carry, the final-hidden writeback, and B=2 -> Bp=8
    # exercises the batch (sublane) padding path.
    B, T = 2, 16
    input_size, hidden_size, output_size = 4, 32, 16

    key = jax.random.PRNGKey(0)
    k_x, k_h, k_ih, k_hh, k_fc = jax.random.split(key, 5)

    x_input = jax.random.normal(k_x, (B, T, input_size), dtype=jnp.float32)
    encoder_hidden = jax.random.normal(k_h, (1, B, hidden_size), dtype=jnp.float32)

    # Deterministic synthetic parameters (PyTorch shapes, gate order [r, z, n]).
    scale = 1.0 / jnp.sqrt(jnp.float32(hidden_size))
    w_ih = jax.random.uniform(k_ih, (3 * hidden_size, input_size),
                              minval=-scale, maxval=scale, dtype=jnp.float32)
    w_hh = jax.random.uniform(k_hh, (3 * hidden_size, hidden_size),
                              minval=-scale, maxval=scale, dtype=jnp.float32)
    w_defc = jax.random.uniform(k_fc, (output_size, hidden_size),
                                minval=-scale, maxval=scale, dtype=jnp.float32)

    output, hidden = gru_decoder_forward(x_input, encoder_hidden,
                                         w_ih, w_hh, w_defc, t_block=8)
    output = jax.block_until_ready(output)
    hidden = jax.block_until_ready(hidden)

    ref_out, ref_hidden = _reference_forward(x_input, encoder_hidden,
                                             w_ih, w_hh, w_defc)

    assert output.shape == (B, T, output_size)
    assert hidden.shape == (1, B, hidden_size)
    # bf16 MXU inputs (f32 accumulation / f32 carried state) -> relaxed tolerance.
    assert jnp.allclose(output, ref_out, atol=5e-2, rtol=5e-2)
    assert jnp.allclose(hidden, ref_hidden, atol=5e-2, rtol=5e-2)

    print("KERNEL_OK")
</pallas_src>

<mosaic_0001>
module attributes {stable_mosaic.version = 11 : i64} {
  func.func @_gru_decoder_kernel(%arg0: i32, %arg1: i32, %arg2: memref<8x8x4xbf16, #tpu.memory_space<vmem>>, %arg3: memref<4x384xbf16, #tpu.memory_space<vmem>>, %arg4: memref<128x384xbf16, #tpu.memory_space<vmem>>, %arg5: memref<128x128xbf16, #tpu.memory_space<vmem>>, %arg6: memref<8x128xf32, #tpu.memory_space<vmem>>, %arg7: memref<8x8x128xf32, #tpu.memory_space<vmem>>, %arg8: memref<8x128xf32, #tpu.memory_space<vmem>>, %arg9: memref<8x128xf32, #tpu.memory_space<vmem>>, %arg10: memref<8x8x128xf32, #tpu.memory_space<vmem>>) attributes {dimension_semantics = [#tpu.dimension_semantics<parallel>, #tpu.dimension_semantics<arbitrary>], iteration_bounds = array<i64: 1, 2>, scalar_prefetch = 0 : i64, scratch_operands = 2 : i64, tpu.core_type = #tpu.core_type<tc>, window_params = [{transform_indices = @transform_0, window_bounds = array<i64: 8, 8, 4>}, {pipeline_mode = #tpu.pipeline_mode<synchronous>, transform_indices = @transform_1, window_bounds = array<i64: 4, 384>}, {pipeline_mode = #tpu.pipeline_mode<synchronous>, transform_indices = @transform_2, window_bounds = array<i64: 128, 384>}, {pipeline_mode = #tpu.pipeline_mode<synchronous>, transform_indices = @transform_3, window_bounds = array<i64: 128, 128>}, {transform_indices = @transform_4, window_bounds = array<i64: 8, 128>}, {transform_indices = @transform_5, window_bounds = array<i64: 8, 8, 128>}, {transform_indices = @transform_6, window_bounds = array<i64: 8, 128>}]} {
    %c0_i32 = arith.constant 0 : i32
    %0 = arith.cmpi eq, %arg1, %c0_i32 : i32
    %1 = arith.extui %0 : i1 to i32
    %c0_i32_0 = arith.constant 0 : i32
    %2 = arith.cmpi ne, %1, %c0_i32_0 : i32
    scf.if %2 {
      %c0_62 = arith.constant 0 : index
      %c0_63 = arith.constant 0 : index
      %271 = vector.load %arg6[%c0_62, %c0_63] : memref<8x128xf32, #tpu.memory_space<vmem>>, vector<8x128xf32>
      %c0_64 = arith.constant 0 : index
      %c0_65 = arith.constant 0 : index
      %272 = vector.load %arg9[%c0_64, %c0_65] : memref<8x128xf32, #tpu.memory_space<vmem>>, vector<8x128xf32>
      tpu.vector_store %arg9[%c0_64, %c0_65], %271 {strides = array<i32>} : memref<8x128xf32, #tpu.memory_space<vmem>>, vector<8x128xf32>,
    } else {
    }
    %c0 = arith.constant 0 : index
    %c0_1 = arith.constant 0 : index
    %c0_2 = arith.constant 0 : index
    %3 = vector.load %arg2[%c0, %c0_1, %c0_2] : memref<8x8x4xbf16, #tpu.memory_space<vmem>>, vector<8x8x4xbf16>
    %4 = tpu.transpose %3, [1, 0, 2] : vector<8x8x4xbf16> -> vector<8x8x4xbf16>
    %5 = vector.shape_cast %4 : vector<8x8x4xbf16> to vector<64x4xbf16>
    %c0_3 = arith.constant 0 : index
    %c0_4 = arith.constant 0 : index
    %6 = vector.load %arg3[%c0_3, %c0_4] : memref<4x384xbf16, #tpu.memory_space<vmem>>, vector<4x384xbf16>
    %cst = arith.constant dense<0.000000e+00> : vector<64x384xf32>
    %7 = tpu.matmul %5, %6, %cst {dimension_numbers = #tpu.dot_dimension_numbers<[1], [0], [0], [1], [0, 0, 1, 1], [], []>} : vector<64x4xbf16>, vector<4x384xbf16>, vector<64x384xf32> -> vector<64x384xf32>
    %8 = vector.shape_cast %7 : vector<64x384xf32> to vector<8x8x384xf32>
    %c0_5 = arith.constant 0 : index
    %c0_6 = arith.constant 0 : index
    %9 = vector.load %arg4[%c0_5, %c0_6] : memref<128x384xbf16, #tpu.memory_space<vmem>>, vector<128x384xbf16>
    %c0_7 = arith.constant 0 : index
    %c0_8 = arith.constant 0 : index
    %10 = vector.load %arg9[%c0_7, %c0_8] : memref<8x128xf32, #tpu.memory_space<vmem>>, vector<8x128xf32>
    %11 = vector.extract_strided_slice %8 {offsets = [0, 0, 0], sizes = [1, 8, 384], strides = [1, 1, 1]} : vector<8x8x384xf32> to vector<1x8x384xf32>
    %12 = vector.shape_cast %11 : vector<1x8x384xf32> to vector<8x384xf32>
    %13 = arith.truncf %10 : vector<8x128xf32> to vector<8x128xbf16>
    %cst_9 = arith.constant dense<0.000000e+00> : vector<8x384xf32>
    %14 = tpu.matmul %13, %9, %cst_9 {dimension_numbers = #tpu.dot_dimension_numbers<[1], [0], [0], [1], [0, 0, 1, 1], [], []>} : vector<8x128xbf16>, vector<128x384xbf16>, vector<8x384xf32> -> vector<8x384xf32>
    %15 = vector.extract_strided_slice %12 {offsets = [0, 0], sizes = [8, 128], strides = [1, 1]} : vector<8x384xf32> to vector<8x128xf32>
    %16 = vector.extract_strided_slice %14 {offsets = [0, 0], sizes = [8, 128], strides = [1, 1]} : vector<8x384xf32> to vector<8x128xf32>
    %17 = arith.addf %15, %16 : vector<8x128xf32>
    %18 = arith.negf %17 : vector<8x128xf32>
    %19 = math.exp %18 : vector<8x128xf32>
    %cst_10 = arith.constant 1.000000e+00 : f32
    %20 = vector.broadcast %cst_10 : f32 to vector<8x128xf32>
    %21 = arith.addf %20, %19 : vector<8x128xf32>
    %22 = arith.divf %20, %21 : vector<8x128xf32>
    %23 = vector.extract_strided_slice %12 {offsets = [0, 128], sizes = [8, 128], strides = [1, 1]} : vector<8x384xf32> to vector<8x128xf32>
    %24 = vector.extract_strided_slice %14 {offsets = [0, 128], sizes = [8, 128], strides = [1, 1]} : vector<8x384xf32> to vector<8x128xf32>
    %25 = arith.addf %23, %24 : vector<8x128xf32>
    %26 = arith.negf %25 : vector<8x128xf32>
    %27 = math.exp %26 : vector<8x128xf32>
    %cst_11 = arith.constant 1.000000e+00 : f32
    %28 = vector.broadcast %cst_11 : f32 to vector<8x128xf32>
    %29 = arith.addf %28, %27 : vector<8x128xf32>
    %30 = arith.divf %28, %29 : vector<8x128xf32>
    %31 = vector.extract_strided_slice %12 {offsets = [0, 256], sizes = [8, 128], strides = [1, 1]} : vector<8x384xf32> to vector<8x128xf32>
    %32 = vector.extract_strided_slice %14 {offsets = [0, 256], sizes = [8, 128], strides = [1, 1]} : vector<8x384xf32> to vector<8x128xf32>
    %33 = arith.mulf %22, %32 : vector<8x128xf32>
    %34 = arith.addf %31, %33 : vector<8x128xf32>
    %35 = math.tanh %34 : vector<8x128xf32>
    %36 = arith.subf %10, %35 : vector<8x128xf32>
    %37 = arith.mulf %30, %36 : vector<8x128xf32>
    %38 = arith.addf %35, %37 : vector<8x128xf32>
    %c0_12 = arith.constant 0 : index
    %c0_13 = arith.constant 0 : index
    %c0_14 = arith.constant 0 : index
    %39 = vector.load %arg10[%c0_12, %c0_13, %c0_14] : memref<8x8x128xf32, #tpu.memory_space<vmem>>, vector<1x8x128xf32>
    %40 = vector.shape_cast %39 : vector<1x8x128xf32> to vector<8x128xf32>
    %41 = vector.shape_cast %38 : vector<8x128xf32> to vector<1x8x128xf32>
    tpu.vector_store %arg10[%c0_12, %c0_13, %c0_14], %41 {strides = array<i32>} : memref<8x8x128xf32, #tpu.memory_space<vmem>>, vector<1x8x128xf32>,
    %42 = vector.extract_strided_slice %8 {offsets = [1, 0, 0], sizes = [1, 8, 384], strides = [1, 1, 1]} : vector<8x8x384xf32> to vector<1x8x384xf32>
    %43 = vector.shape_cast %42 : vector<1x8x384xf32> to vector<8x384xf32>
    %44 = arith.truncf %38 : vector<8x128xf32> to vector<8x128xbf16>
    %cst_15 = arith.constant dense<0.000000e+00> : vector<8x384xf32>
    %45 = tpu.matmul %44, %9, %cst_15 {dimension_numbers = #tpu.dot_dimension_numbers<[1], [0], [0], [1], [0, 0, 1, 1], [], []>} : vector<8x128xbf16>, vector<128x384xbf16>, vector<8x384xf32> -> vector<8x384xf32>
    %46 = vector.extract_strided_slice %43 {offsets = [0, 0], sizes = [8, 128], strides = [1, 1]} : vector<8x384xf32> to vector<8x128xf32>
    %47 = vector.extract_strided_slice %45 {offsets = [0, 0], sizes = [8, 128], strides = [1, 1]} : vector<8x384xf32> to vector<8x128xf32>
    %48 = arith.addf %46, %47 : vector<8x128xf32>
    %49 = arith.negf %48 : vector<8x128xf32>
    %50 = math.exp %49 : vector<8x128xf32>
    %cst_16 = arith.constant 1.000000e+00 : f32
    %51 = vector.broadcast %cst_16 : f32 to vector<8x128xf32>
    %52 = arith.addf %51, %50 : vector<8x128xf32>
    %53 = arith.divf %51, %52 : vector<8x128xf32>
    %54 = vector.extract_strided_slice %43 {offsets = [0, 128], sizes = [8, 128], strides = [1, 1]} : vector<8x384xf32> to vector<8x128xf32>
    %55 = vector.extract_strided_slice %45 {offsets = [0, 128], sizes = [8, 128], strides = [1, 1]} : vector<8x384xf32> to vector<8x128xf32>
    %56 = arith.addf %54, %55 : vector<8x128xf32>
    %57 = arith.negf %56 : vector<8x128xf32>
    %58 = math.exp %57 : vector<8x128xf32>
    %cst_17 = arith.constant 1.000000e+00 : f32
    %59 = vector.broadcast %cst_17 : f32 to vector<8x128xf32>
    %60 = arith.addf %59, %58 : vector<8x128xf32>
    %61 = arith.divf %59, %60 : vector<8x128xf32>
    %62 = vector.extract_strided_slice %43 {offsets = [0, 256], sizes = [8, 128], strides = [1, 1]} : vector<8x384xf32> to vector<8x128xf32>
    %63 = vector.extract_strided_slice %45 {offsets = [0, 256], sizes = [8, 128], strides = [1, 1]} : vector<8x384xf32> to vector<8x128xf32>
    %64 = arith.mulf %53, %63 : vector<8x128xf32>
    %65 = arith.addf %62, %64 : vector<8x128xf32>
    %66 = math.tanh %65 : vector<8x128xf32>
    %67 = arith.subf %38, %66 : vector<8x128xf32>
    %68 = arith.mulf %61, %67 : vector<8x128xf32>
    %69 = arith.addf %66, %68 : vector<8x128xf32>
    %c1 = arith.constant 1 : index
    %c0_18 = arith.constant 0 : index
    %c0_19 = arith.constant 0 : index
    %70 = vector.load %arg10[%c1, %c0_18, %c0_19] : memref<8x8x128xf32, #tpu.memory_space<vmem>>, vector<1x8x128xf32>
    %71 = vector.shape_cast %70 : vector<1x8x128xf32> to vector<8x128xf32>
    %72 = vector.shape_cast %69 : vector<8x128xf32> to vector<1x8x128xf32>
    tpu.vector_store %arg10[%c1, %c0_18, %c0_19], %72 {strides = array<i32>} : memref<8x8x128xf32, #tpu.memory_space<vmem>>, vector<1x8x128xf32>,
    %73 = vector.extract_strided_slice %8 {offsets = [2, 0, 0], sizes = [1, 8, 384], strides = [1, 1, 1]} : vector<8x8x384xf32> to vector<1x8x384xf32>
    %74 = vector.shape_cast %73 : vector<1x8x384xf32> to vector<8x384xf32>
    %75 = arith.truncf %69 : vector<8x128xf32> to vector<8x128xbf16>
    %cst_20 = arith.constant dense<0.000000e+00> : vector<8x384xf32>
    %76 = tpu.matmul %75, %9, %cst_20 {dimension_numbers = #tpu.dot_dimension_numbers<[1], [0], [0], [1], [0, 0, 1, 1], [], []>} : vector<8x128xbf16>, vector<128x384xbf16>, vector<8x384xf32> -> vector<8x384xf32>
    %77 = vector.extract_strided_slice %74 {offsets = [0, 0], sizes = [8, 128], strides = [1, 1]} : vector<8x384xf32> to vector<8x128xf32>
    %78 = vector.extract_strided_slice %76 {offsets = [0, 0], sizes = [8, 128], strides = [1, 1]} : vector<8x384xf32> to vector<8x128xf32>
    %79 = arith.addf %77, %78 : vector<8x128xf32>
    %80 = arith.negf %79 : vector<8x128xf32>
    %81 = math.exp %80 : vector<8x128xf32>
    %cst_21 = arith.constant 1.000000e+00 : f32
    %82 = vector.broadcast %cst_21 : f32 to vector<8x128xf32>
    %83 = arith.addf %82, %81 : vector<8x128xf32>
    %84 = arith.divf %82, %83 : vector<8x128xf32>
    %85 = vector.extract_strided_slice %74 {offsets = [0, 128], sizes = [8, 128], strides = [1, 1]} : vector<8x384xf32> to vector<8x128xf32>
    %86 = vector.extract_strided_slice %76 {offsets = [0, 128], sizes = [8, 128], strides = [1, 1]} : vector<8x384xf32> to vector<8x128xf32>
    %87 = arith.addf %85, %86 : vector<8x128xf32>
    %88 = arith.negf %87 : vector<8x128xf32>
    %89 = math.exp %88 : vector<8x128xf32>
    %cst_22 = arith.constant 1.000000e+00 : f32
    %90 = vector.broadcast %cst_22 : f32 to vector<8x128xf32>
    %91 = arith.addf %90, %89 : vector<8x128xf32>
    %92 = arith.divf %90, %91 : vector<8x128xf32>
    %93 = vector.extract_strided_slice %74 {offsets = [0, 256], sizes = [8, 128], strides = [1, 1]} : vector<8x384xf32> to vector<8x128xf32>
    %94 = vector.extract_strided_slice %76 {offsets = [0, 256], sizes = [8, 128], strides = [1, 1]} : vector<8x384xf32> to vector<8x128xf32>
    %95 = arith.mulf %84, %94 : vector<8x128xf32>
    %96 = arith.addf %93, %95 : vector<8x128xf32>
    %97 = math.tanh %96 : vector<8x128xf32>
    %98 = arith.subf %69, %97 : vector<8x128xf32>
    %99 = arith.mulf %92, %98 : vector<8x128xf32>
    %100 = arith.addf %97, %99 : vector<8x128xf32>
    %c2 = arith.constant 2 : index
    %c0_23 = arith.constant 0 : index
    %c0_24 = arith.constant 0 : index
    %101 = vector.load %arg10[%c2, %c0_23, %c0_24] : memref<8x8x128xf32, #tpu.memory_space<vmem>>, vector<1x8x128xf32>
    %102 = vector.shape_cast %101 : vector<1x8x128xf32> to vector<8x128xf32>
    %103 = vector.shape_cast %100 : vector<8x128xf32> to vector<1x8x128xf32>
    tpu.vector_store %arg10[%c2, %c0_23, %c0_24], %103 {strides = array<i32>} : memref<8x8x128xf32, #tpu.memory_space<vmem>>, vector<1x8x128xf32>,
    %104 = vector.extract_strided_slice %8 {offsets = [3, 0, 0], sizes = [1, 8, 384], strides = [1, 1, 1]} : vector<8x8x384xf32> to vector<1x8x384xf32>
    %105 = vector.shape_cast %104 : vector<1x8x384xf32> to vector<8x384xf32>
    %106 = arith.truncf %100 : vector<8x128xf32> to vector<8x128xbf16>
    %cst_25 = arith.constant dense<0.000000e+00> : vector<8x384xf32>
    %107 = tpu.matmul %106, %9, %cst_25 {dimension_numbers = #tpu.dot_dimension_numbers<[1], [0], [0], [1], [0, 0, 1, 1], [], []>} : vector<8x128xbf16>, vector<128x384xbf16>, vector<8x384xf32> -> vector<8x384xf32>
    %108 = vector.extract_strided_slice %105 {offsets = [0, 0], sizes = [8, 128], strides = [1, 1]} : vector<8x384xf32> to vector<8x128xf32>
    %109 = vector.extract_strided_slice %107 {offsets = [0, 0], sizes = [8, 128], strides = [1, 1]} : vector<8x384xf32> to vector<8x128xf32>
    %110 = arith.addf %108, %109 : vector<8x128xf32>
    %111 = arith.negf %110 : vector<8x128xf32>
    %112 = math.exp %111 : vector<8x128xf32>
    %cst_26 = arith.constant 1.000000e+00 : f32
    %113 = vector.broadcast %cst_26 : f32 to vector<8x128xf32>
    %114 = arith.addf %113, %112 : vector<8x128xf32>
    %115 = arith.divf %113, %114 : vector<8x128xf32>
    %116 = vector.extract_strided_slice %105 {offsets = [0, 128], sizes = [8, 128], strides = [1, 1]} : vector<8x384xf32> to vector<8x128xf32>
    %117 = vector.extract_strided_slice %107 {offsets = [0, 128], sizes = [8, 128], strides = [1, 1]} : vector<8x384xf32> to vector<8x128xf32>
    %118 = arith.addf %116, %117 : vector<8x128xf32>
    %119 = arith.negf %118 : vector<8x128xf32>
    %120 = math.exp %119 : vector<8x128xf32>
    %cst_27 = arith.constant 1.000000e+00 : f32
    %121 = vector.broadcast %cst_27 : f32 to vector<8x128xf32>
    %122 = arith.addf %121, %120 : vector<8x128xf32>
    %123 = arith.divf %121, %122 : vector<8x128xf32>
    %124 = vector.extract_strided_slice %105 {offsets = [0, 256], sizes = [8, 128], strides = [1, 1]} : vector<8x384xf32> to vector<8x128xf32>
    %125 = vector.extract_strided_slice %107 {offsets = [0, 256], sizes = [8, 128], strides = [1, 1]} : vector<8x384xf32> to vector<8x128xf32>
    %126 = arith.mulf %115, %125 : vector<8x128xf32>
    %127 = arith.addf %124, %126 : vector<8x128xf32>
    %128 = math.tanh %127 : vector<8x128xf32>
    %129 = arith.subf %100, %128 : vector<8x128xf32>
    %130 = arith.mulf %123, %129 : vector<8x128xf32>
    %131 = arith.addf %128, %130 : vector<8x128xf32>
    %c3 = arith.constant 3 : index
    %c0_28 = arith.constant 0 : index
    %c0_29 = arith.constant 0 : index
    %132 = vector.load %arg10[%c3, %c0_28, %c0_29] : memref<8x8x128xf32, #tpu.memory_space<vmem>>, vector<1x8x128xf32>
    %133 = vector.shape_cast %132 : vector<1x8x128xf32> to vector<8x128xf32>
    %134 = vector.shape_cast %131 : vector<8x128xf32> to vector<1x8x128xf32>
    tpu.vector_store %arg10[%c3, %c0_28, %c0_29], %134 {strides = array<i32>} : memref<8x8x128xf32, #tpu.memory_space<vmem>>, vector<1x8x128xf32>,
    %135 = vector.extract_strided_slice %8 {offsets = [4, 0, 0], sizes = [1, 8, 384], strides = [1, 1, 1]} : vector<8x8x384xf32> to vector<1x8x384xf32>
    %136 = vector.shape_cast %135 : vector<1x8x384xf32> to vector<8x384xf32>
    %137 = arith.truncf %131 : vector<8x128xf32> to vector<8x128xbf16>
    %cst_30 = arith.constant dense<0.000000e+00> : vector<8x384xf32>
    %138 = tpu.matmul %137, %9, %cst_30 {dimension_numbers = #tpu.dot_dimension_numbers<[1], [0], [0], [1], [0, 0, 1, 1], [], []>} : vector<8x128xbf16>, vector<128x384xbf16>, vector<8x384xf32> -> vector<8x384xf32>
    %139 = vector.extract_strided_slice %136 {offsets = [0, 0], sizes = [8, 128], strides = [1, 1]} : vector<8x384xf32> to vector<8x128xf32>
    %140 = vector.extract_strided_slice %138 {offsets = [0, 0], sizes = [8, 128], strides = [1, 1]} : vector<8x384xf32> to vector<8x128xf32>
    %141 = arith.addf %139, %140 : vector<8x128xf32>
    %142 = arith.negf %141 : vector<8x128xf32>
    %143 = math.exp %142 : vector<8x128xf32>
    %cst_31 = arith.constant 1.000000e+00 : f32
    %144 = vector.broadcast %cst_31 : f32 to vector<8x128xf32>
    %145 = arith.addf %144, %143 : vector<8x128xf32>
    %146 = arith.divf %144, %145 : vector<8x128xf32>
    %147 = vector.extract_strided_slice %136 {offsets = [0, 128], sizes = [8, 128], strides = [1, 1]} : vector<8x384xf32> to vector<8x128xf32>
    %148 = vector.extract_strided_slice %138 {offsets = [0, 128], sizes = [8, 128], strides = [1, 1]} : vector<8x384xf32> to vector<8x128xf32>
    %149 = arith.addf %147, %148 : vector<8x128xf32>
    %150 = arith.negf %149 : vector<8x128xf32>
    %151 = math.exp %150 : vector<8x128xf32>
    %cst_32 = arith.constant 1.000000e+00 : f32
    %152 = vector.broadcast %cst_32 : f32 to vector<8x128xf32>
    %153 = arith.addf %152, %151 : vector<8x128xf32>
    %154 = arith.divf %152, %153 : vector<8x128xf32>
    %155 = vector.extract_strided_slice %136 {offsets = [0, 256], sizes = [8, 128], strides = [1, 1]} : vector<8x384xf32> to vector<8x128xf32>
    %156 = vector.extract_strided_slice %138 {offsets = [0, 256], sizes = [8, 128], strides = [1, 1]} : vector<8x384xf32> to vector<8x128xf32>
    %157 = arith.mulf %146, %156 : vector<8x128xf32>
    %158 = arith.addf %155, %157 : vector<8x128xf32>
    %159 = math.tanh %158 : vector<8x128xf32>
    %160 = arith.subf %131, %159 : vector<8x128xf32>
    %161 = arith.mulf %154, %160 : vector<8x128xf32>
    %162 = arith.addf %159, %161 : vector<8x128xf32>
    %c4 = arith.constant 4 : index
    %c0_33 = arith.constant 0 : index
    %c0_34 = arith.constant 0 : index
    %163 = vector.load %arg10[%c4, %c0_33, %c0_34] : memref<8x8x128xf32, #tpu.memory_space<vmem>>, vector<1x8x128xf32>
    %164 = vector.shape_cast %163 : vector<1x8x128xf32> to vector<8x128xf32>
    %165 = vector.shape_cast %162 : vector<8x128xf32> to vector<1x8x128xf32>
    tpu.vector_store %arg10[%c4, %c0_33, %c0_34], %165 {strides = array<i32>} : memref<8x8x128xf32, #tpu.memory_space<vmem>>, vector<1x8x128xf32>,
    %166 = vector.extract_strided_slice %8 {offsets = [5, 0, 0], sizes = [1, 8, 384], strides = [1, 1, 1]} : vector<8x8x384xf32> to vector<1x8x384xf32>
    %167 = vector.shape_cast %166 : vector<1x8x384xf32> to vector<8x384xf32>
    %168 = arith.truncf %162 : vector<8x128xf32> to vector<8x128xbf16>
    %cst_35 = arith.constant dense<0.000000e+00> : vector<8x384xf32>
    %169 = tpu.matmul %168, %9, %cst_35 {dimension_numbers = #tpu.dot_dimension_numbers<[1], [0], [0], [1], [0, 0, 1, 1], [], []>} : vector<8x128xbf16>, vector<128x384xbf16>, vector<8x384xf32> -> vector<8x384xf32>
    %170 = vector.extract_strided_slice %167 {offsets = [0, 0], sizes = [8, 128], strides = [1, 1]} : vector<8x384xf32> to vector<8x128xf32>
    %171 = vector.extract_strided_slice %169 {offsets = [0, 0], sizes = [8, 128], strides = [1, 1]} : vector<8x384xf32> to vector<8x128xf32>
    %172 = arith.addf %170, %171 : vector<8x128xf32>
    %173 = arith.negf %172 : vector<8x128xf32>
    %174 = math.exp %173 : vector<8x128xf32>
    %cst_36 = arith.constant 1.000000e+00 : f32
    %175 = vector.broadcast %cst_36 : f32 to vector<8x128xf32>
    %176 = arith.addf %175, %174 : vector<8x128xf32>
    %177 = arith.divf %175, %176 : vector<8x128xf32>
    %178 = vector.extract_strided_slice %167 {offsets = [0, 128], sizes = [8, 128], strides = [1, 1]} : vector<8x384xf32> to vector<8x128xf32>
    %179 = vector.extract_strided_slice %169 {offsets = [0, 128], sizes = [8, 128], strides = [1, 1]} : vector<8x384xf32> to vector<8x128xf32>
    %180 = arith.addf %178, %179 : vector<8x128xf32>
    %181 = arith.negf %180 : vector<8x128xf32>
    %182 = math.exp %181 : vector<8x128xf32>
    %cst_37 = arith.constant 1.000000e+00 : f32
    %183 = vector.broadcast %cst_37 : f32 to vector<8x128xf32>
    %184 = arith.addf %183, %182 : vector<8x128xf32>
    %185 = arith.divf %183, %184 : vector<8x128xf32>
    %186 = vector.extract_strided_slice %167 {offsets = [0, 256], sizes = [8, 128], strides = [1, 1]} : vector<8x384xf32> to vector<8x128xf32>
    %187 = vector.extract_strided_slice %169 {offsets = [0, 256], sizes = [8, 128], strides = [1, 1]} : vector<8x384xf32> to vector<8x128xf32>
    %188 = arith.mulf %177, %187 : vector<8x128xf32>
    %189 = arith.addf %186, %188 : vector<8x128xf32>
    %190 = math.tanh %189 : vector<8x128xf32>
    %191 = arith.subf %162, %190 : vector<8x128xf32>
    %192 = arith.mulf %185, %191 : vector<8x128xf32>
    %193 = arith.addf %190, %192 : vector<8x128xf32>
    %c5 = arith.constant 5 : index
    %c0_38 = arith.constant 0 : index
    %c0_39 = arith.constant 0 : index
    %194 = vector.load %arg10[%c5, %c0_38, %c0_39] : memref<8x8x128xf32, #tpu.memory_space<vmem>>, vector<1x8x128xf32>
    %195 = vector.shape_cast %194 : vector<1x8x128xf32> to vector<8x128xf32>
    %196 = vector.shape_cast %193 : vector<8x128xf32> to vector<1x8x128xf32>
    tpu.vector_store %arg10[%c5, %c0_38, %c0_39], %196 {strides = array<i32>} : memref<8x8x128xf32, #tpu.memory_space<vmem>>, vector<1x8x128xf32>,
    %197 = vector.extract_strided_slice %8 {offsets = [6, 0, 0], sizes = [1, 8, 384], strides = [1, 1, 1]} : vector<8x8x384xf32> to vector<1x8x384xf32>
    %198 = vector.shape_cast %197 : vector<1x8x384xf32> to vector<8x384xf32>
    %199 = arith.truncf %193 : vector<8x128xf32> to vector<8x128xbf16>
    %cst_40 = arith.constant dense<0.000000e+00> : vector<8x384xf32>
    %200 = tpu.matmul %199, %9, %cst_40 {dimension_numbers = #tpu.dot_dimension_numbers<[1], [0], [0], [1], [0, 0, 1, 1], [], []>} : vector<8x128xbf16>, vector<128x384xbf16>, vector<8x384xf32> -> vector<8x384xf32>
    %201 = vector.extract_strided_slice %198 {offsets = [0, 0], sizes = [8, 128], strides = [1, 1]} : vector<8x384xf32> to vector<8x128xf32>
    %202 = vector.extract_strided_slice %200 {offsets = [0, 0], sizes = [8, 128], strides = [1, 1]} : vector<8x384xf32> to vector<8x128xf32>
    %203 = arith.addf %201, %202 : vector<8x128xf32>
    %204 = arith.negf %203 : vector<8x128xf32>
    %205 = math.exp %204 : vector<8x128xf32>
    %cst_41 = arith.constant 1.000000e+00 : f32
    %206 = vector.broadcast %cst_41 : f32 to vector<8x128xf32>
    %207 = arith.addf %206, %205 : vector<8x128xf32>
    %208 = arith.divf %206, %207 : vector<8x128xf32>
    %209 = vector.extract_strided_slice %198 {offsets = [0, 128], sizes = [8, 128], strides = [1, 1]} : vector<8x384xf32> to vector<8x128xf32>
    %210 = vector.extract_strided_slice %200 {offsets = [0, 128], sizes = [8, 128], strides = [1, 1]} : vector<8x384xf32> to vector<8x128xf32>
    %211 = arith.addf %209, %210 : vector<8x128xf32>
    %212 = arith.negf %211 : vector<8x128xf32>
    %213 = math.exp %212 : vector<8x128xf32>
    %cst_42 = arith.constant 1.000000e+00 : f32
    %214 = vector.broadcast %cst_42 : f32 to vector<8x128xf32>
    %215 = arith.addf %214, %213 : vector<8x128xf32>
    %216 = arith.divf %214, %215 : vector<8x128xf32>
    %217 = vector.extract_strided_slice %198 {offsets = [0, 256], sizes = [8, 128], strides = [1, 1]} : vector<8x384xf32> to vector<8x128xf32>
    %218 = vector.extract_strided_slice %200 {offsets = [0, 256], sizes = [8, 128], strides = [1, 1]} : vector<8x384xf32> to vector<8x128xf32>
    %219 = arith.mulf %208, %218 : vector<8x128xf32>
    %220 = arith.addf %217, %219 : vector<8x128xf32>
    %221 = math.tanh %220 : vector<8x128xf32>
    %222 = arith.subf %193, %221 : vector<8x128xf32>
    %223 = arith.mulf %216, %222 : vector<8x128xf32>
    %224 = arith.addf %221, %223 : vector<8x128xf32>
    %c6 = arith.constant 6 : index
    %c0_43 = arith.constant 0 : index
    %c0_44 = arith.constant 0 : index
    %225 = vector.load %arg10[%c6, %c0_43, %c0_44] : memref<8x8x128xf32, #tpu.memory_space<vmem>>, vector<1x8x128xf32>
    %226 = vector.shape_cast %225 : vector<1x8x128xf32> to vector<8x128xf32>
    %227 = vector.shape_cast %224 : vector<8x128xf32> to vector<1x8x128xf32>
    tpu.vector_store %arg10[%c6, %c0_43, %c0_44], %227 {strides = array<i32>} : memref<8x8x128xf32, #tpu.memory_space<vmem>>, vector<1x8x128xf32>,
    %228 = vector.extract_strided_slice %8 {offsets = [7, 0, 0], sizes = [1, 8, 384], strides = [1, 1, 1]} : vector<8x8x384xf32> to vector<1x8x384xf32>
    %229 = vector.shape_cast %228 : vector<1x8x384xf32> to vector<8x384xf32>
    %230 = arith.truncf %224 : vector<8x128xf32> to vector<8x128xbf16>
    %cst_45 = arith.constant dense<0.000000e+00> : vector<8x384xf32>
    %231 = tpu.matmul %230, %9, %cst_45 {dimension_numbers = #tpu.dot_dimension_numbers<[1], [0], [0], [1], [0, 0, 1, 1], [], []>} : vector<8x128xbf16>, vector<128x384xbf16>, vector<8x384xf32> -> vector<8x384xf32>
    %232 = vector.extract_strided_slice %229 {offsets = [0, 0], sizes = [8, 128], strides = [1, 1]} : vector<8x384xf32> to vector<8x128xf32>
    %233 = vector.extract_strided_slice %231 {offsets = [0, 0], sizes = [8, 128], strides = [1, 1]} : vector<8x384xf32> to vector<8x128xf32>
    %234 = arith.addf %232, %233 : vector<8x128xf32>
    %235 = arith.negf %234 : vector<8x128xf32>
    %236 = math.exp %235 : vector<8x128xf32>
    %cst_46 = arith.constant 1.000000e+00 : f32
    %237 = vector.broadcast %cst_46 : f32 to vector<8x128xf32>
    %238 = arith.addf %237, %236 : vector<8x128xf32>
    %239 = arith.divf %237, %238 : vector<8x128xf32>
    %240 = vector.extract_strided_slice %229 {offsets = [0, 128], sizes = [8, 128], strides = [1, 1]} : vector<8x384xf32> to vector<8x128xf32>
    %241 = vector.extract_strided_slice %231 {offsets = [0, 128], sizes = [8, 128], strides = [1, 1]} : vector<8x384xf32> to vector<8x128xf32>
    %242 = arith.addf %240, %241 : vector<8x128xf32>
    %243 = arith.negf %242 : vector<8x128xf32>
    %244 = math.exp %243 : vector<8x128xf32>
    %cst_47 = arith.constant 1.000000e+00 : f32
    %245 = vector.broadcast %cst_47 : f32 to vector<8x128xf32>
    %246 = arith.addf %245, %244 : vector<8x128xf32>
    %247 = arith.divf %245, %246 : vector<8x128xf32>
    %248 = vector.extract_strided_slice %229 {offsets = [0, 256], sizes = [8, 128], strides = [1, 1]} : vector<8x384xf32> to vector<8x128xf32>
    %249 = vector.extract_strided_slice %231 {offsets = [0, 256], sizes = [8, 128], strides = [1, 1]} : vector<8x384xf32> to vector<8x128xf32>
    %250 = arith.mulf %239, %249 : vector<8x128xf32>
    %251 = arith.addf %248, %250 : vector<8x128xf32>
    %252 = math.tanh %251 : vector<8x128xf32>
    %253 = arith.subf %224, %252 : vector<8x128xf32>
    %254 = arith.mulf %247, %253 : vector<8x128xf32>
    %255 = arith.addf %252, %254 : vector<8x128xf32>
    %c7 = arith.constant 7 : index
    %c0_48 = arith.constant 0 : index
    %c0_49 = arith.constant 0 : index
    %256 = vector.load %arg10[%c7, %c0_48, %c0_49] : memref<8x8x128xf32, #tpu.memory_space<vmem>>, vector<1x8x128xf32>
    %257 = vector.shape_cast %256 : vector<1x8x128xf32> to vector<8x128xf32>
    %258 = vector.shape_cast %255 : vector<8x128xf32> to vector<1x8x128xf32>
    tpu.vector_store %arg10[%c7, %c0_48, %c0_49], %258 {strides = array<i32>} : memref<8x8x128xf32, #tpu.memory_space<vmem>>, vector<1x8x128xf32>,
    %c0_50 = arith.constant 0 : index
    %c0_51 = arith.constant 0 : index
    %259 = vector.load %arg9[%c0_50, %c0_51] : memref<8x128xf32, #tpu.memory_space<vmem>>, vector<8x128xf32>
    tpu.vector_store %arg9[%c0_50, %c0_51], %255 {strides = array<i32>} : memref<8x128xf32, #tpu.memory_space<vmem>>, vector<8x128xf32>,
    %c0_52 = arith.constant 0 : index
    %c0_53 = arith.constant 0 : index
    %c0_54 = arith.constant 0 : index
    %260 = vector.load %arg10[%c0_52, %c0_53, %c0_54] : memref<8x8x128xf32, #tpu.memory_space<vmem>>, vector<8x8x128xf32>
    %261 = vector.shape_cast %260 : vector<8x8x128xf32> to vector<64x128xf32>
    %262 = arith.truncf %261 : vector<64x128xf32> to vector<64x128xbf16>
    %c0_55 = arith.constant 0 : index
    %c0_56 = arith.constant 0 : index
    %263 = vector.load %arg5[%c0_55, %c0_56] : memref<128x128xbf16, #tpu.memory_space<vmem>>, vector<128x128xbf16>
    %cst_57 = arith.constant dense<0.000000e+00> : vector<64x128xf32>
    %264 = tpu.matmul %262, %263, %cst_57 {dimension_numbers = #tpu.dot_dimension_numbers<[1], [0], [0], [1], [0, 0, 1, 1], [], []>} : vector<64x128xbf16>, vector<128x128xbf16>, vector<64x128xf32> -> vector<64x128xf32>
    %265 = vector.shape_cast %264 : vector<64x128xf32> to vector<8x8x128xf32>
    %266 = tpu.transpose %265, [1, 0, 2] : vector<8x8x128xf32> -> vector<8x8x128xf32>
    %c0_58 = arith.constant 0 : index
    %c0_59 = arith.constant 0 : index
    %c0_60 = arith.constant 0 : index
    %267 = vector.load %arg7[%c0_58, %c0_59, %c0_60] : memref<8x8x128xf32, #tpu.memory_space<vmem>>, vector<8x8x128xf32>
    tpu.vector_store %arg7[%c0_58, %c0_59, %c0_60], %266 {strides = array<i32>} : memref<8x8x128xf32, #tpu.memory_space<vmem>>, vector<8x8x128xf32>,
    %c1_i32 = arith.constant 1 : i32
    %268 = arith.cmpi eq, %arg1, %c1_i32 : i32
    %269 = arith.extui %268 : i1 to i32
    %c0_i32_61 = arith.constant 0 : i32
    %270 = arith.cmpi ne, %269, %c0_i32_61 : i32
    scf.if %270 {
      %c0_62 = arith.constant 0 : index
      %c0_63 = arith.constant 0 : index
      %271 = vector.load %arg9[%c0_62, %c0_63] : memref<8x128xf32, #tpu.memory_space<vmem>>, vector<8x128xf32>
      %c0_64 = arith.constant 0 : index
      %c0_65 = arith.constant 0 : index
      %272 = vector.load %arg8[%c0_64, %c0_65] : memref<8x128xf32, #tpu.memory_space<vmem>>, vector<8x128xf32>
      tpu.vector_store %arg8[%c0_64, %c0_65], %271 {strides = array<i32>} : memref<8x128xf32, #tpu.memory_space<vmem>>, vector<8x128xf32>,
    } else {
    }
    return
  }
  func.func @transform_0(%arg0: i32, %arg1: i32) -> (i32, i32, i32) {
    %c0_i32 = arith.constant 0 : i32
    %c0_i32_0 = arith.constant 0 : i32
    return %arg0, %arg1, %c0_i32 : i32, i32, i32
  }
  func.func @transform_1(%arg0: i32, %arg1: i32) -> (i32, i32) {
    %c0_i32 = arith.constant 0 : i32
    %c0_i32_0 = arith.constant 0 : i32
    %c0_i32_1 = arith.constant 0 : i32
    return %c0_i32, %c0_i32_0 : i32, i32
  }
  func.func @transform_2(%arg0: i32, %arg1: i32) -> (i32, i32) {
    %c0_i32 = arith.constant 0 : i32
    %c0_i32_0 = arith.constant 0 : i32
    %c0_i32_1 = arith.constant 0 : i32
    return %c0_i32, %c0_i32_0 : i32, i32
  }
  func.func @transform_3(%arg0: i32, %arg1: i32) -> (i32, i32) {
    %c0_i32 = arith.constant 0 : i32
    %c0_i32_0 = arith.constant 0 : i32
    %c0_i32_1 = arith.constant 0 : i32
    return %c0_i32, %c0_i32_0 : i32, i32
  }
  func.func @transform_4(%arg0: i32, %arg1: i32) -> (i32, i32) {
    %c0_i32 = arith.constant 0 : i32
    %c0_i32_0 = arith.constant 0 : i32
    return %arg0, %c0_i32 : i32, i32
  }
  func.func @transform_5(%arg0: i32, %arg1: i32) -> (i32, i32, i32) {
    %c0_i32 = arith.constant 0 : i32
    %c0_i32_0 = arith.constant 0 : i32
    return %arg0, %arg1, %c0_i32 : i32, i32, i32
  }
  func.func @transform_6(%arg0: i32, %arg1: i32) -> (i32, i32) {
    %c0_i32 = arith.constant 0 : i32
    %c0_i32_0 = arith.constant 0 : i32
    return %arg0, %c0_i32 : i32, i32
  }
}

module attributes {stable_mosaic.version = 11 : i64} {
  func.func @_gru_decoder_kernel(%arg0: i32, %arg1: i32, %arg2: memref<8x8x4xbf16, #tpu.memory_space<vmem>>, %arg3: memref<4x384xbf16, #tpu.memory_space<vmem>>, %arg4: memref<128x384xbf16, #tpu.memory_space<vmem>>, %arg5: memref<128x128xbf16, #tpu.memory_space<vmem>>, %arg6: memref<8x128xf32, #tpu.memory_space<vmem>>, %arg7: memref<8x8x128xf32, #tpu.memory_space<vmem>>, %arg8: memref<8x128xf32, #tpu.memory_space<vmem>>, %arg9: memref<8x128xf32, #tpu.memory_space<vmem>>, %arg10: memref<8x8x128xf32, #tpu.memory_space<vmem>>) attributes {dimension_semantics = [#tpu.dimension_semantics<parallel>, #tpu.dimension_semantics<arbitrary>], iteration_bounds = array<i64: 1, 2>, scalar_prefetch = 0 : i64, scratch_operands = 2 : i64, tpu.core_type = #tpu.core_type<tc>, window_params = [{transform_indices = @transform_0, window_bounds = array<i64: 8, 8, 4>}, {pipeline_mode = #tpu.pipeline_mode<synchronous>, transform_indices = @transform_1, window_bounds = array<i64: 4, 384>}, {pipeline_mode = #tpu.pipeline_mode<synchronous>, transform_indices = @transform_2, window_bounds = array<i64: 128, 384>}, {pipeline_mode = #tpu.pipeline_mode<synchronous>, transform_indices = @transform_3, window_bounds = array<i64: 128, 128>}, {transform_indices = @transform_4, window_bounds = array<i64: 8, 128>}, {transform_indices = @transform_5, window_bounds = array<i64: 8, 8, 128>}, {transform_indices = @transform_6, window_bounds = array<i64: 8, 128>}]} {
    %c0_i32 = arith.constant 0 : i32
    %0 = arith.cmpi eq, %arg1, %c0_i32 : i32
    %1 = arith.extui %0 : i1 to i32
    %c0_i32_0 = arith.constant 0 : i32
    %2 = arith.cmpi ne, %1, %c0_i32_0 : i32
    scf.if %2 {
      %c0_62 = arith.constant 0 : index
      %c0_63 = arith.constant 0 : index
      %271 = vector.load %arg6[%c0_62, %c0_63] : memref<8x128xf32, #tpu.memory_space<vmem>>, vector<8x128xf32>
      %c0_64 = arith.constant 0 : index
      %c0_65 = arith.constant 0 : index
      %272 = vector.load %arg9[%c0_64, %c0_65] : memref<8x128xf32, #tpu.memory_space<vmem>>, vector<8x128xf32>
      tpu.vector_store %arg9[%c0_64, %c0_65], %271 {strides = array<i32>} : memref<8x128xf32, #tpu.memory_space<vmem>>, vector<8x128xf32>,
    } else {
    }
    %c0 = arith.constant 0 : index
    %c0_1 = arith.constant 0 : index
    %c0_2 = arith.constant 0 : index
    %3 = vector.load %arg2[%c0, %c0_1, %c0_2] : memref<8x8x4xbf16, #tpu.memory_space<vmem>>, vector<8x8x4xbf16>
    %4 = tpu.transpose %3, [1, 0, 2] : vector<8x8x4xbf16> -> vector<8x8x4xbf16>
    %5 = vector.shape_cast %4 : vector<8x8x4xbf16> to vector<64x4xbf16>
    %c0_3 = arith.constant 0 : index
    %c0_4 = arith.constant 0 : index
    %6 = vector.load %arg3[%c0_3, %c0_4] : memref<4x384xbf16, #tpu.memory_space<vmem>>, vector<4x384xbf16>
    %cst = arith.constant dense<0.000000e+00> : vector<64x384xf32>
    %7 = tpu.matmul %5, %6, %cst {dimension_numbers = #tpu.dot_dimension_numbers<[1], [0], [0], [1], [0, 0, 1, 1], [], []>} : vector<64x4xbf16>, vector<4x384xbf16>, vector<64x384xf32> -> vector<64x384xf32>
    %8 = vector.shape_cast %7 : vector<64x384xf32> to vector<8x8x384xf32>
    %c0_5 = arith.constant 0 : index
    %c0_6 = arith.constant 0 : index
    %9 = vector.load %arg4[%c0_5, %c0_6] : memref<128x384xbf16, #tpu.memory_space<vmem>>, vector<128x384xbf16>
    %c0_7 = arith.constant 0 : index
    %c0_8 = arith.constant 0 : index
    %10 = vector.load %arg9[%c0_7, %c0_8] : memref<8x128xf32, #tpu.memory_space<vmem>>, vector<8x128xf32>
    %11 = vector.extract_strided_slice %8 {offsets = [0, 0, 0], sizes = [1, 8, 384], strides = [1, 1, 1]} : vector<8x8x384xf32> to vector<1x8x384xf32>
    %12 = vector.shape_cast %11 : vector<1x8x384xf32> to vector<8x384xf32>
    %13 = arith.truncf %10 : vector<8x128xf32> to vector<8x128xbf16>
    %cst_9 = arith.constant dense<0.000000e+00> : vector<8x384xf32>
    %14 = tpu.matmul %13, %9, %cst_9 {dimension_numbers = #tpu.dot_dimension_numbers<[1], [0], [0], [1], [0, 0, 1, 1], [], []>} : vector<8x128xbf16>, vector<128x384xbf16>, vector<8x384xf32> -> vector<8x384xf32>
    %15 = vector.extract_strided_slice %12 {offsets = [0, 0], sizes = [8, 128], strides = [1, 1]} : vector<8x384xf32> to vector<8x128xf32>
    %16 = vector.extract_strided_slice %14 {offsets = [0, 0], sizes = [8, 128], strides = [1, 1]} : vector<8x384xf32> to vector<8x128xf32>
    %17 = arith.addf %15, %16 : vector<8x128xf32>
    %18 = arith.negf %17 : vector<8x128xf32>
    %19 = math.exp %18 : vector<8x128xf32>
    %cst_10 = arith.constant 1.000000e+00 : f32
    %20 = vector.broadcast %cst_10 : f32 to vector<8x128xf32>
    %21 = arith.addf %20, %19 : vector<8x128xf32>
    %22 = arith.divf %20, %21 : vector<8x128xf32>
    %23 = vector.extract_strided_slice %12 {offsets = [0, 128], sizes = [8, 128], strides = [1, 1]} : vector<8x384xf32> to vector<8x128xf32>
    %24 = vector.extract_strided_slice %14 {offsets = [0, 128], sizes = [8, 128], strides = [1, 1]} : vector<8x384xf32> to vector<8x128xf32>
    %25 = arith.addf %23, %24 : vector<8x128xf32>
    %26 = arith.negf %25 : vector<8x128xf32>
    %27 = math.exp %26 : vector<8x128xf32>
    %cst_11 = arith.constant 1.000000e+00 : f32
    %28 = vector.broadcast %cst_11 : f32 to vector<8x128xf32>
    %29 = arith.addf %28, %27 : vector<8x128xf32>
    %30 = arith.divf %28, %29 : vector<8x128xf32>
    %31 = vector.extract_strided_slice %12 {offsets = [0, 256], sizes = [8, 128], strides = [1, 1]} : vector<8x384xf32> to vector<8x128xf32>
    %32 = vector.extract_strided_slice %14 {offsets = [0, 256], sizes = [8, 128], strides = [1, 1]} : vector<8x384xf32> to vector<8x128xf32>
    %33 = arith.mulf %22, %32 : vector<8x128xf32>
    %34 = arith.addf %31, %33 : vector<8x128xf32>
    %35 = math.tanh %34 : vector<8x128xf32>
    %36 = arith.subf %10, %35 : vector<8x128xf32>
    %37 = arith.mulf %30, %36 : vector<8x128xf32>
    %38 = arith.addf %35, %37 : vector<8x128xf32>
    %c0_12 = arith.constant 0 : index
    %c0_13 = arith.constant 0 : index
    %c0_14 = arith.constant 0 : index
    %39 = vector.load %arg10[%c0_12, %c0_13, %c0_14] : memref<8x8x128xf32, #tpu.memory_space<vmem>>, vector<1x8x128xf32>
    %40 = vector.shape_cast %39 : vector<1x8x128xf32> to vector<8x128xf32>
    %41 = vector.shape_cast %38 : vector<8x128xf32> to vector<1x8x128xf32>
    tpu.vector_store %arg10[%c0_12, %c0_13, %c0_14], %41 {strides = array<i32>} : memref<8x8x128xf32, #tpu.memory_space<vmem>>, vector<1x8x128xf32>,
    %42 = vector.extract_strided_slice %8 {offsets = [1, 0, 0], sizes = [1, 8, 384], strides = [1, 1, 1]} : vector<8x8x384xf32> to vector<1x8x384xf32>
    %43 = vector.shape_cast %42 : vector<1x8x384xf32> to vector<8x384xf32>
    %44 = arith.truncf %38 : vector<8x128xf32> to vector<8x128xbf16>
    %cst_15 = arith.constant dense<0.000000e+00> : vector<8x384xf32>
    %45 = tpu.matmul %44, %9, %cst_15 {dimension_numbers = #tpu.dot_dimension_numbers<[1], [0], [0], [1], [0, 0, 1, 1], [], []>} : vector<8x128xbf16>, vector<128x384xbf16>, vector<8x384xf32> -> vector<8x384xf32>
    %46 = vector.extract_strided_slice %43 {offsets = [0, 0], sizes = [8, 128], strides = [1, 1]} : vector<8x384xf32> to vector<8x128xf32>
    %47 = vector.extract_strided_slice %45 {offsets = [0, 0], sizes = [8, 128], strides = [1, 1]} : vector<8x384xf32> to vector<8x128xf32>
    %48 = arith.addf %46, %47 : vector<8x128xf32>
    %49 = arith.negf %48 : vector<8x128xf32>
    %50 = math.exp %49 : vector<8x128xf32>
    %cst_16 = arith.constant 1.000000e+00 : f32
    %51 = vector.broadcast %cst_16 : f32 to vector<8x128xf32>
    %52 = arith.addf %51, %50 : vector<8x128xf32>
    %53 = arith.divf %51, %52 : vector<8x128xf32>
    %54 = vector.extract_strided_slice %43 {offsets = [0, 128], sizes = [8, 128], strides = [1, 1]} : vector<8x384xf32> to vector<8x128xf32>
    %55 = vector.extract_strided_slice %45 {offsets = [0, 128], sizes = [8, 128], strides = [1, 1]} : vector<8x384xf32> to vector<8x128xf32>
    %56 = arith.addf %54, %55 : vector<8x128xf32>
    %57 = arith.negf %56 : vector<8x128xf32>
    %58 = math.exp %57 : vector<8x128xf32>
    %cst_17 = arith.constant 1.000000e+00 : f32
    %59 = vector.broadcast %cst_17 : f32 to vector<8x128xf32>
    %60 = arith.addf %59, %58 : vector<8x128xf32>
    %61 = arith.divf %59, %60 : vector<8x128xf32>
    %62 = vector.extract_strided_slice %43 {offsets = [0, 256], sizes = [8, 128], strides = [1, 1]} : vector<8x384xf32> to vector<8x128xf32>
    %63 = vector.extract_strided_slice %45 {offsets = [0, 256], sizes = [8, 128], strides = [1, 1]} : vector<8x384xf32> to vector<8x128xf32>
    %64 = arith.mulf %53, %63 : vector<8x128xf32>
    %65 = arith.addf %62, %64 : vector<8x128xf32>
    %66 = math.tanh %65 : vector<8x128xf32>
    %67 = arith.subf %38, %66 : vector<8x128xf32>
    %68 = arith.mulf %61, %67 : vector<8x128xf32>
    %69 = arith.addf %66, %68 : vector<8x128xf32>
    %c1 = arith.constant 1 : index
    %c0_18 = arith.constant 0 : index
    %c0_19 = arith.constant 0 : index
    %70 = vector.load %arg10[%c1, %c0_18, %c0_19] : memref<8x8x128xf32, #tpu.memory_space<vmem>>, vector<1x8x128xf32>
    %71 = vector.shape_cast %70 : vector<1x8x128xf32> to vector<8x128xf32>
    %72 = vector.shape_cast %69 : vector<8x128xf32> to vector<1x8x128xf32>
    tpu.vector_store %arg10[%c1, %c0_18, %c0_19], %72 {strides = array<i32>} : memref<8x8x128xf32, #tpu.memory_space<vmem>>, vector<1x8x128xf32>,
    %73 = vector.extract_strided_slice %8 {offsets = [2, 0, 0], sizes = [1, 8, 384], strides = [1, 1, 1]} : vector<8x8x384xf32> to vector<1x8x384xf32>
    %74 = vector.shape_cast %73 : vector<1x8x384xf32> to vector<8x384xf32>
    %75 = arith.truncf %69 : vector<8x128xf32> to vector<8x128xbf16>
    %cst_20 = arith.constant dense<0.000000e+00> : vector<8x384xf32>
    %76 = tpu.matmul %75, %9, %cst_20 {dimension_numbers = #tpu.dot_dimension_numbers<[1], [0], [0], [1], [0, 0, 1, 1], [], []>} : vector<8x128xbf16>, vector<128x384xbf16>, vector<8x384xf32> -> vector<8x384xf32>
    %77 = vector.extract_strided_slice %74 {offsets = [0, 0], sizes = [8, 128], strides = [1, 1]} : vector<8x384xf32> to vector<8x128xf32>
    %78 = vector.extract_strided_slice %76 {offsets = [0, 0], sizes = [8, 128], strides = [1, 1]} : vector<8x384xf32> to vector<8x128xf32>
    %79 = arith.addf %77, %78 : vector<8x128xf32>
    %80 = arith.negf %79 : vector<8x128xf32>
    %81 = math.exp %80 : vector<8x128xf32>
    %cst_21 = arith.constant 1.000000e+00 : f32
    %82 = vector.broadcast %cst_21 : f32 to vector<8x128xf32>
    %83 = arith.addf %82, %81 : vector<8x128xf32>
    %84 = arith.divf %82, %83 : vector<8x128xf32>
    %85 = vector.extract_strided_slice %74 {offsets = [0, 128], sizes = [8, 128], strides = [1, 1]} : vector<8x384xf32> to vector<8x128xf32>
    %86 = vector.extract_strided_slice %76 {offsets = [0, 128], sizes = [8, 128], strides = [1, 1]} : vector<8x384xf32> to vector<8x128xf32>
    %87 = arith.addf %85, %86 : vector<8x128xf32>
    %88 = arith.negf %87 : vector<8x128xf32>
    %89 = math.exp %88 : vector<8x128xf32>
    %cst_22 = arith.constant 1.000000e+00 : f32
    %90 = vector.broadcast %cst_22 : f32 to vector<8x128xf32>
    %91 = arith.addf %90, %89 : vector<8x128xf32>
    %92 = arith.divf %90, %91 : vector<8x128xf32>
    %93 = vector.extract_strided_slice %74 {offsets = [0, 256], sizes = [8, 128], strides = [1, 1]} : vector<8x384xf32> to vector<8x128xf32>
    %94 = vector.extract_strided_slice %76 {offsets = [0, 256], sizes = [8, 128], strides = [1, 1]} : vector<8x384xf32> to vector<8x128xf32>
    %95 = arith.mulf %84, %94 : vector<8x128xf32>
    %96 = arith.addf %93, %95 : vector<8x128xf32>
    %97 = math.tanh %96 : vector<8x128xf32>
    %98 = arith.subf %69, %97 : vector<8x128xf32>
    %99 = arith.mulf %92, %98 : vector<8x128xf32>
    %100 = arith.addf %97, %99 : vector<8x128xf32>
    %c2 = arith.constant 2 : index
    %c0_23 = arith.constant 0 : index
    %c0_24 = arith.constant 0 : index
    %101 = vector.load %arg10[%c2, %c0_23, %c0_24] : memref<8x8x128xf32, #tpu.memory_space<vmem>>, vector<1x8x128xf32>
    %102 = vector.shape_cast %101 : vector<1x8x128xf32> to vector<8x128xf32>
    %103 = vector.shape_cast %100 : vector<8x128xf32> to vector<1x8x128xf32>
    tpu.vector_store %arg10[%c2, %c0_23, %c0_24], %103 {strides = array<i32>} : memref<8x8x128xf32, #tpu.memory_space<vmem>>, vector<1x8x128xf32>,
    %104 = vector.extract_strided_slice %8 {offsets = [3, 0, 0], sizes = [1, 8, 384], strides = [1, 1, 1]} : vector<8x8x384xf32> to vector<1x8x384xf32>
    %105 = vector.shape_cast %104 : vector<1x8x384xf32> to vector<8x384xf32>
    %106 = arith.truncf %100 : vector<8x128xf32> to vector<8x128xbf16>
    %cst_25 = arith.constant dense<0.000000e+00> : vector<8x384xf32>
    %107 = tpu.matmul %106, %9, %cst_25 {dimension_numbers = #tpu.dot_dimension_numbers<[1], [0], [0], [1], [0, 0, 1, 1], [], []>} : vector<8x128xbf16>, vector<128x384xbf16>, vector<8x384xf32> -> vector<8x384xf32>
    %108 = vector.extract_strided_slice %105 {offsets = [0, 0], sizes = [8, 128], strides = [1, 1]} : vector<8x384xf32> to vector<8x128xf32>
    %109 = vector.extract_strided_slice %107 {offsets = [0, 0], sizes = [8, 128], strides = [1, 1]} : vector<8x384xf32> to vector<8x128xf32>
    %110 = arith.addf %108, %109 : vector<8x128xf32>
    %111 = arith.negf %110 : vector<8x128xf32>
    %112 = math.exp %111 : vector<8x128xf32>
    %cst_26 = arith.constant 1.000000e+00 : f32
    %113 = vector.broadcast %cst_26 : f32 to vector<8x128xf32>
    %114 = arith.addf %113, %112 : vector<8x128xf32>
    %115 = arith.divf %113, %114 : vector<8x128xf32>
    %116 = vector.extract_strided_slice %105 {offsets = [0, 128], sizes = [8, 128], strides = [1, 1]} : vector<8x384xf32> to vector<8x128xf32>
    %117 = vector.extract_strided_slice %107 {offsets = [0, 128], sizes = [8, 128], strides = [1, 1]} : vector<8x384xf32> to vector<8x128xf32>
    %118 = arith.addf %116, %117 : vector<8x128xf32>
    %119 = arith.negf %118 : vector<8x128xf32>
    %120 = math.exp %119 : vector<8x128xf32>
    %cst_27 = arith.constant 1.000000e+00 : f32
    %121 = vector.broadcast %cst_27 : f32 to vector<8x128xf32>
    %122 = arith.addf %121, %120 : vector<8x128xf32>
    %123 = arith.divf %121, %122 : vector<8x128xf32>
    %124 = vector.extract_strided_slice %105 {offsets = [0, 256], sizes = [8, 128], strides = [1, 1]} : vector<8x384xf32> to vector<8x128xf32>
    %125 = vector.extract_strided_slice %107 {offsets = [0, 256], sizes = [8, 128], strides = [1, 1]} : vector<8x384xf32> to vector<8x128xf32>
    %126 = arith.mulf %115, %125 : vector<8x128xf32>
    %127 = arith.addf %124, %126 : vector<8x128xf32>
    %128 = math.tanh %127 : vector<8x128xf32>
    %129 = arith.subf %100, %128 : vector<8x128xf32>
    %130 = arith.mulf %123, %129 : vector<8x128xf32>
    %131 = arith.addf %128, %130 : vector<8x128xf32>
    %c3 = arith.constant 3 : index
    %c0_28 = arith.constant 0 : index
    %c0_29 = arith.constant 0 : index
    %132 = vector.load %arg10[%c3, %c0_28, %c0_29] : memref<8x8x128xf32, #tpu.memory_space<vmem>>, vector<1x8x128xf32>
    %133 = vector.shape_cast %132 : vector<1x8x128xf32> to vector<8x128xf32>
    %134 = vector.shape_cast %131 : vector<8x128xf32> to vector<1x8x128xf32>
    tpu.vector_store %arg10[%c3, %c0_28, %c0_29], %134 {strides = array<i32>} : memref<8x8x128xf32, #tpu.memory_space<vmem>>, vector<1x8x128xf32>,
    %135 = vector.extract_strided_slice %8 {offsets = [4, 0, 0], sizes = [1, 8, 384], strides = [1, 1, 1]} : vector<8x8x384xf32> to vector<1x8x384xf32>
    %136 = vector.shape_cast %135 : vector<1x8x384xf32> to vector<8x384xf32>
    %137 = arith.truncf %131 : vector<8x128xf32> to vector<8x128xbf16>
    %cst_30 = arith.constant dense<0.000000e+00> : vector<8x384xf32>
    %138 = tpu.matmul %137, %9, %cst_30 {dimension_numbers = #tpu.dot_dimension_numbers<[1], [0], [0], [1], [0, 0, 1, 1], [], []>} : vector<8x128xbf16>, vector<128x384xbf16>, vector<8x384xf32> -> vector<8x384xf32>
    %139 = vector.extract_strided_slice %136 {offsets = [0, 0], sizes = [8, 128], strides = [1, 1]} : vector<8x384xf32> to vector<8x128xf32>
    %140 = vector.extract_strided_slice %138 {offsets = [0, 0], sizes = [8, 128], strides = [1, 1]} : vector<8x384xf32> to vector<8x128xf32>
    %141 = arith.addf %139, %140 : vector<8x128xf32>
    %142 = arith.negf %141 : vector<8x128xf32>
    %143 = math.exp %142 : vector<8x128xf32>
    %cst_31 = arith.constant 1.000000e+00 : f32
    %144 = vector.broadcast %cst_31 : f32 to vector<8x128xf32>
    %145 = arith.addf %144, %143 : vector<8x128xf32>
    %146 = arith.divf %144, %145 : vector<8x128xf32>
    %147 = vector.extract_strided_slice %136 {offsets = [0, 128], sizes = [8, 128], strides = [1, 1]} : vector<8x384xf32> to vector<8x128xf32>
    %148 = vector.extract_strided_slice %138 {offsets = [0, 128], sizes = [8, 128], strides = [1, 1]} : vector<8x384xf32> to vector<8x128xf32>
    %149 = arith.addf %147, %148 : vector<8x128xf32>
    %150 = arith.negf %149 : vector<8x128xf32>
    %151 = math.exp %150 : vector<8x128xf32>
    %cst_32 = arith.constant 1.000000e+00 : f32
    %152 = vector.broadcast %cst_32 : f32 to vector<8x128xf32>
    %153 = arith.addf %152, %151 : vector<8x128xf32>
    %154 = arith.divf %152, %153 : vector<8x128xf32>
    %155 = vector.extract_strided_slice %136 {offsets = [0, 256], sizes = [8, 128], strides = [1, 1]} : vector<8x384xf32> to vector<8x128xf32>
    %156 = vector.extract_strided_slice %138 {offsets = [0, 256], sizes = [8, 128], strides = [1, 1]} : vector<8x384xf32> to vector<8x128xf32>
    %157 = arith.mulf %146, %156 : vector<8x128xf32>
    %158 = arith.addf %155, %157 : vector<8x128xf32>
    %159 = math.tanh %158 : vector<8x128xf32>
    %160 = arith.subf %131, %159 : vector<8x128xf32>
    %161 = arith.mulf %154, %160 : vector<8x128xf32>
    %162 = arith.addf %159, %161 : vector<8x128xf32>
    %c4 = arith.constant 4 : index
    %c0_33 = arith.constant 0 : index
    %c0_34 = arith.constant 0 : index
    %163 = vector.load %arg10[%c4, %c0_33, %c0_34] : memref<8x8x128xf32, #tpu.memory_space<vmem>>, vector<1x8x128xf32>
    %164 = vector.shape_cast %163 : vector<1x8x128xf32> to vector<8x128xf32>
    %165 = vector.shape_cast %162 : vector<8x128xf32> to vector<1x8x128xf32>
    tpu.vector_store %arg10[%c4, %c0_33, %c0_34], %165 {strides = array<i32>} : memref<8x8x128xf32, #tpu.memory_space<vmem>>, vector<1x8x128xf32>,
    %166 = vector.extract_strided_slice %8 {offsets = [5, 0, 0], sizes = [1, 8, 384], strides = [1, 1, 1]} : vector<8x8x384xf32> to vector<1x8x384xf32>
    %167 = vector.shape_cast %166 : vector<1x8x384xf32> to vector<8x384xf32>
    %168 = arith.truncf %162 : vector<8x128xf32> to vector<8x128xbf16>
    %cst_35 = arith.constant dense<0.000000e+00> : vector<8x384xf32>
    %169 = tpu.matmul %168, %9, %cst_35 {dimension_numbers = #tpu.dot_dimension_numbers<[1], [0], [0], [1], [0, 0, 1, 1], [], []>} : vector<8x128xbf16>, vector<128x384xbf16>, vector<8x384xf32> -> vector<8x384xf32>
    %170 = vector.extract_strided_slice %167 {offsets = [0, 0], sizes = [8, 128], strides = [1, 1]} : vector<8x384xf32> to vector<8x128xf32>
    %171 = vector.extract_strided_slice %169 {offsets = [0, 0], sizes = [8, 128], strides = [1, 1]} : vector<8x384xf32> to vector<8x128xf32>
    %172 = arith.addf %170, %171 : vector<8x128xf32>
    %173 = arith.negf %172 : vector<8x128xf32>
    %174 = math.exp %173 : vector<8x128xf32>
    %cst_36 = arith.constant 1.000000e+00 : f32
    %175 = vector.broadcast %cst_36 : f32 to vector<8x128xf32>
    %176 = arith.addf %175, %174 : vector<8x128xf32>
    %177 = arith.divf %175, %176 : vector<8x128xf32>
    %178 = vector.extract_strided_slice %167 {offsets = [0, 128], sizes = [8, 128], strides = [1, 1]} : vector<8x384xf32> to vector<8x128xf32>
    %179 = vector.extract_strided_slice %169 {offsets = [0, 128], sizes = [8, 128], strides = [1, 1]} : vector<8x384xf32> to vector<8x128xf32>
    %180 = arith.addf %178, %179 : vector<8x128xf32>
    %181 = arith.negf %180 : vector<8x128xf32>
    %182 = math.exp %181 : vector<8x128xf32>
    %cst_37 = arith.constant 1.000000e+00 : f32
    %183 = vector.broadcast %cst_37 : f32 to vector<8x128xf32>
    %184 = arith.addf %183, %182 : vector<8x128xf32>
    %185 = arith.divf %183, %184 : vector<8x128xf32>
    %186 = vector.extract_strided_slice %167 {offsets = [0, 256], sizes = [8, 128], strides = [1, 1]} : vector<8x384xf32> to vector<8x128xf32>
    %187 = vector.extract_strided_slice %169 {offsets = [0, 256], sizes = [8, 128], strides = [1, 1]} : vector<8x384xf32> to vector<8x128xf32>
    %188 = arith.mulf %177, %187 : vector<8x128xf32>
    %189 = arith.addf %186, %188 : vector<8x128xf32>
    %190 = math.tanh %189 : vector<8x128xf32>
    %191 = arith.subf %162, %190 : vector<8x128xf32>
    %192 = arith.mulf %185, %191 : vector<8x128xf32>
    %193 = arith.addf %190, %192 : vector<8x128xf32>
    %c5 = arith.constant 5 : index
    %c0_38 = arith.constant 0 : index
    %c0_39 = arith.constant 0 : index
    %194 = vector.load %arg10[%c5, %c0_38, %c0_39] : memref<8x8x128xf32, #tpu.memory_space<vmem>>, vector<1x8x128xf32>
    %195 = vector.shape_cast %194 : vector<1x8x128xf32> to vector<8x128xf32>
    %196 = vector.shape_cast %193 : vector<8x128xf32> to vector<1x8x128xf32>
    tpu.vector_store %arg10[%c5, %c0_38, %c0_39], %196 {strides = array<i32>} : memref<8x8x128xf32, #tpu.memory_space<vmem>>, vector<1x8x128xf32>,
    %197 = vector.extract_strided_slice %8 {offsets = [6, 0, 0], sizes = [1, 8, 384], strides = [1, 1, 1]} : vector<8x8x384xf32> to vector<1x8x384xf32>
    %198 = vector.shape_cast %197 : vector<1x8x384xf32> to vector<8x384xf32>
    %199 = arith.truncf %193 : vector<8x128xf32> to vector<8x128xbf16>
    %cst_40 = arith.constant dense<0.000000e+00> : vector<8x384xf32>
    %200 = tpu.matmul %199, %9, %cst_40 {dimension_numbers = #tpu.dot_dimension_numbers<[1], [0], [0], [1], [0, 0, 1, 1], [], []>} : vector<8x128xbf16>, vector<128x384xbf16>, vector<8x384xf32> -> vector<8x384xf32>
    %201 = vector.extract_strided_slice %198 {offsets = [0, 0], sizes = [8, 128], strides = [1, 1]} : vector<8x384xf32> to vector<8x128xf32>
    %202 = vector.extract_strided_slice %200 {offsets = [0, 0], sizes = [8, 128], strides = [1, 1]} : vector<8x384xf32> to vector<8x128xf32>
    %203 = arith.addf %201, %202 : vector<8x128xf32>
    %204 = arith.negf %203 : vector<8x128xf32>
    %205 = math.exp %204 : vector<8x128xf32>
    %cst_41 = arith.constant 1.000000e+00 : f32
    %206 = vector.broadcast %cst_41 : f32 to vector<8x128xf32>
    %207 = arith.addf %206, %205 : vector<8x128xf32>
    %208 = arith.divf %206, %207 : vector<8x128xf32>
    %209 = vector.extract_strided_slice %198 {offsets = [0, 128], sizes = [8, 128], strides = [1, 1]} : vector<8x384xf32> to vector<8x128xf32>
    %210 = vector.extract_strided_slice %200 {offsets = [0, 128], sizes = [8, 128], strides = [1, 1]} : vector<8x384xf32> to vector<8x128xf32>
    %211 = arith.addf %209, %210 : vector<8x128xf32>
    %212 = arith.negf %211 : vector<8x128xf32>
    %213 = math.exp %212 : vector<8x128xf32>
    %cst_42 = arith.constant 1.000000e+00 : f32
    %214 = vector.broadcast %cst_42 : f32 to vector<8x128xf32>
    %215 = arith.addf %214, %213 : vector<8x128xf32>
    %216 = arith.divf %214, %215 : vector<8x128xf32>
    %217 = vector.extract_strided_slice %198 {offsets = [0, 256], sizes = [8, 128], strides = [1, 1]} : vector<8x384xf32> to vector<8x128xf32>
    %218 = vector.extract_strided_slice %200 {offsets = [0, 256], sizes = [8, 128], strides = [1, 1]} : vector<8x384xf32> to vector<8x128xf32>
    %219 = arith.mulf %208, %218 : vector<8x128xf32>
    %220 = arith.addf %217, %219 : vector<8x128xf32>
    %221 = math.tanh %220 : vector<8x128xf32>
    %222 = arith.subf %193, %221 : vector<8x128xf32>
    %223 = arith.mulf %216, %222 : vector<8x128xf32>
    %224 = arith.addf %221, %223 : vector<8x128xf32>
    %c6 = arith.constant 6 : index
    %c0_43 = arith.constant 0 : index
    %c0_44 = arith.constant 0 : index
    %225 = vector.load %arg10[%c6, %c0_43, %c0_44] : memref<8x8x128xf32, #tpu.memory_space<vmem>>, vector<1x8x128xf32>
    %226 = vector.shape_cast %225 : vector<1x8x128xf32> to vector<8x128xf32>
    %227 = vector.shape_cast %224 : vector<8x128xf32> to vector<1x8x128xf32>
    tpu.vector_store %arg10[%c6, %c0_43, %c0_44], %227 {strides = array<i32>} : memref<8x8x128xf32, #tpu.memory_space<vmem>>, vector<1x8x128xf32>,
    %228 = vector.extract_strided_slice %8 {offsets = [7, 0, 0], sizes = [1, 8, 384], strides = [1, 1, 1]} : vector<8x8x384xf32> to vector<1x8x384xf32>
    %229 = vector.shape_cast %228 : vector<1x8x384xf32> to vector<8x384xf32>
    %230 = arith.truncf %224 : vector<8x128xf32> to vector<8x128xbf16>
    %cst_45 = arith.constant dense<0.000000e+00> : vector<8x384xf32>
    %231 = tpu.matmul %230, %9, %cst_45 {dimension_numbers = #tpu.dot_dimension_numbers<[1], [0], [0], [1], [0, 0, 1, 1], [], []>} : vector<8x128xbf16>, vector<128x384xbf16>, vector<8x384xf32> -> vector<8x384xf32>
    %232 = vector.extract_strided_slice %229 {offsets = [0, 0], sizes = [8, 128], strides = [1, 1]} : vector<8x384xf32> to vector<8x128xf32>
    %233 = vector.extract_strided_slice %231 {offsets = [0, 0], sizes = [8, 128], strides = [1, 1]} : vector<8x384xf32> to vector<8x128xf32>
    %234 = arith.addf %232, %233 : vector<8x128xf32>
    %235 = arith.negf %234 : vector<8x128xf32>
    %236 = math.exp %235 : vector<8x128xf32>
    %cst_46 = arith.constant 1.000000e+00 : f32
    %237 = vector.broadcast %cst_46 : f32 to vector<8x128xf32>
    %238 = arith.addf %237, %236 : vector<8x128xf32>
    %239 = arith.divf %237, %238 : vector<8x128xf32>
    %240 = vector.extract_strided_slice %229 {offsets = [0, 128], sizes = [8, 128], strides = [1, 1]} : vector<8x384xf32> to vector<8x128xf32>
    %241 = vector.extract_strided_slice %231 {offsets = [0, 128], sizes = [8, 128], strides = [1, 1]} : vector<8x384xf32> to vector<8x128xf32>
    %242 = arith.addf %240, %241 : vector<8x128xf32>
    %243 = arith.negf %242 : vector<8x128xf32>
    %244 = math.exp %243 : vector<8x128xf32>
    %cst_47 = arith.constant 1.000000e+00 : f32
    %245 = vector.broadcast %cst_47 : f32 to vector<8x128xf32>
    %246 = arith.addf %245, %244 : vector<8x128xf32>
    %247 = arith.divf %245, %246 : vector<8x128xf32>
    %248 = vector.extract_strided_slice %229 {offsets = [0, 256], sizes = [8, 128], strides = [1, 1]} : vector<8x384xf32> to vector<8x128xf32>
    %249 = vector.extract_strided_slice %231 {offsets = [0, 256], sizes = [8, 128], strides = [1, 1]} : vector<8x384xf32> to vector<8x128xf32>
    %250 = arith.mulf %239, %249 : vector<8x128xf32>
    %251 = arith.addf %248, %250 : vector<8x128xf32>
    %252 = math.tanh %251 : vector<8x128xf32>
    %253 = arith.subf %224, %252 : vector<8x128xf32>
    %254 = arith.mulf %247, %253 : vector<8x128xf32>
    %255 = arith.addf %252, %254 : vector<8x128xf32>
    %c7 = arith.constant 7 : index
    %c0_48 = arith.constant 0 : index
    %c0_49 = arith.constant 0 : index
    %256 = vector.load %arg10[%c7, %c0_48, %c0_49] : memref<8x8x128xf32, #tpu.memory_space<vmem>>, vector<1x8x128xf32>
    %257 = vector.shape_cast %256 : vector<1x8x128xf32> to vector<8x128xf32>
    %258 = vector.shape_cast %255 : vector<8x128xf32> to vector<1x8x128xf32>
    tpu.vector_store %arg10[%c7, %c0_48, %c0_49], %258 {strides = array<i32>} : memref<8x8x128xf32, #tpu.memory_space<vmem>>, vector<1x8x128xf32>,
    %c0_50 = arith.constant 0 : index
    %c0_51 = arith.constant 0 : index
    %259 = vector.load %arg9[%c0_50, %c0_51] : memref<8x128xf32, #tpu.memory_space<vmem>>, vector<8x128xf32>
    tpu.vector_store %arg9[%c0_50, %c0_51], %255 {strides = array<i32>} : memref<8x128xf32, #tpu.memory_space<vmem>>, vector<8x128xf32>,
    %c0_52 = arith.constant 0 : index
    %c0_53 = arith.constant 0 : index
    %c0_54 = arith.constant 0 : index
    %260 = vector.load %arg10[%c0_52, %c0_53, %c0_54] : memref<8x8x128xf32, #tpu.memory_space<vmem>>, vector<8x8x128xf32>
    %261 = vector.shape_cast %260 : vector<8x8x128xf32> to vector<64x128xf32>
    %262 = arith.truncf %261 : vector<64x128xf32> to vector<64x128xbf16>
    %c0_55 = arith.constant 0 : index
    %c0_56 = arith.constant 0 : index
    %263 = vector.load %arg5[%c0_55, %c0_56] : memref<128x128xbf16, #tpu.memory_space<vmem>>, vector<128x128xbf16>
    %cst_57 = arith.constant dense<0.000000e+00> : vector<64x128xf32>
    %264 = tpu.matmul %262, %263, %cst_57 {dimension_numbers = #tpu.dot_dimension_numbers<[1], [0], [0], [1], [0, 0, 1, 1], [], []>} : vector<64x128xbf16>, vector<128x128xbf16>, vector<64x128xf32> -> vector<64x128xf32>
    %265 = vector.shape_cast %264 : vector<64x128xf32> to vector<8x8x128xf32>
    %266 = tpu.transpose %265, [1, 0, 2] : vector<8x8x128xf32> -> vector<8x8x128xf32>
    %c0_58 = arith.constant 0 : index
    %c0_59 = arith.constant 0 : index
    %c0_60 = arith.constant 0 : index
    %267 = vector.load %arg7[%c0_58, %c0_59, %c0_60] : memref<8x8x128xf32, #tpu.memory_space<vmem>>, vector<8x8x128xf32>
    tpu.vector_store %arg7[%c0_58, %c0_59, %c0_60], %266 {strides = array<i32>} : memref<8x8x128xf32, #tpu.memory_space<vmem>>, vector<8x8x128xf32>,
    %c1_i32 = arith.constant 1 : i32
    %268 = arith.cmpi eq, %arg1, %c1_i32 : i32
    %269 = arith.extui %268 : i1 to i32
    %c0_i32_61 = arith.constant 0 : i32
    %270 = arith.cmpi ne, %269, %c0_i32_61 : i32
    scf.if %270 {
      %c0_62 = arith.constant 0 : index
      %c0_63 = arith.constant 0 : index
      %271 = vector.load %arg9[%c0_62, %c0_63] : memref<8x128xf32, #tpu.memory_space<vmem>>, vector<8x128xf32>
      %c0_64 = arith.constant 0 : index
      %c0_65 = arith.constant 0 : index
      %272 = vector.load %arg8[%c0_64, %c0_65] : memref<8x128xf32, #tpu.memory_space<vmem>>, vector<8x128xf32>
      tpu.vector_store %arg8[%c0_64, %c0_65], %271 {strides = array<i32>} : memref<8x128xf32, #tpu.memory_space<vmem>>, vector<8x128xf32>,
    } else {
    }
    return
  }
  func.func @transform_0(%arg0: i32, %arg1: i32) -> (i32, i32, i32) {
    %c0_i32 = arith.constant 0 : i32
    %c0_i32_0 = arith.constant 0 : i32
    return %arg0, %arg1, %c0_i32 : i32, i32, i32
  }
  func.func @transform_1(%arg0: i32, %arg1: i32) -> (i32, i32) {
    %c0_i32 = arith.constant 0 : i32
    %c0_i32_0 = arith.constant 0 : i32
    %c0_i32_1 = arith.constant 0 : i32
    return %c0_i32, %c0_i32_0 : i32, i32
  }
  func.func @transform_2(%arg0: i32, %arg1: i32) -> (i32, i32) {
    %c0_i32 = arith.constant 0 : i32
    %c0_i32_0 = arith.constant 0 : i32
    %c0_i32_1 = arith.constant 0 : i32
    return %c0_i32, %c0_i32_0 : i32, i32
  }
  func.func @transform_3(%arg0: i32, %arg1: i32) -> (i32, i32) {
    %c0_i32 = arith.constant 0 : i32
    %c0_i32_0 = arith.constant 0 : i32
    %c0_i32_1 = arith.constant 0 : i32
    return %c0_i32, %c0_i32_0 : i32, i32
  }
  func.func @transform_4(%arg0: i32, %arg1: i32) -> (i32, i32) {
    %c0_i32 = arith.constant 0 : i32
    %c0_i32_0 = arith.constant 0 : i32
    return %arg0, %c0_i32 : i32, i32
  }
  func.func @transform_5(%arg0: i32, %arg1: i32) -> (i32, i32, i32) {
    %c0_i32 = arith.constant 0 : i32
    %c0_i32_0 = arith.constant 0 : i32
    return %arg0, %arg1, %c0_i32 : i32, i32, i32
  }
  func.func @transform_6(%arg0: i32, %arg1: i32) -> (i32, i32) {
    %c0_i32 = arith.constant 0 : i32
    %c0_i32_0 = arith.constant 0 : i32
    return %arg0, %c0_i32 : i32, i32
  }
}

</mosaic_0001>

<llo_original>
// kernel: tpu_custom_call.1
$region0: #{tpu_custom_call.1}
  #allocation0 [shape = 'u32[]', space=smem, size = 0x4, offset = 0x4, fixed_abs, tag = 'smem constant byte address 0x4 - core index']
  #allocation1 [shape = 'u32[72,128]{1,0:T(1,128)}', space=vmem, size = 0x9000, scoped, tag = 'internal scratch']
  #allocation2 [shape = 'f32[8,128]{1,0:T(8,128)}', space=vmem, size = 0x1000, scoped, tag = 'scratch operand']
  #allocation3 [shape = 'f32[8,8,128]{2,1,0:T(8,128)}', space=vmem, size = 0x8000, scoped, tag = 'scratch operand']
  %s0 = inlined_call_operand.vmem [shape: bf16[8,16,4], index: 0, kind: input, shape index: {}]
  %s1 = inlined_call_operand.vmem [shape: bf16[4,384], index: 1, kind: input, shape index: {}]
  %s2 = inlined_call_operand.hbm [shape: bf16[128,384], index: 2, kind: input, shape index: {}]
  %s3 = inlined_call_operand.vmem [shape: bf16[128,128], index: 3, kind: input, shape index: {}]
  %s4 = inlined_call_operand.vmem [shape: f32[8,128], index: 4, kind: input, shape index: {}]
  %s5 = inlined_call_operand.hbm [shape: f32[8,16,128], index: 5, kind: output, shape index: {0}]
  %s6 = inlined_call_operand.hbm [shape: f32[8,128], index: 6, kind: output, shape index: {1}]
  %7 = xla_tuple %s5, %s6
  %s8 = sld [smem:[#allocation0]]
  $region114: #{tpu_custom_call.1} parent=0
    _
  %s10 = ssub.s32 1, %s8
  %s11 = scalar_select 0, %s10, %s8
  $region1: #{tpu_custom_call.1} parent=0
    #allocation4 [shape = 'u8[32768]{0}', space=vmem, size = 0x8000, scoped, tag = 'input window, operand 0']
    #allocation5 [shape = 'u8[98304]{0}', space=vmem, size = 0x18000, scoped, tag = 'input window, operand 2, single buffered']
    #allocation6 [shape = 's32[2]{0}', space=sflag, size = 0x8, scoped, tag = 'scoped memory for tpu_custom_call.1']
    #allocation7 [shape = 's32[2]{0}', space=sflag, size = 0x8, scoped, tag = 'scoped memory for tpu_custom_call.1']
    #allocation8 [shape = 'u8[65536]{0}', space=vmem, size = 0x10000, scoped, tag = 'output window, operand 0']
    #allocation9 [shape = 'u8[4096]{0}', space=vmem, size = 0x1000, scoped, tag = 'output window, operand 1, single buffered']
    #allocation10 [shape = 's32[1]{0}', space=sflag, size = 0x4, scoped, tag = 'scoped memory for tpu_custom_call.1']
    %12 = vsyncpa [#allocation6], 0
    %13 = vsyncpa [#allocation7], 0
    %s14 = scalar_lea.sflag [#allocation7], 1
    %15 = vsyncpa %s14, 0
    %16 = vsyncpa [#allocation10], 0
    loop: start=0, step=1, limit=4
    $region2: #{tpu_custom_call.1} parent=1 // loop_pre_header
      _
    $region3: #{tpu_custom_call.1} parent=1 // loop_header
      %s18 = sphi 0, %s22
      %p19 = scmp.ge.s32.totalorder %s18, 4
      %s25 = sphi 0, %s37
      %s26 = sphi 0, %s33
      %s27 = sphi 0, %s25
      %s28 = sphi 0, %s26
      %s29 = sphi 0, %s27
      %s30 = sphi 0, %s28
      %s42 = sphi 0, %s44
      %s45 = sphi 0, %s42
      %s46 = sphi 0, %s45
      %s62 = sphi 0, %s46
      %s66 = sphi 0, %s66
      %s68 = sphi 0, %s66
      %s69 = sphi 0, %s68
      %s83 = sphi 0, %s69
      %s87 = sphi 0, %s87
      %s89 = sphi 0, %s87
      %s90 = sphi 0, %s89
      %s104 = sphi 0, %s90
      %s108 = sphi 0, %s108
      %s110 = sphi 0, %s108
      %s111 = sphi 0, %s110
      %s125 = sphi 0, %s111
      %s131 = sphi 0, %s133
      %s134 = sphi 0, %s131
      %s135 = sphi 0, %s134
      %s151 = sphi 0, %s135
      %s159 = sphi 0, %s161
      %s162 = sphi 0, %s159
      %s163 = sphi 0, %s162
      %s179 = sphi 0, %s163
      %s185 = sphi 0, %s187
      %s188 = sphi 0, %s185
      %s189 = sphi 0, %s188
      %s205 = sphi 0, %s189
    $region4: #{tpu_custom_call.1} parent=1 // loop_header_branch
      %21 = sbr.rel (%p19) target = $region8
    $region5: #{tpu_custom_call.1} parent=1 // loop_body
      %s23 = ssub.s32 %s18, 1
      %s24 = ssub.s32 %s18, 2
      %s31 = sadd.s32 1, %s26
      %p32 = scmp.ge.s32.totalorder %s31, 2
      %s33 = scalar_select %p32, 0, %s31
      %s34 = sadd.s32 1, %s25
      %s35 = scalar_select %p32, %s34, %s25
      %p36 = scmp.ge.s32.totalorder %s35, 1
      %s37 = scalar_select %p36, 0, %s35
      %s38 = ssub.s32 %s25, %s37
      %s39 = ssub.s32 %s26, %s33
      %s40 = sor.u32 %s38, %s39
      %p41 = scmp.eq.s32.totalorder %s40, 0
      %s43 = sadd.s32 %s42, 1
      %s44 = scalar_select %p41, %s42, %s43
      %p47 = pneg %p41
      %p48 = scmp.eq.s32.totalorder %s18, 1
      %p49 = por %p47, %p48
      %p50 = scmp.ne.s32.totalorder %s42, %s45
      %p51 = scmp.eq.s32.totalorder %s18, 0
      %p52 = por %p50, %p51
      %p53 = scmp.ne.s32.totalorder %s42, %s45
      %p54 = scmp.eq.s32.totalorder %s23, 1
      %p55 = por %p53, %p54
      %p56 = scmp.ne.s32.totalorder %s45, %s46
      %p57 = scmp.eq.s32.totalorder %s23, 0
      %p58 = por %p56, %p57
      %p59 = scmp.ne.s32.totalorder %s45, %s46
      %p60 = scmp.eq.s32.totalorder %s24, 1
      %p61 = por %p59, %p60
      %p63 = scmp.ne.s32.totalorder %s46, %s62
      %p64 = scmp.eq.s32.totalorder %s24, 0
      %p65 = por %p63, %p64
      %s67 = sadd.s32 %s66, 1
      %p70 = scmp.eq.s32.totalorder %s18, 1
      %p71 = scmp.ne.s32.totalorder %s66, %s68
      %p72 = scmp.eq.s32.totalorder %s18, 0
      %p73 = por %p71, %p72
      %p74 = scmp.ne.s32.totalorder %s66, %s68
      %p75 = scmp.eq.s32.totalorder %s23, 1
      %p76 = por %p74, %p75
      %p77 = scmp.ne.s32.totalorder %s68, %s69
      %p78 = scmp.eq.s32.totalorder %s23, 0
      %p79 = por %p77, %p78
      %p80 = scmp.ne.s32.totalorder %s68, %s69
      %p81 = scmp.eq.s32.totalorder %s24, 1
      %p82 = por %p80, %p81
      %p84 = scmp.ne.s32.totalorder %s69, %s83
      %p85 = scmp.eq.s32.totalorder %s24, 0
      %p86 = por %p84, %p85
      %s88 = sadd.s32 %s87, 1
      %p91 = scmp.eq.s32.totalorder %s18, 1
      %p92 = scmp.ne.s32.totalorder %s87, %s89
      %p93 = scmp.eq.s32.totalorder %s18, 0
      %p94 = por %p92, %p93
      %p95 = scmp.ne.s32.totalorder %s87, %s89
      %p96 = scmp.eq.s32.totalorder %s23, 1
      %p97 = por %p95, %p96
      %p98 = scmp.ne.s32.totalorder %s89, %s90
      %p99 = scmp.eq.s32.totalorder %s23, 0
      %p100 = por %p98, %p99
      %p101 = scmp.ne.s32.totalorder %s89, %s90
      %p102 = scmp.eq.s32.totalorder %s24, 1
      %p103 = por %p101, %p102
      %p105 = scmp.ne.s32.totalorder %s90, %s104
      %p106 = scmp.eq.s32.totalorder %s24, 0
      %p107 = por %p105, %p106
      %s109 = sadd.s32 %s108, 1
      %p112 = scmp.eq.s32.totalorder %s18, 1
      %p113 = scmp.ne.s32.totalorder %s108, %s110
      %p114 = scmp.eq.s32.totalorder %s18, 0
      %p115 = por %p113, %p114
      %p116 = scmp.ne.s32.totalorder %s108, %s110
      %p117 = scmp.eq.s32.totalorder %s23, 1
      %p118 = por %p116, %p117
      %p119 = scmp.ne.s32.totalorder %s110, %s111
      %p120 = scmp.eq.s32.totalorder %s23, 0
      %p121 = por %p119, %p120
      %p122 = scmp.ne.s32.totalorder %s110, %s111
      %p123 = scmp.eq.s32.totalorder %s24, 1
      %p124 = por %p122, %p123
      %p126 = scmp.ne.s32.totalorder %s111, %s125
      %p127 = scmp.eq.s32.totalorder %s24, 0
      %p128 = por %p126, %p127
      %s129 = ssub.s32 %s25, %s37
      %p130 = scmp.eq.s32.totalorder %s129, 0
      %s132 = sadd.s32 %s131, 1
      %s133 = scalar_select %p130, %s131, %s132
      %p136 = pneg %p130
      %p137 = scmp.eq.s32.totalorder %s18, 1
      %p138 = por %p136, %p137
      %p139 = scmp.ne.s32.totalorder %s131, %s134
      %p140 = scmp.eq.s32.totalorder %s18, 0
      %p141 = por %p139, %p140
      %p142 = scmp.ne.s32.totalorder %s131, %s134
      %p143 = scmp.eq.s32.totalorder %s23, 1
      %p144 = por %p142, %p143
      %p145 = scmp.ne.s32.totalorder %s134, %s135
      %p146 = scmp.eq.s32.totalorder %s23, 0
      %p147 = por %p145, %p146
      %p148 = scmp.ne.s32.totalorder %s134, %s135
      %p149 = scmp.eq.s32.totalorder %s24, 1
      %p150 = por %p148, %p149
      %p152 = scmp.ne.s32.totalorder %s135, %s151
      %p153 = scmp.eq.s32.totalorder %s24, 0
      %p154 = por %p152, %p153
      %s155 = ssub.s32 %s25, %s37
      %s156 = ssub.s32 %s26, %s33
      %s157 = sor.u32 %s155, %s156
      %p158 = scmp.eq.s32.totalorder %s157, 0
      %s160 = sadd.s32 %s159, 1
      %s161 = scalar_select %p158, %s159, %s160
      %p164 = pneg %p158
      %p165 = scmp.eq.s32.totalorder %s18, 1
      %p166 = por %p164, %p165
      %p167 = scmp.ne.s32.totalorder %s159, %s162
      %p168 = scmp.eq.s32.totalorder %s18, 0
      %p169 = por %p167, %p168
      %p170 = scmp.ne.s32.totalorder %s159, %s162
      %p171 = scmp.eq.s32.totalorder %s23, 1
      %p172 = por %p170, %p171
      %p173 = scmp.ne.s32.totalorder %s162, %s163
      %p174 = scmp.eq.s32.totalorder %s23, 0
      %p175 = por %p173, %p174
      %p176 = scmp.ne.s32.totalorder %s162, %s163
      %p177 = scmp.eq.s32.totalorder %s24, 1
      %p178 = por %p176, %p177
      %p180 = scmp.ne.s32.totalorder %s163, %s179
      %p181 = scmp.eq.s32.totalorder %s24, 0
      %p182 = por %p180, %p181
      %s183 = ssub.s32 %s25, %s37
      %p184 = scmp.eq.s32.totalorder %s183, 0
      %s186 = sadd.s32 %s185, 1
      %s187 = scalar_select %p184, %s185, %s186
      %p190 = pneg %p184
      %p191 = scmp.eq.s32.totalorder %s18, 1
      %p192 = por %p190, %p191
      %p193 = scmp.ne.s32.totalorder %s185, %s188
      %p194 = scmp.eq.s32.totalorder %s18, 0
      %p195 = por %p193, %p194
      %p196 = scmp.ne.s32.totalorder %s185, %s188
      %p197 = scmp.eq.s32.totalorder %s23, 1
      %p198 = por %p196, %p197
      %p199 = scmp.ne.s32.totalorder %s188, %s189
      %p200 = scmp.eq.s32.totalorder %s23, 0
      %p201 = por %p199, %p200
      %p202 = scmp.ne.s32.totalorder %s188, %s189
      %p203 = scmp.eq.s32.totalorder %s24, 1
      %p204 = por %p202, %p203
      %p206 = scmp.ne.s32.totalorder %s189, %s205
      %p207 = scmp.eq.s32.totalorder %s24, 0
      %p208 = por %p206, %p207
      %p209 = scmp.le.s32.totalorder 1, %s18
      %p210 = scmp.lt.s32.totalorder %s18, 3
      %p211 = pnand %p209, %p210
      %p212 = pneg %p211
      // Predicated region
      $region9: #{tpu_custom_call.1} parent=5 // pred_check
        _
      $region10: #{tpu_custom_call.1} parent=5 // pred_check_branch
        %214 = sbr.rel (%p211) target = $region12
      $region11: #{tpu_custom_call.1} parent=5 // pred_region
        %s215 = ssub.s32 %s18, 1
        // Predicated region
        $region13: #{tpu_custom_call.1} parent=11 // pred_check
          %p216 = pneg %p79
        $region14: #{tpu_custom_call.1} parent=11 // pred_check_branch
          %218 = sbr.rel (%p216) target = $region16
        $region15: #{tpu_custom_call.1} parent=11 // pred_region
          _
        $region16: #{tpu_custom_call.1} parent=11 // pred_fallthru
          _
        // Predicated region
        $region17: #{tpu_custom_call.1} parent=11 // pred_check
          %p219 = pneg %p100
        $region18: #{tpu_custom_call.1} parent=11 // pred_check_branch
          %221 = sbr.rel (%p219) target = $region20
        $region19: #{tpu_custom_call.1} parent=11 // pred_region
          %223 = vsyncadd [#allocation6], 0
          %s224 = sshll.u32 %s2, 4
          %s225 = int_to_ptr.hbm [resolvable:$true] %s224
          %s226 = sshll.u32 [#allocation5], 4
          %s227 = int_to_ptr.vmem [resolvable:$true] %s226
          %232 = dma.hbm_to_vmem [thread:$0]  %s225, 3072, %s227, [#allocation6], 192, 192, 12
        $region20: #{tpu_custom_call.1} parent=11 // pred_fallthru
          _
        // Predicated region
        $region21: #{tpu_custom_call.1} parent=11 // pred_check
          %p233 = pneg %p121
        $region22: #{tpu_custom_call.1} parent=11 // pred_check_branch
          %235 = sbr.rel (%p233) target = $region24
        $region23: #{tpu_custom_call.1} parent=11 // pred_region
          _
        $region24: #{tpu_custom_call.1} parent=11 // pred_fallthru
          _
        // Predicated region
        $region25: #{tpu_custom_call.1} parent=11 // pred_check
          %p236 = pneg %p147
        $region26: #{tpu_custom_call.1} parent=11 // pred_check_branch
          %238 = sbr.rel (%p236) target = $region28
        $region27: #{tpu_custom_call.1} parent=11 // pred_region
          %p239 = scmp.lt.s32.totalorder %s27, 0
          %s240 = scalar_select %p239, %s27, 0
          %s241 = smul.addr %s240, 8
          %s242 = scalar_lea.vmem %s4, %s241
        $region28: #{tpu_custom_call.1} parent=11 // pred_fallthru
          _
      $region12: #{tpu_custom_call.1} parent=5 // pred_fallthru
        _
      %p243 = scmp.lt.s32.totalorder %s18, 2
      // Predicated region
      $region29: #{tpu_custom_call.1} parent=5 // pred_check
        %p244 = pneg %p243
      $region30: #{tpu_custom_call.1} parent=5 // pred_check_branch
        %246 = sbr.rel (%p244) target = $region32
      $region31: #{tpu_custom_call.1} parent=5 // pred_region
        // Predicated region
        $region33: #{tpu_custom_call.1} parent=31 // pred_check
          %p247 = pneg %p52
        $region34: #{tpu_custom_call.1} parent=31 // pred_check_branch
          %249 = sbr.rel (%p247) target = $region36
        $region35: #{tpu_custom_call.1} parent=31 // pred_region
          %s250 = sand.u32 %s42, 1
          %s251 = sand.u32 %s42, 1
          %s252 = smul.addr %s251, 32
          %s253 = scalar_lea.vmem [#allocation4], %s252
          %s254 = smul.u32 8, %s25
          %s255 = smul.addr %s254, 2
          %s256 = sadd.s32 %s26, %s255
          %s257 = smul.addr %s256, 4
          %s258 = scalar_lea.vmem %s0, %s257
          // Predicated region
          $region37: #{tpu_custom_call.1} parent=35 // pred_check
            _
          $region38: #{tpu_custom_call.1} parent=35 // pred_check_branch
            %260 = sbr.rel (0) target = $region40
          $region39: #{tpu_custom_call.1} parent=35 // pred_region
            // Predicated region
            $region41: #{tpu_custom_call.1} parent=39 // pred_check
              _
            $region42: #{tpu_custom_call.1} parent=39 // pred_check_branch
              %262 = sbr.rel target = $region44
            $region43: #{tpu_custom_call.1} parent=39 // pred_region
              // Predicated region
              $region56: #{tpu_custom_call.1} parent=43 // pred_check
                _
              $region57: #{tpu_custom_call.1} parent=43 // pred_check_branch
                %292 = sbr.rel (0) target = $region59
              $region58: #{tpu_custom_call.1} parent=43 // pred_region
                loop: start=0, step=1, limit=1
                $region60: #{tpu_custom_call.1} parent=58 // loop_pre_header
                  _
                $region61: #{tpu_custom_call.1} parent=58 // loop_header
                  %s294 = sphi 0, %s298
                  %p295 = scmp.ge.s32.totalorder %s294, 1
                  %s299 = sphi %s258, %s258
                  %s300 = sphi %s253, %s253
                $region62: #{tpu_custom_call.1} parent=58 // loop_header_branch
                  %297 = sbr.rel (%p295) target = $region66
                $region63: #{tpu_custom_call.1} parent=58 // loop_body
                  _
                $region64: #{tpu_custom_call.1} parent=58 // loop_footer
                  %s298 = sadd.s32 1, %s294
                $region65: #{tpu_custom_call.1} parent=58 // loop_footer_branch
                  %293 = sbr.rel target = $region61
                $region66: #{tpu_custom_call.1} parent=58 // loop_exit
                  _
                %s302 = ssub.s32 16, 1
                loop: start=0, step=1, limit=1
                $region67: #{tpu_custom_call.1} parent=58 // loop_pre_header
                  _
                $region68: #{tpu_custom_call.1} parent=58 // loop_header
                  %s304 = sphi 0, %s308
                  %p305 = scmp.ge.s32.totalorder %s304, 1
                  %s309 = sphi %s258, %s258
                  %s310 = sphi %s253, %s253
                $region69: #{tpu_custom_call.1} parent=58 // loop_header_branch
                  %307 = sbr.rel (%p305) target = $region73
                $region70: #{tpu_custom_call.1} parent=58 // loop_body
                  %v311 = vld [vmem:[%s309] sm:%s302]
                  %312 = vst [vmem:[%s310] sm:%s302] %v311
                  %v313 = vld [vmem:[%s309 + $0x8] sm:%s302]
                  %314 = vst [vmem:[%s310 + $0x4] sm:%s302] %v313
                  %v315 = vld [vmem:[%s309 + $0x10] sm:%s302]
                  %316 = vst [vmem:[%s310 + $0x8] sm:%s302] %v315
                  %v317 = vld [vmem:[%s309 + $0x18] sm:%s302]
                  %318 = vst [vmem:[%s310 + $0xc] sm:%s302] %v317
                  %v319 = vld [vmem:[%s309 + $0x20] sm:%s302]
                  %320 = vst [vmem:[%s310 + $0x10] sm:%s302] %v319
                  %v321 = vld [vmem:[%s309 + $0x28] sm:%s302]
                  %322 = vst [vmem:[%s310 + $0x14] sm:%s302] %v321
                  %v323 = vld [vmem:[%s309 + $0x30] sm:%s302]
                  %324 = vst [vmem:[%s310 + $0x18] sm:%s302] %v323
                  %v325 = vld [vmem:[%s309 + $0x38] sm:%s302]
                  %326 = vst [vmem:[%s310 + $0x1c] sm:%s302] %v325
                $region71: #{tpu_custom_call.1} parent=58 // loop_footer
                  %s308 = sadd.s32 1, %s304
                $region72: #{tpu_custom_call.1} parent=58 // loop_footer_branch
                  %303 = sbr.rel target = $region68
                $region73: #{tpu_custom_call.1} parent=58 // loop_exit
                  _
              $region59: #{tpu_custom_call.1} parent=43 // pred_fallthru
                _
            $region44: #{tpu_custom_call.1} parent=39 // pred_fallthru
              _
            // Predicated region
            $region45: #{tpu_custom_call.1} parent=39 // pred_check
              _
            $region46: #{tpu_custom_call.1} parent=39 // pred_check_branch
              %264 = sbr.rel (0) target = $region48
            $region47: #{tpu_custom_call.1} parent=39 // pred_region
              %s266 = ssub.s32 16, 1
              loop: start=0, step=1, limit=1
              $region49: #{tpu_custom_call.1} parent=47 // loop_pre_header
                _
              $region50: #{tpu_custom_call.1} parent=47 // loop_header
                %s268 = sphi 0, %s272
                %p269 = scmp.ge.s32.totalorder %s268, 1
                %s273 = sphi %s258, %s258
                %s274 = sphi %s253, %s253
              $region51: #{tpu_custom_call.1} parent=47 // loop_header_branch
                %271 = sbr.rel (%p269) target = $region55
              $region52: #{tpu_custom_call.1} parent=47 // loop_body
                %v275 = vld [vmem:[%s273] sm:%s266]
                %276 = vst [vmem:[%s274] sm:%s266] %v275
                %v277 = vld [vmem:[%s273 + $0x8] sm:%s266]
                %278 = vst [vmem:[%s274 + $0x4] sm:%s266] %v277
                %v279 = vld [vmem:[%s273 + $0x10] sm:%s266]
                %280 = vst [vmem:[%s274 + $0x8] sm:%s266] %v279
                %v281 = vld [vmem:[%s273 + $0x18] sm:%s266]
                %282 = vst [vmem:[%s274 + $0xc] sm:%s266] %v281
                %v283 = vld [vmem:[%s273 + $0x20] sm:%s266]
                %284 = vst [vmem:[%s274 + $0x10] sm:%s266] %v283
                %v285 = vld [vmem:[%s273 + $0x28] sm:%s266]
                %286 = vst [vmem:[%s274 + $0x14] sm:%s266] %v285
                %v287 = vld [vmem:[%s273 + $0x30] sm:%s266]
                %288 = vst [vmem:[%s274 + $0x18] sm:%s266] %v287
                %v289 = vld [vmem:[%s273 + $0x38] sm:%s266]
                %290 = vst [vmem:[%s274 + $0x1c] sm:%s266] %v289
              $region53: #{tpu_custom_call.1} parent=47 // loop_footer
                %s272 = sadd.s32 1, %s268
              $region54: #{tpu_custom_call.1} parent=47 // loop_footer_branch
                %267 = sbr.rel target = $region50
              $region55: #{tpu_custom_call.1} parent=47 // loop_exit
                _
            $region48: #{tpu_custom_call.1} parent=39 // pred_fallthru
              _
          $region40: #{tpu_custom_call.1} parent=35 // pred_fallthru
            _
          %327 = vnop
        $region36: #{tpu_custom_call.1} parent=31 // pred_fallthru
          _
      $region32: #{tpu_custom_call.1} parent=5 // pred_fallthru
        _
      %p328 = scmp.le.s32.totalorder 1, %s18
      %p329 = scmp.lt.s32.totalorder %s18, 3
      %p330 = pnand %p328, %p329
      %p331 = pneg %p330
      // Predicated region
      $region74: #{tpu_custom_call.1} parent=5 // pred_check
        _
      $region75: #{tpu_custom_call.1} parent=5 // pred_check_branch
        %333 = sbr.rel (%p330) target = $region77
      $region76: #{tpu_custom_call.1} parent=5 // pred_region
        %s334 = ssub.s32 %s18, 1
        %s335 = sand.u32 %s45, 1
        %s336 = sand.u32 %s45, 1
        %s337 = smul.addr %s336, 32
        %s338 = scalar_lea.vmem [#allocation4], %s337
        // Predicated region
        $region78: #{tpu_custom_call.1} parent=76 // pred_check
          %p339 = pneg %p58
        $region79: #{tpu_custom_call.1} parent=76 // pred_check_branch
          %341 = sbr.rel (%p339) target = $region81
        $region80: #{tpu_custom_call.1} parent=76 // pred_region
          _
        $region81: #{tpu_custom_call.1} parent=76 // pred_fallthru
          _
        // Predicated region
        $region82: #{tpu_custom_call.1} parent=76 // pred_check
          %p342 = pneg %p100
        $region83: #{tpu_custom_call.1} parent=76 // pred_check_branch
          %344 = sbr.rel (%p342) target = $region85
        $region84: #{tpu_custom_call.1} parent=76 // pred_region
          %346 = dma.done [#allocation6], 3072
        $region85: #{tpu_custom_call.1} parent=76 // pred_fallthru
          _
        %s347 = sand.u32 %s45, 1
        %s348 = sand.u32 %s45, 1
        %s349 = smul.addr %s348, 32
        %s350 = scalar_lea.vmem [#allocation4], %s349
        %p351 = pneg %p58
        %p352 = pneg %p55
        %p353 = pneg %p79
        %p354 = pneg %p76
        %p355 = pneg %p100
        %p356 = pneg %p97
        %p357 = pneg %p121
        %p358 = pneg %p118
        %p359 = scmp.lt.s32.totalorder %s27, 0
        %s360 = scalar_select %p359, %s27, 0
        %s361 = smul.addr %s360, 8
        %s362 = scalar_lea.vmem %s4, %s361
        %p363 = pneg %p147
        %p364 = pneg %p144
        %p365 = pneg %p175
        %p366 = pneg %p172
        %s367 = sand.u32 %s162, 1
        %s368 = scalar_lea.sflag [#allocation7], %s367
        %s369 = sand.u32 %s162, 1
        %s370 = smul.addr %s369, 64
        %s371 = scalar_lea.vmem [#allocation8], %s370
        %p372 = pneg %p201
        %p373 = pneg %p198
        %s374 = smul.u32 8, %s27
        %p375 = scmp.lt.s32.totalorder %s27, 0
        %s376 = scalar_select %p375, %s27, 0
        %s377 = smul.addr %s376, 8
        %s378 = scalar_lea.vmem %s4, %s377
        %s379 = smul.u32 8, %s27
        %p381 = scmp.eq.s32.totalorder %s28, 0
        // Predicated region
        $region86: #{tpu_custom_call.1} parent=76 // pred_check
          %p382 = pneg %p381
        $region87: #{tpu_custom_call.1} parent=76 // pred_check_branch
          %384 = sbr.rel (%p382) target = $region89
        $region88: #{tpu_custom_call.1} parent=76 // pred_region
          %v385 = vld [vmem:[%s378] sm:$0xff]
          %386 = vst [vmem:[#allocation2] sm:$0xff] %v385
        $region89: #{tpu_custom_call.1} parent=76 // pred_fallthru
          _
        %v387 = vld [vmem:[%s338] sm:$0xf]
        %v388 = vld [vmem:[%s338 + $0x4] sm:$0xf]
        %v389 = vld [vmem:[%s338 + $0x8] sm:$0xf]
        %v390 = vld [vmem:[%s338 + $0xc] sm:$0xf]
        %v391 = vld [vmem:[%s338 + $0x10] sm:$0xf]
        %v392 = vld [vmem:[%s338 + $0x14] sm:$0xf]
        %v393 = vld [vmem:[%s338 + $0x18] sm:$0xf]
        %v394 = vld [vmem:[%s338 + $0x1c] sm:$0xf]
        %v395 = vrot.slane %v391, 4
        %vm396 = vcmask 1047556
        %v397 = vsel %vm396, %v395, %v387
        %v399 = vunpack.c.l.s4 1983009808
        %v400 = vunpack.c.0.s8 %v399
        %v401 = vperm.slane %v397, %v400
        %v402 = vrot.slane %v393, 4
        %v403 = vsel %vm396, %v402, %v389
        %v405 = vunpack.c.l.s4 1983009808
        %v406 = vunpack.c.0.s8 %v405
        %v407 = vperm.slane %v403, %v406
        %v408 = vrot.slane %v407, 4
        %v409 = vsel %vm396, %v408, %v401
        %v410 = vrot.slane %v401, 4
        %v411 = vsel %vm396, %v407, %v410
        %v413 = vunpack.c.l.s4 1934713408
        %v414 = vunpack.c.0.s8 %v413
        %v415 = vperm.slane %v409, %v414
        %v417 = vunpack.c.l.s4 1934713408
        %v418 = vunpack.c.0.s8 %v417
        %v419 = vperm.slane %v411, %v418
        %v420 = vrot.slane %v415, 4
        %v421 = vsel %vm396, 0, %v420
        %v422 = vrot.slane %v419, 4
        %v423 = vsel %vm396, 0, %v422
        %v424 = vrot.slane %v392, 4
        %v425 = vsel %vm396, %v424, %v388
        %v427 = vunpack.c.l.s4 1983009808
        %v428 = vunpack.c.0.s8 %v427
        %v429 = vperm.slane %v425, %v428
        %v430 = vrot.slane %v394, 4
        %v431 = vsel %vm396, %v430, %v390
        %v433 = vunpack.c.l.s4 1983009808
        %v434 = vunpack.c.0.s8 %v433
        %v435 = vperm.slane %v431, %v434
        %v436 = vrot.slane %v435, 4
        %v437 = vsel %vm396, %v436, %v429
        %v438 = vrot.slane %v429, 4
        %v439 = vsel %vm396, %v435, %v438
        %v441 = vunpack.c.l.s4 1934713408
        %v442 = vunpack.c.0.s8 %v441
        %v443 = vperm.slane %v437, %v442
        %v445 = vunpack.c.l.s4 1934713408
        %v446 = vunpack.c.0.s8 %v445
        %v447 = vperm.slane %v439, %v446
        %v448 = vrot.slane %v443, 4
        %v449 = vsel %vm396, 0, %v448
        %v450 = vrot.slane %v447, 4
        %v451 = vsel %vm396, 0, %v450
        %v454 = vpack.i.b16 %v443, %v415
        %v455 = vshrl.u32 %v415, 16
        %v456 = vshrl.u32 %v443, 16
        %v457 = vpack.i.b16 %v456, %v455
        %v460 = vpack.i.b16 %v449, %v421
        %v461 = vshrl.u32 %v421, 16
        %v462 = vshrl.u32 %v449, 16
        %v463 = vpack.i.b16 %v462, %v461
        %v466 = vpack.i.b16 %v447, %v419
        %v467 = vshrl.u32 %v419, 16
        %v468 = vshrl.u32 %v447, 16
        %v469 = vpack.i.b16 %v468, %v467
        %v472 = vpack.i.b16 %v451, %v423
        %v473 = vshrl.u32 %v423, 16
        %v474 = vshrl.u32 %v451, 16
        %v475 = vpack.i.b16 %v474, %v473
        %v476 = vld [vmem:[%s1] sm:$0x3f]
        %v477 = vunpack.c.l.b16 %v454
        %v478 = vunpack.c.l.b16 %v457
        %v479 = vunpack.c.l.b16 %v460
        %v480 = vunpack.c.l.b16 %v463
        %v481 = vunpack.c.l.b16 %v466
        %v482 = vunpack.c.l.b16 %v469
        %v483 = vunpack.c.l.b16 %v472
        %v484 = vunpack.c.l.b16 %v475
        %v485 = vpack.c.b16 %v478, %v477
        %v486 = vpack.c.b16 %v480, %v479
        %v487 = vpack.c.b16 %v482, %v481
        %v488 = vpack.c.b16 %v484, %v483
        %490 = vst [vmem:[#allocation1] ss:$4 sm:$0xff] %v476
        %v491 = vld.sshfl [vmem:[#allocation1] sm:$0xff pattern:$0x73625140]
        %v492 = vld.sshfl [vmem:[#allocation1 + $0x8] sm:$0xff pattern:$0x73625140]
        %v493 = vld.sshfl [vmem:[#allocation1 + $0x10] sm:$0xff pattern:$0x73625140]
        %vm494 = vcmask 31744
        %v496 = vsel %vm494, %v485, 0
        %v499 = vsel %vm494, %v486, 0
        %v502 = vsel %vm494, %v487, 0
        %v505 = vsel %vm494, %v488, 0
        %vm507 = vcmask 1041408
        %v508 = vsel %vm507, %v491, 0
        %v510 = vsel %vm507, %v492, 0
        %v512 = vsel %vm507, %v493, 0
        %514 = vmatpush.bf16.msra.mxu0 0
        %515 = vmatpush.bf16.msra.mxu0 0
        %516 = vmatpush.bf16.msra.mxu0 0
        %517 = vmatpush.bf16.msra.mxu0 0
        %518 = vmatpush.bf16.msra.mxu0 0
        %519 = vmatpush.bf16.msra.mxu0 0
        %520 = vmatpush.bf16.msra.mxu0 0
        %521 = vmatpush.bf16.msra.mxu0 %v508
        %522 = vmatmul.bf16.gmra.mxu0 %v496
        %v523 = vpop.f32.mrf.mxu0
        %v524 = vadd.f32 0.0, %v523
        %v525 = vpop.f32.mrf.mxu0
        %v526 = vadd.f32 0.0, %v525
        %527 = vmatmul.bf16.gmra.mxu0 %v499
        %v528 = vpop.f32.mrf.mxu0
        %v529 = vadd.f32 0.0, %v528
        %v530 = vpop.f32.mrf.mxu0
        %v531 = vadd.f32 0.0, %v530
        %532 = vmatmul.bf16.gmra.mxu0 %v502
        %v533 = vpop.f32.mrf.mxu0
        %v534 = vadd.f32 0.0, %v533
        %v535 = vpop.f32.mrf.mxu0
        %v536 = vadd.f32 0.0, %v535
        %537 = vmatmul.bf16.gmra.mxu0 %v505
        %v538 = vpop.f32.mrf.mxu0
        %v539 = vadd.f32 0.0, %v538
        %v540 = vpop.f32.mrf.mxu0
        %v541 = vadd.f32 0.0, %v540
        %542 = vdwg.mxu0
        %543 = vmatpush.bf16.msra.mxu0 0
        %544 = vmatpush.bf16.msra.mxu0 0
        %545 = vmatpush.bf16.msra.mxu0 0
        %546 = vmatpush.bf16.msra.mxu0 0
        %547 = vmatpush.bf16.msra.mxu0 0
        %548 = vmatpush.bf16.msra.mxu0 0
        %549 = vmatpush.bf16.msra.mxu0 0
        %550 = vmatpush.bf16.msra.mxu0 %v510
        %551 = vmatmul.bf16.gmra.mxu0 %v496
        %v552 = vpop.f32.mrf.mxu0
        %v553 = vadd.f32 0.0, %v552
        %v554 = vpop.f32.mrf.mxu0
        %v555 = vadd.f32 0.0, %v554
        %556 = vmatmul.bf16.gmra.mxu0 %v499
        %v557 = vpop.f32.mrf.mxu0
        %v558 = vadd.f32 0.0, %v557
        %v559 = vpop.f32.mrf.mxu0
        %v560 = vadd.f32 0.0, %v559
        %561 = vmatmul.bf16.gmra.mxu0 %v502
        %v562 = vpop.f32.mrf.mxu0
        %v563 = vadd.f32 0.0, %v562
        %v564 = vpop.f32.mrf.mxu0
        %v565 = vadd.f32 0.0, %v564
        %566 = vmatmul.bf16.gmra.mxu0 %v505
        %v567 = vpop.f32.mrf.mxu0
        %v568 = vadd.f32 0.0, %v567
        %v569 = vpop.f32.mrf.mxu0
        %v570 = vadd.f32 0.0, %v569
        %571 = vdwg.mxu0
        %572 = vmatpush.bf16.msra.mxu0 0
        %573 = vmatpush.bf16.msra.mxu0 0
        %574 = vmatpush.bf16.msra.mxu0 0
        %575 = vmatpush.bf16.msra.mxu0 0
        %576 = vmatpush.bf16.msra.mxu0 0
        %577 = vmatpush.bf16.msra.mxu0 0
        %578 = vmatpush.bf16.msra.mxu0 0
        %579 = vmatpush.bf16.msra.mxu0 %v512
        %580 = vmatmul.bf16.gmra.mxu0 %v496
        %v581 = vpop.f32.mrf.mxu0
        %v582 = vadd.f32 0.0, %v581
        %v583 = vpop.f32.mrf.mxu0
        %v584 = vadd.f32 0.0, %v583
        %585 = vmatmul.bf16.gmra.mxu0 %v499
        %v586 = vpop.f32.mrf.mxu0
        %v587 = vadd.f32 0.0, %v586
        %v588 = vpop.f32.mrf.mxu0
        %v589 = vadd.f32 0.0, %v588
        %590 = vmatmul.bf16.gmra.mxu0 %v502
        %v591 = vpop.f32.mrf.mxu0
        %v592 = vadd.f32 0.0, %v591
        %v593 = vpop.f32.mrf.mxu0
        %v594 = vadd.f32 0.0, %v593
        %595 = vmatmul.bf16.gmra.mxu0 %v505
        %v596 = vpop.f32.mrf.mxu0
        %v597 = vadd.f32 0.0, %v596
        %v598 = vpop.f32.mrf.mxu0
        %v599 = vadd.f32 0.0, %v598
        %600 = vdwg.mxu0
        %v601 = vld [vmem:[#allocation5] sm:$0xff]
        %v602 = vld [vmem:[#allocation5 + $0x8] sm:$0xf]
        %v603 = vld [vmem:[#allocation5 + $0xc] sm:$0xff]
        %v604 = vld [vmem:[#allocation5 + $0x14] sm:$0xf]
        %v605 = vld [vmem:[#allocation5 + $0x18] sm:$0xff]
        %v606 = vld [vmem:[#allocation5 + $0x20] sm:$0xf]
        %v607 = vld [vmem:[#allocation5 + $0x24] sm:$0xff]
        %v608 = vld [vmem:[#allocation5 + $0x2c] sm:$0xf]
        %v609 = vld [vmem:[#allocation5 + $0x30] sm:$0xff]
        %v610 = vld [vmem:[#allocation5 + $0x38] sm:$0xf]
        %v611 = vld [vmem:[#allocation5 + $0x3c] sm:$0xff]
        %v612 = vld [vmem:[#allocation5 + $0x44] sm:$0xf]
        %v613 = vld [vmem:[#allocation5 + $0x48] sm:$0xff]
        %v614 = vld [vmem:[#allocation5 + $0x50] sm:$0xf]
        %v615 = vld [vmem:[#allocation5 + $0x54] sm:$0xff]
        %v616 = vld [vmem:[#allocation5 + $0x5c] sm:$0xf]
        %v617 = vld [vmem:[#allocation5 + $0x60] sm:$0xff]
        %v618 = vld [vmem:[#allocation5 + $0x68] sm:$0xf]
        %v619 = vld [vmem:[#allocation5 + $0x6c] sm:$0xff]
        %v620 = vld [vmem:[#allocation5 + $0x74] sm:$0xf]
        %v621 = vld [vmem:[#allocation5 + $0x78] sm:$0xff]
        %v622 = vld [vmem:[#allocation5 + $0x80] sm:$0xf]
        %v623 = vld [vmem:[#allocation5 + $0x84] sm:$0xff]
        %v624 = vld [vmem:[#allocation5 + $0x8c] sm:$0xf]
        %v625 = vld [vmem:[#allocation5 + $0x90] sm:$0xff]
        %v626 = vld [vmem:[#allocation5 + $0x98] sm:$0xf]
        %v627 = vld [vmem:[#allocation5 + $0x9c] sm:$0xff]
        %v628 = vld [vmem:[#allocation5 + $0xa4] sm:$0xf]
        %v629 = vld [vmem:[#allocation5 + $0xa8] sm:$0xff]
        %v630 = vld [vmem:[#allocation5 + $0xb0] sm:$0xf]
        %v631 = vld [vmem:[#allocation5 + $0xb4] sm:$0xff]
        %v632 = vld [vmem:[#allocation5 + $0xbc] sm:$0xf]
        %v633 = vld [vmem:[#allocation2] sm:$0xff]
        %v634 = vpack.c.bf16 %v633, %v633
        %v667 = vunpack.c.l.b16 %v601
        %v668 = vunpack.c.h.b16 %v601
        %v669 = vunpack.c.l.b16 %v602
        %v670 = vunpack.c.l.b16 %v603
        %v671 = vunpack.c.h.b16 %v603
        %v672 = vunpack.c.l.b16 %v604
        %v673 = vunpack.c.l.b16 %v605
        %v674 = vunpack.c.h.b16 %v605
        %v675 = vunpack.c.l.b16 %v606
        %v676 = vunpack.c.l.b16 %v607
        %v677 = vunpack.c.h.b16 %v607
        %v678 = vunpack.c.l.b16 %v608
        %v679 = vunpack.c.l.b16 %v609
        %v680 = vunpack.c.h.b16 %v609
        %v681 = vunpack.c.l.b16 %v610
        %v682 = vunpack.c.l.b16 %v611
        %v683 = vunpack.c.h.b16 %v611
        %v684 = vunpack.c.l.b16 %v612
        %v685 = vunpack.c.l.b16 %v613
        %v686 = vunpack.c.h.b16 %v613
        %v687 = vunpack.c.l.b16 %v614
        %v688 = vunpack.c.l.b16 %v615
        %v689 = vunpack.c.h.b16 %v615
        %v690 = vunpack.c.l.b16 %v616
        %v691 = vunpack.c.l.b16 %v617
        %v692 = vunpack.c.h.b16 %v617
        %v693 = vunpack.c.l.b16 %v618
        %v694 = vunpack.c.l.b16 %v619
        %v695 = vunpack.c.h.b16 %v619
        %v696 = vunpack.c.l.b16 %v620
        %v697 = vunpack.c.l.b16 %v621
        %v698 = vunpack.c.h.b16 %v621
        %v699 = vunpack.c.l.b16 %v622
        %v700 = vunpack.c.l.b16 %v623
        %v701 = vunpack.c.h.b16 %v623
        %v702 = vunpack.c.l.b16 %v624
        %v703 = vunpack.c.l.b16 %v625
        %v704 = vunpack.c.h.b16 %v625
        %v705 = vunpack.c.l.b16 %v626
        %v706 = vunpack.c.l.b16 %v627
        %v707 = vunpack.c.h.b16 %v627
        %v708 = vunpack.c.l.b16 %v628
        %v709 = vunpack.c.l.b16 %v629
        %v710 = vunpack.c.h.b16 %v629
        %v711 = vunpack.c.l.b16 %v630
        %v712 = vunpack.c.l.b16 %v631
        %v713 = vunpack.c.h.b16 %v631
        %v714 = vunpack.c.l.b16 %v632
        %v715 = vpack.c.b16 %v670, %v667
        %v716 = vpack.c.b16 %v671, %v668
        %v717 = vpack.c.b16 %v672, %v669
        %v718 = vpack.c.b16 %v676, %v673
        %v719 = vpack.c.b16 %v677, %v674
        %v720 = vpack.c.b16 %v678, %v675
        %v721 = vpack.c.b16 %v682, %v679
        %v722 = vpack.c.b16 %v683, %v680
        %v723 = vpack.c.b16 %v684, %v681
        %v724 = vpack.c.b16 %v688, %v685
        %v725 = vpack.c.b16 %v689, %v686
        %v726 = vpack.c.b16 %v690, %v687
        %v727 = vpack.c.b16 %v694, %v691
        %v728 = vpack.c.b16 %v695, %v692
        %v729 = vpack.c.b16 %v696, %v693
        %v730 = vpack.c.b16 %v700, %v697
        %v731 = vpack.c.b16 %v701, %v698
        %v732 = vpack.c.b16 %v702, %v699
        %v733 = vpack.c.b16 %v706, %v703
        %v734 = vpack.c.b16 %v707, %v704
        %v735 = vpack.c.b16 %v708, %v705
        %v736 = vpack.c.b16 %v712, %v709
        %v737 = vpack.c.b16 %v713, %v710
        %v738 = vpack.c.b16 %v714, %v711
        %763 = vmatpush.bf16.msra.mxu0 %v736
        %764 = vmatpush.bf16.msra.mxu0 %v733
        %765 = vmatpush.bf16.msra.mxu0 %v730
        %766 = vmatpush.bf16.msra.mxu0 %v727
        %767 = vmatpush.bf16.msra.mxu0 %v724
        %768 = vmatpush.bf16.msra.mxu0 %v721
        %769 = vmatpush.bf16.msra.mxu0 %v718
        %770 = vmatpush.bf16.msra.mxu0 %v715
        %771 = vmatmul.bf16.gmra.mxu0 %v634
        %v772 = vpop.f32.mrf.mxu0
        %v773 = vadd.f32 0.0, %v772
        %v774 = vpop.f32.mrf.mxu0
        %775 = vdwg.mxu0
        %776 = vmatpush.bf16.msra.mxu0 %v737
        %777 = vmatpush.bf16.msra.mxu0 %v734
        %778 = vmatpush.bf16.msra.mxu0 %v731
        %779 = vmatpush.bf16.msra.mxu0 %v728
        %780 = vmatpush.bf16.msra.mxu0 %v725
        %781 = vmatpush.bf16.msra.mxu0 %v722
        %782 = vmatpush.bf16.msra.mxu0 %v719
        %783 = vmatpush.bf16.msra.mxu0 %v716
        %784 = vmatmul.bf16.gmra.mxu0 %v634
        %v785 = vpop.f32.mrf.mxu0
        %v786 = vadd.f32 0.0, %v785
        %v787 = vpop.f32.mrf.mxu0
        %788 = vdwg.mxu0
        %789 = vmatpush.bf16.msra.mxu0 %v738
        %790 = vmatpush.bf16.msra.mxu0 %v735
        %791 = vmatpush.bf16.msra.mxu0 %v732
        %792 = vmatpush.bf16.msra.mxu0 %v729
        %793 = vmatpush.bf16.msra.mxu0 %v726
        %794 = vmatpush.bf16.msra.mxu0 %v723
        %795 = vmatpush.bf16.msra.mxu0 %v720
        %796 = vmatpush.bf16.msra.mxu0 %v717
        %797 = vmatmul.bf16.gmra.mxu0 %v634
        %v798 = vpop.f32.mrf.mxu0
        %v799 = vadd.f32 0.0, %v798
        %v800 = vpop.f32.mrf.mxu0
        %801 = vdwg.mxu0
        %v802 = vadd.f32 %v524, %v773
        %v803 = vxor.u32 %v802, 2147483648
        %v804 = vmul.f32 %v803, 1.442695
        %v805 = vpow.pop %v804
        %v806 = vadd.f32 %v805, 1.0
        %v807 = vrcp.pop %v806
        %v808 = vmul.f32 %v806, %v807
        %v809 = vsub.f32 1.0, %v808
        %v810 = vmul.f32 %v807, %v809
        %v811 = vadd.f32 %v807, %v810
        %vm812 = vweird.f32 %v806
        %vm813 = vweird.f32 %v807
        %vm814 = vmor %vm812, %vm813
        %v815 = vsel %vm814, %v807, %v811
        %v816 = vand.u32 2147483647, %v806
        %vm817 = vcmp.eq.f32.partialorder %v816, 8.507059e+37
        %v818 = vand.u32 %v806, 2147483648
        %v819 = vor.u32 1.1754944e-38, %v818
        %v820 = vsel %vm817, %v819, %v815
        %v821 = vmul.f32 1.0, %v820
        %v822 = vadd.f32 %v553, %v786
        %v823 = vxor.u32 %v822, 2147483648
        %v824 = vmul.f32 %v823, 1.442695
        %v825 = vpow.pop %v824
        %v826 = vadd.f32 %v825, 1.0
        %v827 = vrcp.pop %v826
        %v828 = vmul.f32 %v826, %v827
        %v829 = vsub.f32 1.0, %v828
        %v830 = vmul.f32 %v827, %v829
        %v831 = vadd.f32 %v827, %v830
        %vm832 = vweird.f32 %v826
        %vm833 = vweird.f32 %v827
        %vm834 = vmor %vm832, %vm833
        %v835 = vsel %vm834, %v827, %v831
        %v836 = vand.u32 2147483647, %v826
        %vm837 = vcmp.eq.f32.partialorder %v836, 8.507059e+37
        %v838 = vand.u32 %v826, 2147483648
        %v839 = vor.u32 1.1754944e-38, %v838
        %v840 = vsel %vm837, %v839, %v835
        %v841 = vmul.f32 1.0, %v840
        %v842 = vmul.f32 %v821, %v799
        %v843 = vadd.f32 %v582, %v842
        %v844 = vtanh.pop %v843
        %v845 = vsub.f32 %v633, %v844
        %v846 = vmul.f32 %v841, %v845
        %v847 = vadd.f32 %v844, %v846
        %848 = vst [vmem:[#allocation3] sm:$0xff] %v847
        %v849 = vpack.c.bf16 %v847, %v847
        %850 = vmatpush.bf16.msra.mxu0 %v736
        %851 = vmatpush.bf16.msra.mxu0 %v733
        %852 = vmatpush.bf16.msra.mxu0 %v730
        %853 = vmatpush.bf16.msra.mxu0 %v727
        %854 = vmatpush.bf16.msra.mxu0 %v724
        %855 = vmatpush.bf16.msra.mxu0 %v721
        %856 = vmatpush.bf16.msra.mxu0 %v718
        %857 = vmatpush.bf16.msra.mxu0 %v715
        %858 = vmatmul.bf16.gmra.mxu0 %v849
        %v859 = vpop.f32.mrf.mxu0
        %v860 = vadd.f32 0.0, %v859
        %v861 = vpop.f32.mrf.mxu0
        %862 = vdwg.mxu0
        %863 = vmatpush.bf16.msra.mxu0 %v737
        %864 = vmatpush.bf16.msra.mxu0 %v734
        %865 = vmatpush.bf16.msra.mxu0 %v731
        %866 = vmatpush.bf16.msra.mxu0 %v728
        %867 = vmatpush.bf16.msra.mxu0 %v725
        %868 = vmatpush.bf16.msra.mxu0 %v722
        %869 = vmatpush.bf16.msra.mxu0 %v719
        %870 = vmatpush.bf16.msra.mxu0 %v716
        %871 = vmatmul.bf16.gmra.mxu0 %v849
        %v872 = vpop.f32.mrf.mxu0
        %v873 = vadd.f32 0.0, %v872
        %v874 = vpop.f32.mrf.mxu0
        %875 = vdwg.mxu0
        %876 = vmatpush.bf16.msra.mxu0 %v738
        %877 = vmatpush.bf16.msra.mxu0 %v735
        %878 = vmatpush.bf16.msra.mxu0 %v732
        %879 = vmatpush.bf16.msra.mxu0 %v729
        %880 = vmatpush.bf16.msra.mxu0 %v726
        %881 = vmatpush.bf16.msra.mxu0 %v723
        %882 = vmatpush.bf16.msra.mxu0 %v720
        %883 = vmatpush.bf16.msra.mxu0 %v717
        %884 = vmatmul.bf16.gmra.mxu0 %v849
        %v885 = vpop.f32.mrf.mxu0
        %v886 = vadd.f32 0.0, %v885
        %v887 = vpop.f32.mrf.mxu0
        %888 = vdwg.mxu0
        %v889 = vadd.f32 %v526, %v860
        %v890 = vxor.u32 %v889, 2147483648
        %v891 = vmul.f32 %v890, 1.442695
        %v892 = vpow.pop %v891
        %v893 = vadd.f32 %v892, 1.0
        %v894 = vrcp.pop %v893
        %v895 = vmul.f32 %v893, %v894
        %v896 = vsub.f32 1.0, %v895
        %v897 = vmul.f32 %v894, %v896
        %v898 = vadd.f32 %v894, %v897
        %vm899 = vweird.f32 %v893
        %vm900 = vweird.f32 %v894
        %vm901 = vmor %vm899, %vm900
        %v902 = vsel %vm901, %v894, %v898
        %v903 = vand.u32 2147483647, %v893
        %vm904 = vcmp.eq.f32.partialorder %v903, 8.507059e+37
        %v905 = vand.u32 %v893, 2147483648
        %v906 = vor.u32 1.1754944e-38, %v905
        %v907 = vsel %vm904, %v906, %v902
        %v908 = vmul.f32 1.0, %v907
        %v909 = vadd.f32 %v555, %v873
        %v910 = vxor.u32 %v909, 2147483648
        %v911 = vmul.f32 %v910, 1.442695
        %v912 = vpow.pop %v911
        %v913 = vadd.f32 %v912, 1.0
        %v914 = vrcp.pop %v913
        %v915 = vmul.f32 %v913, %v914
        %v916 = vsub.f32 1.0, %v915
        %v917 = vmul.f32 %v914, %v916
        %v918 = vadd.f32 %v914, %v917
        %vm919 = vweird.f32 %v913
        %vm920 = vweird.f32 %v914
        %vm921 = vmor %vm919, %vm920
        %v922 = vsel %vm921, %v914, %v918
        %v923 = vand.u32 2147483647, %v913
        %vm924 = vcmp.eq.f32.partialorder %v923, 8.507059e+37
        %v925 = vand.u32 %v913, 2147483648
        %v926 = vor.u32 1.1754944e-38, %v925
        %v927 = vsel %vm924, %v926, %v922
        %v928 = vmul.f32 1.0, %v927
        %v929 = vmul.f32 %v908, %v886
        %v930 = vadd.f32 %v584, %v929
        %v931 = vtanh.pop %v930
        %v932 = vsub.f32 %v847, %v931
        %v933 = vmul.f32 %v928, %v932
        %v934 = vadd.f32 %v931, %v933
        %s935 = scalar_lea.vmem [#allocation3], 8
        %936 = vst [vmem:[%s935] sm:$0xff] %v934
        %v937 = vpack.c.bf16 %v934, %v934
        %938 = vmatpush.bf16.msra.mxu0 %v736
        %939 = vmatpush.bf16.msra.mxu0 %v733
        %940 = vmatpush.bf16.msra.mxu0 %v730
        %941 = vmatpush.bf16.msra.mxu0 %v727
        %942 = vmatpush.bf16.msra.mxu0 %v724
        %943 = vmatpush.bf16.msra.mxu0 %v721
        %944 = vmatpush.bf16.msra.mxu0 %v718
        %945 = vmatpush.bf16.msra.mxu0 %v715
        %946 = vmatmul.bf16.gmra.mxu0 %v937
        %v947 = vpop.f32.mrf.mxu0
        %v948 = vadd.f32 0.0, %v947
        %v949 = vpop.f32.mrf.mxu0
        %950 = vdwg.mxu0
        %951 = vmatpush.bf16.msra.mxu0 %v737
        %952 = vmatpush.bf16.msra.mxu0 %v734
        %953 = vmatpush.bf16.msra.mxu0 %v731
        %954 = vmatpush.bf16.msra.mxu0 %v728
        %955 = vmatpush.bf16.msra.mxu0 %v725
        %956 = vmatpush.bf16.msra.mxu0 %v722
        %957 = vmatpush.bf16.msra.mxu0 %v719
        %958 = vmatpush.bf16.msra.mxu0 %v716
        %959 = vmatmul.bf16.gmra.mxu0 %v937
        %v960 = vpop.f32.mrf.mxu0
        %v961 = vadd.f32 0.0, %v960
        %v962 = vpop.f32.mrf.mxu0
        %963 = vdwg.mxu0
        %964 = vmatpush.bf16.msra.mxu0 %v738
        %965 = vmatpush.bf16.msra.mxu0 %v735
        %966 = vmatpush.bf16.msra.mxu0 %v732
        %967 = vmatpush.bf16.msra.mxu0 %v729
        %968 = vmatpush.bf16.msra.mxu0 %v726
        %969 = vmatpush.bf16.msra.mxu0 %v723
        %970 = vmatpush.bf16.msra.mxu0 %v720
        %971 = vmatpush.bf16.msra.mxu0 %v717
        %972 = vmatmul.bf16.gmra.mxu0 %v937
        %v973 = vpop.f32.mrf.mxu0
        %v974 = vadd.f32 0.0, %v973
        %v975 = vpop.f32.mrf.mxu0
        %976 = vdwg.mxu0
        %v977 = vadd.f32 %v529, %v948
        %v978 = vxor.u32 %v977, 2147483648
        %v979 = vmul.f32 %v978, 1.442695
        %v980 = vpow.pop %v979
        %v981 = vadd.f32 %v980, 1.0
        %v982 = vrcp.pop %v981
        %v983 = vmul.f32 %v981, %v982
        %v984 = vsub.f32 1.0, %v983
        %v985 = vmul.f32 %v982, %v984
        %v986 = vadd.f32 %v982, %v985
        %vm987 = vweird.f32 %v981
        %vm988 = vweird.f32 %v982
        %vm989 = vmor %vm987, %vm988
        %v990 = vsel %vm989, %v982, %v986
        %v991 = vand.u32 2147483647, %v981
        %vm992 = vcmp.eq.f32.partialorder %v991, 8.507059e+37
        %v993 = vand.u32 %v981, 2147483648
        %v994 = vor.u32 1.1754944e-38, %v993
        %v995 = vsel %vm992, %v994, %v990
        %v996 = vmul.f32 1.0, %v995
        %v997 = vadd.f32 %v558, %v961
        %v998 = vxor.u32 %v997, 2147483648
        %v999 = vmul.f32 %v998, 1.442695
        %v1000 = vpow.pop %v999
        %v1001 = vadd.f32 %v1000, 1.0
        %v1002 = vrcp.pop %v1001
        %v1003 = vmul.f32 %v1001, %v1002
        %v1004 = vsub.f32 1.0, %v1003
        %v1005 = vmul.f32 %v1002, %v1004
        %v1006 = vadd.f32 %v1002, %v1005
        %vm1007 = vweird.f32 %v1001
        %vm1008 = vweird.f32 %v1002
        %vm1009 = vmor %vm1007, %vm1008
        %v1010 = vsel %vm1009, %v1002, %v1006
        %v1011 = vand.u32 2147483647, %v1001
        %vm1012 = vcmp.eq.f32.partialorder %v1011, 8.507059e+37
        %v1013 = vand.u32 %v1001, 2147483648
        %v1014 = vor.u32 1.1754944e-38, %v1013
        %v1015 = vsel %vm1012, %v1014, %v1010
        %v1016 = vmul.f32 1.0, %v1015
        %v1017 = vmul.f32 %v996, %v974
        %v1018 = vadd.f32 %v587, %v1017
        %v1019 = vtanh.pop %v1018
        %v1020 = vsub.f32 %v934, %v1019
        %v1021 = vmul.f32 %v1016, %v1020
        %v1022 = vadd.f32 %v1019, %v1021
        %s1023 = scalar_lea.vmem [#allocation3], 16
        %1024 = vst [vmem:[%s1023] sm:$0xff] %v1022
        %v1025 = vpack.c.bf16 %v1022, %v1022
        %1026 = vmatpush.bf16.msra.mxu0 %v736
        %1027 = vmatpush.bf16.msra.mxu0 %v733
        %1028 = vmatpush.bf16.msra.mxu0 %v730
        %1029 = vmatpush.bf16.msra.mxu0 %v727
        %1030 = vmatpush.bf16.msra.mxu0 %v724
        %1031 = vmatpush.bf16.msra.mxu0 %v721
        %1032 = vmatpush.bf16.msra.mxu0 %v718
        %1033 = vmatpush.bf16.msra.mxu0 %v715
        %1034 = vmatmul.bf16.gmra.mxu0 %v1025
        %v1035 = vpop.f32.mrf.mxu0
        %v1036 = vadd.f32 0.0, %v1035
        %v1037 = vpop.f32.mrf.mxu0
        %1038 = vdwg.mxu0
        %1039 = vmatpush.bf16.msra.mxu0 %v737
        %1040 = vmatpush.bf16.msra.mxu0 %v734
        %1041 = vmatpush.bf16.msra.mxu0 %v731
        %1042 = vmatpush.bf16.msra.mxu0 %v728
        %1043 = vmatpush.bf16.msra.mxu0 %v725
        %1044 = vmatpush.bf16.msra.mxu0 %v722
        %1045 = vmatpush.bf16.msra.mxu0 %v719
        %1046 = vmatpush.bf16.msra.mxu0 %v716
        %1047 = vmatmul.bf16.gmra.mxu0 %v1025
        %v1048 = vpop.f32.mrf.mxu0
        %v1049 = vadd.f32 0.0, %v1048
        %v1050 = vpop.f32.mrf.mxu0
        %1051 = vdwg.mxu0
        %1052 = vmatpush.bf16.msra.mxu0 %v738
        %1053 = vmatpush.bf16.msra.mxu0 %v735
        %1054 = vmatpush.bf16.msra.mxu0 %v732
        %1055 = vmatpush.bf16.msra.mxu0 %v729
        %1056 = vmatpush.bf16.msra.mxu0 %v726
        %1057 = vmatpush.bf16.msra.mxu0 %v723
        %1058 = vmatpush.bf16.msra.mxu0 %v720
        %1059 = vmatpush.bf16.msra.mxu0 %v717
        %1060 = vmatmul.bf16.gmra.mxu0 %v1025
        %v1061 = vpop.f32.mrf.mxu0
        %v1062 = vadd.f32 0.0, %v1061
        %v1063 = vpop.f32.mrf.mxu0
        %1064 = vdwg.mxu0
        %v1065 = vadd.f32 %v531, %v1036
        %v1066 = vxor.u32 %v1065, 2147483648
        %v1067 = vmul.f32 %v1066, 1.442695
        %v1068 = vpow.pop %v1067
        %v1069 = vadd.f32 %v1068, 1.0
        %v1070 = vrcp.pop %v1069
        %v1071 = vmul.f32 %v1069, %v1070
        %v1072 = vsub.f32 1.0, %v1071
        %v1073 = vmul.f32 %v1070, %v1072
        %v1074 = vadd.f32 %v1070, %v1073
        %vm1075 = vweird.f32 %v1069
        %vm1076 = vweird.f32 %v1070
        %vm1077 = vmor %vm1075, %vm1076
        %v1078 = vsel %vm1077, %v1070, %v1074
        %v1079 = vand.u32 2147483647, %v1069
        %vm1080 = vcmp.eq.f32.partialorder %v1079, 8.507059e+37
        %v1081 = vand.u32 %v1069, 2147483648
        %v1082 = vor.u32 1.1754944e-38, %v1081
        %v1083 = vsel %vm1080, %v1082, %v1078
        %v1084 = vmul.f32 1.0, %v1083
        %v1085 = vadd.f32 %v560, %v1049
        %v1086 = vxor.u32 %v1085, 2147483648
        %v1087 = vmul.f32 %v1086, 1.442695
        %v1088 = vpow.pop %v1087
        %v1089 = vadd.f32 %v1088, 1.0
        %v1090 = vrcp.pop %v1089
        %v1091 = vmul.f32 %v1089, %v1090
        %v1092 = vsub.f32 1.0, %v1091
        %v1093 = vmul.f32 %v1090, %v1092
        %v1094 = vadd.f32 %v1090, %v1093
        %vm1095 = vweird.f32 %v1089
        %vm1096 = vweird.f32 %v1090
        %vm1097 = vmor %vm1095, %vm1096
        %v1098 = vsel %vm1097, %v1090, %v1094
        %v1099 = vand.u32 2147483647, %v1089
        %vm1100 = vcmp.eq.f32.partialorder %v1099, 8.507059e+37
        %v1101 = vand.u32 %v1089, 2147483648
        %v1102 = vor.u32 1.1754944e-38, %v1101
        %v1103 = vsel %vm1100, %v1102, %v1098
        %v1104 = vmul.f32 1.0, %v1103
        %v1105 = vmul.f32 %v1084, %v1062
        %v1106 = vadd.f32 %v589, %v1105
        %v1107 = vtanh.pop %v1106
        %v1108 = vsub.f32 %v1022, %v1107
        %v1109 = vmul.f32 %v1104, %v1108
        %v1110 = vadd.f32 %v1107, %v1109
        %s1111 = scalar_lea.vmem [#allocation3], 24
        %1112 = vst [vmem:[%s1111] sm:$0xff] %v1110
        %v1113 = vpack.c.bf16 %v1110, %v1110
        %1114 = vmatpush.bf16.msra.mxu0 %v736
        %1115 = vmatpush.bf16.msra.mxu0 %v733
        %1116 = vmatpush.bf16.msra.mxu0 %v730
        %1117 = vmatpush.bf16.msra.mxu0 %v727
        %1118 = vmatpush.bf16.msra.mxu0 %v724
        %1119 = vmatpush.bf16.msra.mxu0 %v721
        %1120 = vmatpush.bf16.msra.mxu0 %v718
        %1121 = vmatpush.bf16.msra.mxu0 %v715
        %1122 = vmatmul.bf16.gmra.mxu0 %v1113
        %v1123 = vpop.f32.mrf.mxu0
        %v1124 = vadd.f32 0.0, %v1123
        %v1125 = vpop.f32.mrf.mxu0
        %1126 = vdwg.mxu0
        %1127 = vmatpush.bf16.msra.mxu0 %v737
        %1128 = vmatpush.bf16.msra.mxu0 %v734
        %1129 = vmatpush.bf16.msra.mxu0 %v731
        %1130 = vmatpush.bf16.msra.mxu0 %v728
        %1131 = vmatpush.bf16.msra.mxu0 %v725
        %1132 = vmatpush.bf16.msra.mxu0 %v722
        %1133 = vmatpush.bf16.msra.mxu0 %v719
        %1134 = vmatpush.bf16.msra.mxu0 %v716
        %1135 = vmatmul.bf16.gmra.mxu0 %v1113
        %v1136 = vpop.f32.mrf.mxu0
        %v1137 = vadd.f32 0.0, %v1136
        %v1138 = vpop.f32.mrf.mxu0
        %1139 = vdwg.mxu0
        %1140 = vmatpush.bf16.msra.mxu0 %v738
        %1141 = vmatpush.bf16.msra.mxu0 %v735
        %1142 = vmatpush.bf16.msra.mxu0 %v732
        %1143 = vmatpush.bf16.msra.mxu0 %v729
        %1144 = vmatpush.bf16.msra.mxu0 %v726
        %1145 = vmatpush.bf16.msra.mxu0 %v723
        %1146 = vmatpush.bf16.msra.mxu0 %v720
        %1147 = vmatpush.bf16.msra.mxu0 %v717
        %1148 = vmatmul.bf16.gmra.mxu0 %v1113
        %v1149 = vpop.f32.mrf.mxu0
        %v1150 = vadd.f32 0.0, %v1149
        %v1151 = vpop.f32.mrf.mxu0
        %1152 = vdwg.mxu0
        %v1153 = vadd.f32 %v534, %v1124
        %v1154 = vxor.u32 %v1153, 2147483648
        %v1155 = vmul.f32 %v1154, 1.442695
        %v1156 = vpow.pop %v1155
        %v1157 = vadd.f32 %v1156, 1.0
        %v1158 = vrcp.pop %v1157
        %v1159 = vmul.f32 %v1157, %v1158
        %v1160 = vsub.f32 1.0, %v1159
        %v1161 = vmul.f32 %v1158, %v1160
        %v1162 = vadd.f32 %v1158, %v1161
        %vm1163 = vweird.f32 %v1157
        %vm1164 = vweird.f32 %v1158
        %vm1165 = vmor %vm1163, %vm1164
        %v1166 = vsel %vm1165, %v1158, %v1162
        %v1167 = vand.u32 2147483647, %v1157
        %vm1168 = vcmp.eq.f32.partialorder %v1167, 8.507059e+37
        %v1169 = vand.u32 %v1157, 2147483648
        %v1170 = vor.u32 1.1754944e-38, %v1169
        %v1171 = vsel %vm1168, %v1170, %v1166
        %v1172 = vmul.f32 1.0, %v1171
        %v1173 = vadd.f32 %v563, %v1137
        %v1174 = vxor.u32 %v1173, 2147483648
        %v1175 = vmul.f32 %v1174, 1.442695
        %v1176 = vpow.pop %v1175
        %v1177 = vadd.f32 %v1176, 1.0
        %v1178 = vrcp.pop %v1177
        %v1179 = vmul.f32 %v1177, %v1178
        %v1180 = vsub.f32 1.0, %v1179
        %v1181 = vmul.f32 %v1178, %v1180
        %v1182 = vadd.f32 %v1178, %v1181
        %vm1183 = vweird.f32 %v1177
        %vm1184 = vweird.f32 %v1178
        %vm1185 = vmor %vm1183, %vm1184
        %v1186 = vsel %vm1185, %v1178, %v1182
        %v1187 = vand.u32 2147483647, %v1177
        %vm1188 = vcmp.eq.f32.partialorder %v1187, 8.507059e+37
        %v1189 = vand.u32 %v1177, 2147483648
        %v1190 = vor.u32 1.1754944e-38, %v1189
        %v1191 = vsel %vm1188, %v1190, %v1186
        %v1192 = vmul.f32 1.0, %v1191
        %v1193 = vmul.f32 %v1172, %v1150
        %v1194 = vadd.f32 %v592, %v1193
        %v1195 = vtanh.pop %v1194
        %v1196 = vsub.f32 %v1110, %v1195
        %v1197 = vmul.f32 %v1192, %v1196
        %v1198 = vadd.f32 %v1195, %v1197
        %s1199 = scalar_lea.vmem [#allocation3], 32
        %1200 = vst [vmem:[%s1199] sm:$0xff] %v1198
        %v1201 = vpack.c.bf16 %v1198, %v1198
        %1202 = vmatpush.bf16.msra.mxu0 %v736
        %1203 = vmatpush.bf16.msra.mxu0 %v733
        %1204 = vmatpush.bf16.msra.mxu0 %v730
        %1205 = vmatpush.bf16.msra.mxu0 %v727
        %1206 = vmatpush.bf16.msra.mxu0 %v724
        %1207 = vmatpush.bf16.msra.mxu0 %v721
        %1208 = vmatpush.bf16.msra.mxu0 %v718
        %1209 = vmatpush.bf16.msra.mxu0 %v715
        %1210 = vmatmul.bf16.gmra.mxu0 %v1201
        %v1211 = vpop.f32.mrf.mxu0
        %v1212 = vadd.f32 0.0, %v1211
        %v1213 = vpop.f32.mrf.mxu0
        %1214 = vdwg.mxu0
        %1215 = vmatpush.bf16.msra.mxu0 %v737
        %1216 = vmatpush.bf16.msra.mxu0 %v734
        %1217 = vmatpush.bf16.msra.mxu0 %v731
        %1218 = vmatpush.bf16.msra.mxu0 %v728
        %1219 = vmatpush.bf16.msra.mxu0 %v725
        %1220 = vmatpush.bf16.msra.mxu0 %v722
        %1221 = vmatpush.bf16.msra.mxu0 %v719
        %1222 = vmatpush.bf16.msra.mxu0 %v716
        %1223 = vmatmul.bf16.gmra.mxu0 %v1201
        %v1224 = vpop.f32.mrf.mxu0
        %v1225 = vadd.f32 0.0, %v1224
        %v1226 = vpop.f32.mrf.mxu0
        %1227 = vdwg.mxu0
        %1228 = vmatpush.bf16.msra.mxu0 %v738
        %1229 = vmatpush.bf16.msra.mxu0 %v735
        %1230 = vmatpush.bf16.msra.mxu0 %v732
        %1231 = vmatpush.bf16.msra.mxu0 %v729
        %1232 = vmatpush.bf16.msra.mxu0 %v726
        %1233 = vmatpush.bf16.msra.mxu0 %v723
        %1234 = vmatpush.bf16.msra.mxu0 %v720
        %1235 = vmatpush.bf16.msra.mxu0 %v717
        %1236 = vmatmul.bf16.gmra.mxu0 %v1201
        %v1237 = vpop.f32.mrf.mxu0
        %v1238 = vadd.f32 0.0, %v1237
        %v1239 = vpop.f32.mrf.mxu0
        %1240 = vdwg.mxu0
        %v1241 = vadd.f32 %v536, %v1212
        %v1242 = vxor.u32 %v1241, 2147483648
        %v1243 = vmul.f32 %v1242, 1.442695
        %v1244 = vpow.pop %v1243
        %v1245 = vadd.f32 %v1244, 1.0
        %v1246 = vrcp.pop %v1245
        %v1247 = vmul.f32 %v1245, %v1246
        %v1248 = vsub.f32 1.0, %v1247
        %v1249 = vmul.f32 %v1246, %v1248
        %v1250 = vadd.f32 %v1246, %v1249
        %vm1251 = vweird.f32 %v1245
        %vm1252 = vweird.f32 %v1246
        %vm1253 = vmor %vm1251, %vm1252
        %v1254 = vsel %vm1253, %v1246, %v1250
        %v1255 = vand.u32 2147483647, %v1245
        %vm1256 = vcmp.eq.f32.partialorder %v1255, 8.507059e+37
        %v1257 = vand.u32 %v1245, 2147483648
        %v1258 = vor.u32 1.1754944e-38, %v1257
        %v1259 = vsel %vm1256, %v1258, %v1254
        %v1260 = vmul.f32 1.0, %v1259
        %v1261 = vadd.f32 %v565, %v1225
        %v1262 = vxor.u32 %v1261, 2147483648
        %v1263 = vmul.f32 %v1262, 1.442695
        %v1264 = vpow.pop %v1263
        %v1265 = vadd.f32 %v1264, 1.0
        %v1266 = vrcp.pop %v1265
        %v1267 = vmul.f32 %v1265, %v1266
        %v1268 = vsub.f32 1.0, %v1267
        %v1269 = vmul.f32 %v1266, %v1268
        %v1270 = vadd.f32 %v1266, %v1269
        %vm1271 = vweird.f32 %v1265
        %vm1272 = vweird.f32 %v1266
        %vm1273 = vmor %vm1271, %vm1272
        %v1274 = vsel %vm1273, %v1266, %v1270
        %v1275 = vand.u32 2147483647, %v1265
        %vm1276 = vcmp.eq.f32.partialorder %v1275, 8.507059e+37
        %v1277 = vand.u32 %v1265, 2147483648
        %v1278 = vor.u32 1.1754944e-38, %v1277
        %v1279 = vsel %vm1276, %v1278, %v1274
        %v1280 = vmul.f32 1.0, %v1279
        %v1281 = vmul.f32 %v1260, %v1238
        %v1282 = vadd.f32 %v594, %v1281
        %v1283 = vtanh.pop %v1282
        %v1284 = vsub.f32 %v1198, %v1283
        %v1285 = vmul.f32 %v1280, %v1284
        %v1286 = vadd.f32 %v1283, %v1285
        %s1287 = scalar_lea.vmem [#allocation3], 40
        %1288 = vst [vmem:[%s1287] sm:$0xff] %v1286
        %v1289 = vpack.c.bf16 %v1286, %v1286
        %1290 = vmatpush.bf16.msra.mxu0 %v736
        %1291 = vmatpush.bf16.msra.mxu0 %v733
        %1292 = vmatpush.bf16.msra.mxu0 %v730
        %1293 = vmatpush.bf16.msra.mxu0 %v727
        %1294 = vmatpush.bf16.msra.mxu0 %v724
        %1295 = vmatpush.bf16.msra.mxu0 %v721
        %1296 = vmatpush.bf16.msra.mxu0 %v718
        %1297 = vmatpush.bf16.msra.mxu0 %v715
        %1298 = vmatmul.bf16.gmra.mxu0 %v1289
        %v1299 = vpop.f32.mrf.mxu0
        %v1300 = vadd.f32 0.0, %v1299
        %v1301 = vpop.f32.mrf.mxu0
        %1302 = vdwg.mxu0
        %1303 = vmatpush.bf16.msra.mxu0 %v737
        %1304 = vmatpush.bf16.msra.mxu0 %v734
        %1305 = vmatpush.bf16.msra.mxu0 %v731
        %1306 = vmatpush.bf16.msra.mxu0 %v728
        %1307 = vmatpush.bf16.msra.mxu0 %v725
        %1308 = vmatpush.bf16.msra.mxu0 %v722
        %1309 = vmatpush.bf16.msra.mxu0 %v719
        %1310 = vmatpush.bf16.msra.mxu0 %v716
        %1311 = vmatmul.bf16.gmra.mxu0 %v1289
        %v1312 = vpop.f32.mrf.mxu0
        %v1313 = vadd.f32 0.0, %v1312
        %v1314 = vpop.f32.mrf.mxu0
        %1315 = vdwg.mxu0
        %1316 = vmatpush.bf16.msra.mxu0 %v738
        %1317 = vmatpush.bf16.msra.mxu0 %v735
        %1318 = vmatpush.bf16.msra.mxu0 %v732
        %1319 = vmatpush.bf16.msra.mxu0 %v729
        %1320 = vmatpush.bf16.msra.mxu0 %v726
        %1321 = vmatpush.bf16.msra.mxu0 %v723
        %1322 = vmatpush.bf16.msra.mxu0 %v720
        %1323 = vmatpush.bf16.msra.mxu0 %v717
        %1324 = vmatmul.bf16.gmra.mxu0 %v1289
        %v1325 = vpop.f32.mrf.mxu0
        %v1326 = vadd.f32 0.0, %v1325
        %v1327 = vpop.f32.mrf.mxu0
        %1328 = vdwg.mxu0
        %v1329 = vadd.f32 %v539, %v1300
        %v1330 = vxor.u32 %v1329, 2147483648
        %v1331 = vmul.f32 %v1330, 1.442695
        %v1332 = vpow.pop %v1331
        %v1333 = vadd.f32 %v1332, 1.0
        %v1334 = vrcp.pop %v1333
        %v1335 = vmul.f32 %v1333, %v1334
        %v1336 = vsub.f32 1.0, %v1335
        %v1337 = vmul.f32 %v1334, %v1336
        %v1338 = vadd.f32 %v1334, %v1337
        %vm1339 = vweird.f32 %v1333
        %vm1340 = vweird.f32 %v1334
        %vm1341 = vmor %vm1339, %vm1340
        %v1342 = vsel %vm1341, %v1334, %v1338
        %v1343 = vand.u32 2147483647, %v1333
        %vm1344 = vcmp.eq.f32.partialorder %v1343, 8.507059e+37
        %v1345 = vand.u32 %v1333, 2147483648
        %v1346 = vor.u32 1.1754944e-38, %v1345
        %v1347 = vsel %vm1344, %v1346, %v1342
        %v1348 = vmul.f32 1.0, %v1347
        %v1349 = vadd.f32 %v568, %v1313
        %v1350 = vxor.u32 %v1349, 2147483648
        %v1351 = vmul.f32 %v1350, 1.442695
        %v1352 = vpow.pop %v1351
        %v1353 = vadd.f32 %v1352, 1.0
        %v1354 = vrcp.pop %v1353
        %v1355 = vmul.f32 %v1353, %v1354
        %v1356 = vsub.f32 1.0, %v1355
        %v1357 = vmul.f32 %v1354, %v1356
        %v1358 = vadd.f32 %v1354, %v1357
        %vm1359 = vweird.f32 %v1353
        %vm1360 = vweird.f32 %v1354
        %vm1361 = vmor %vm1359, %vm1360
        %v1362 = vsel %vm1361, %v1354, %v1358
        %v1363 = vand.u32 2147483647, %v1353
        %vm1364 = vcmp.eq.f32.partialorder %v1363, 8.507059e+37
        %v1365 = vand.u32 %v1353, 2147483648
        %v1366 = vor.u32 1.1754944e-38, %v1365
        %v1367 = vsel %vm1364, %v1366, %v1362
        %v1368 = vmul.f32 1.0, %v1367
        %v1369 = vmul.f32 %v1348, %v1326
        %v1370 = vadd.f32 %v597, %v1369
        %v1371 = vtanh.pop %v1370
        %v1372 = vsub.f32 %v1286, %v1371
        %v1373 = vmul.f32 %v1368, %v1372
        %v1374 = vadd.f32 %v1371, %v1373
        %s1375 = scalar_lea.vmem [#allocation3], 48
        %1376 = vst [vmem:[%s1375] sm:$0xff] %v1374
        %v1377 = vpack.c.bf16 %v1374, %v1374
        %1378 = vmatpush.bf16.msra.mxu0 %v736
        %1379 = vmatpush.bf16.msra.mxu0 %v733
        %1380 = vmatpush.bf16.msra.mxu0 %v730
        %1381 = vmatpush.bf16.msra.mxu0 %v727
        %1382 = vmatpush.bf16.msra.mxu0 %v724
        %1383 = vmatpush.bf16.msra.mxu0 %v721
        %1384 = vmatpush.bf16.msra.mxu0 %v718
        %1385 = vmatpush.bf16.msra.mxu0 %v715
        %1386 = vmatmul.bf16.gmra.mxu0 %v1377
        %v1387 = vpop.f32.mrf.mxu0
        %v1388 = vadd.f32 0.0, %v1387
        %v1389 = vpop.f32.mrf.mxu0
        %1390 = vdwg.mxu0
        %1391 = vmatpush.bf16.msra.mxu0 %v737
        %1392 = vmatpush.bf16.msra.mxu0 %v734
        %1393 = vmatpush.bf16.msra.mxu0 %v731
        %1394 = vmatpush.bf16.msra.mxu0 %v728
        %1395 = vmatpush.bf16.msra.mxu0 %v725
        %1396 = vmatpush.bf16.msra.mxu0 %v722
        %1397 = vmatpush.bf16.msra.mxu0 %v719
        %1398 = vmatpush.bf16.msra.mxu0 %v716
        %1399 = vmatmul.bf16.gmra.mxu0 %v1377
        %v1400 = vpop.f32.mrf.mxu0
        %v1401 = vadd.f32 0.0, %v1400
        %v1402 = vpop.f32.mrf.mxu0
        %1403 = vdwg.mxu0
        %1404 = vmatpush.bf16.msra.mxu0 %v738
        %1405 = vmatpush.bf16.msra.mxu0 %v735
        %1406 = vmatpush.bf16.msra.mxu0 %v732
        %1407 = vmatpush.bf16.msra.mxu0 %v729
        %1408 = vmatpush.bf16.msra.mxu0 %v726
        %1409 = vmatpush.bf16.msra.mxu0 %v723
        %1410 = vmatpush.bf16.msra.mxu0 %v720
        %1411 = vmatpush.bf16.msra.mxu0 %v717
        %1412 = vmatmul.bf16.gmra.mxu0 %v1377
        %v1413 = vpop.f32.mrf.mxu0
        %v1414 = vadd.f32 0.0, %v1413
        %v1415 = vpop.f32.mrf.mxu0
        %1416 = vdwg.mxu0
        %v1417 = vadd.f32 %v541, %v1388
        %v1418 = vxor.u32 %v1417, 2147483648
        %v1419 = vmul.f32 %v1418, 1.442695
        %v1420 = vpow.pop %v1419
        %v1421 = vadd.f32 %v1420, 1.0
        %v1422 = vrcp.pop %v1421
        %v1423 = vmul.f32 %v1421, %v1422
        %v1424 = vsub.f32 1.0, %v1423
        %v1425 = vmul.f32 %v1422, %v1424
        %v1426 = vadd.f32 %v1422, %v1425
        %vm1427 = vweird.f32 %v1421
        %vm1428 = vweird.f32 %v1422
        %vm1429 = vmor %vm1427, %vm1428
        %v1430 = vsel %vm1429, %v1422, %v1426
        %v1431 = vand.u32 2147483647, %v1421
        %vm1432 = vcmp.eq.f32.partialorder %v1431, 8.507059e+37
        %v1433 = vand.u32 %v1421, 2147483648
        %v1434 = vor.u32 1.1754944e-38, %v1433
        %v1435 = vsel %vm1432, %v1434, %v1430
        %v1436 = vmul.f32 1.0, %v1435
        %v1437 = vadd.f32 %v570, %v1401
        %v1438 = vxor.u32 %v1437, 2147483648
        %v1439 = vmul.f32 %v1438, 1.442695
        %v1440 = vpow.pop %v1439
        %v1441 = vadd.f32 %v1440, 1.0
        %v1442 = vrcp.pop %v1441
        %v1443 = vmul.f32 %v1441, %v1442
        %v1444 = vsub.f32 1.0, %v1443
        %v1445 = vmul.f32 %v1442, %v1444
        %v1446 = vadd.f32 %v1442, %v1445
        %vm1447 = vweird.f32 %v1441
        %vm1448 = vweird.f32 %v1442
        %vm1449 = vmor %vm1447, %vm1448
        %v1450 = vsel %vm1449, %v1442, %v1446
        %v1451 = vand.u32 2147483647, %v1441
        %vm1452 = vcmp.eq.f32.partialorder %v1451, 8.507059e+37
        %v1453 = vand.u32 %v1441, 2147483648
        %v1454 = vor.u32 1.1754944e-38, %v1453
        %v1455 = vsel %vm1452, %v1454, %v1450
        %v1456 = vmul.f32 1.0, %v1455
        %v1457 = vmul.f32 %v1436, %v1414
        %v1458 = vadd.f32 %v599, %v1457
        %v1459 = vtanh.pop %v1458
        %v1460 = vsub.f32 %v1374, %v1459
        %v1461 = vmul.f32 %v1456, %v1460
        %v1462 = vadd.f32 %v1459, %v1461
        %s1463 = scalar_lea.vmem [#allocation3], 56
        %1464 = vst [vmem:[%s1463] sm:$0xff] %v1462
        %1465 = vst [vmem:[#allocation2] sm:$0xff] %v1462
        %v1466 = vld [vmem:[#allocation3] sm:$0xff]
        %v1467 = vld [vmem:[#allocation3 + $0x8] sm:$0xff]
        %v1468 = vld [vmem:[#allocation3 + $0x10] sm:$0xff]
        %v1469 = vld [vmem:[#allocation3 + $0x18] sm:$0xff]
        %v1470 = vld [vmem:[#allocation3 + $0x20] sm:$0xff]
        %v1471 = vld [vmem:[#allocation3 + $0x28] sm:$0xff]
        %v1472 = vld [vmem:[#allocation3 + $0x30] sm:$0xff]
        %v1473 = vld [vmem:[#allocation3 + $0x38] sm:$0xff]
        %v1474 = vpack.c.bf16 %v1467, %v1466
        %v1475 = vpack.c.bf16 %v1469, %v1468
        %v1476 = vpack.c.bf16 %v1471, %v1470
        %v1477 = vpack.c.bf16 %v1473, %v1472
        %v1478 = vld [vmem:[%s3] sm:$0xf]
        %v1479 = vld [vmem:[%s3 + $0x4] sm:$0xf]
        %v1480 = vld [vmem:[%s3 + $0x8] sm:$0xf]
        %v1481 = vld [vmem:[%s3 + $0xc] sm:$0xf]
        %v1482 = vld [vmem:[%s3 + $0x10] sm:$0xf]
        %v1483 = vld [vmem:[%s3 + $0x14] sm:$0xf]
        %v1484 = vld [vmem:[%s3 + $0x18] sm:$0xf]
        %v1485 = vld [vmem:[%s3 + $0x1c] sm:$0xf]
        %v1486 = vld [vmem:[%s3 + $0x20] sm:$0xf]
        %v1487 = vld [vmem:[%s3 + $0x24] sm:$0xf]
        %v1488 = vld [vmem:[%s3 + $0x28] sm:$0xf]
        %v1489 = vld [vmem:[%s3 + $0x2c] sm:$0xf]
        %v1490 = vld [vmem:[%s3 + $0x30] sm:$0xf]
        %v1491 = vld [vmem:[%s3 + $0x34] sm:$0xf]
        %v1492 = vld [vmem:[%s3 + $0x38] sm:$0xf]
        %v1493 = vld [vmem:[%s3 + $0x3c] sm:$0xf]
        %v1510 = vunpack.c.l.b16 %v1478
        %v1511 = vunpack.c.l.b16 %v1479
        %v1512 = vunpack.c.l.b16 %v1480
        %v1513 = vunpack.c.l.b16 %v1481
        %v1514 = vunpack.c.l.b16 %v1482
        %v1515 = vunpack.c.l.b16 %v1483
        %v1516 = vunpack.c.l.b16 %v1484
        %v1517 = vunpack.c.l.b16 %v1485
        %v1518 = vunpack.c.l.b16 %v1486
        %v1519 = vunpack.c.l.b16 %v1487
        %v1520 = vunpack.c.l.b16 %v1488
        %v1521 = vunpack.c.l.b16 %v1489
        %v1522 = vunpack.c.l.b16 %v1490
        %v1523 = vunpack.c.l.b16 %v1491
        %v1524 = vunpack.c.l.b16 %v1492
        %v1525 = vunpack.c.l.b16 %v1493
        %v1526 = vpack.c.b16 %v1511, %v1510
        %v1527 = vpack.c.b16 %v1513, %v1512
        %v1528 = vpack.c.b16 %v1515, %v1514
        %v1529 = vpack.c.b16 %v1517, %v1516
        %v1530 = vpack.c.b16 %v1519, %v1518
        %v1531 = vpack.c.b16 %v1521, %v1520
        %v1532 = vpack.c.b16 %v1523, %v1522
        %v1533 = vpack.c.b16 %v1525, %v1524
        %1542 = vmatpush.bf16.msra.mxu0 %v1533
        %1543 = vmatpush.bf16.msra.mxu0 %v1532
        %1544 = vmatpush.bf16.msra.mxu0 %v1531
        %1545 = vmatpush.bf16.msra.mxu0 %v1530
        %1546 = vmatpush.bf16.msra.mxu0 %v1529
        %1547 = vmatpush.bf16.msra.mxu0 %v1528
        %1548 = vmatpush.bf16.msra.mxu0 %v1527
        %1549 = vmatpush.bf16.msra.mxu0 %v1526
        %1550 = vmatmul.bf16.gmra.mxu0 %v1474
        %v1551 = vpop.f32.mrf.mxu0
        %v1552 = vadd.f32 0.0, %v1551
        %v1553 = vpop.f32.mrf.mxu0
        %v1554 = vadd.f32 0.0, %v1553
        %1555 = vmatmul.bf16.gmra.mxu0 %v1475
        %v1556 = vpop.f32.mrf.mxu0
        %v1557 = vadd.f32 0.0, %v1556
        %v1558 = vpop.f32.mrf.mxu0
        %v1559 = vadd.f32 0.0, %v1558
        %1560 = vmatmul.bf16.gmra.mxu0 %v1476
        %v1561 = vpop.f32.mrf.mxu0
        %v1562 = vadd.f32 0.0, %v1561
        %v1563 = vpop.f32.mrf.mxu0
        %v1564 = vadd.f32 0.0, %v1563
        %1565 = vmatmul.bf16.gmra.mxu0 %v1477
        %v1566 = vpop.f32.mrf.mxu0
        %v1567 = vadd.f32 0.0, %v1566
        %v1568 = vpop.f32.mrf.mxu0
        %v1569 = vadd.f32 0.0, %v1568
        %1570 = vdwg.mxu0
        %v1571 = vrot.slane %v1557, 4
        %vm1572 = vcmask 1047556
        %v1573 = vsel %vm1572, %v1571, %v1552
        %v1574 = vrot.slane %v1552, 4
        %v1575 = vsel %vm1572, %v1557, %v1574
        %v1577 = vunpack.c.l.s4 1983009808
        %v1578 = vunpack.c.0.s8 %v1577
        %v1579 = vperm.slane %v1573, %v1578
        %v1581 = vunpack.c.l.s4 1983009808
        %v1582 = vunpack.c.0.s8 %v1581
        %v1583 = vperm.slane %v1575, %v1582
        %v1584 = vrot.slane %v1559, 4
        %v1585 = vsel %vm1572, %v1584, %v1554
        %v1586 = vrot.slane %v1554, 4
        %v1587 = vsel %vm1572, %v1559, %v1586
        %v1589 = vunpack.c.l.s4 1983009808
        %v1590 = vunpack.c.0.s8 %v1589
        %v1591 = vperm.slane %v1585, %v1590
        %v1593 = vunpack.c.l.s4 1983009808
        %v1594 = vunpack.c.0.s8 %v1593
        %v1595 = vperm.slane %v1587, %v1594
        %v1596 = vrot.slane %v1567, 4
        %v1597 = vsel %vm1572, %v1596, %v1562
        %v1598 = vrot.slane %v1562, 4
        %v1599 = vsel %vm1572, %v1567, %v1598
        %v1601 = vunpack.c.l.s4 1983009808
        %v1602 = vunpack.c.0.s8 %v1601
        %v1603 = vperm.slane %v1597, %v1602
        %v1605 = vunpack.c.l.s4 1983009808
        %v1606 = vunpack.c.0.s8 %v1605
        %v1607 = vperm.slane %v1599, %v1606
        %v1608 = vrot.slane %v1569, 4
        %v1609 = vsel %vm1572, %v1608, %v1564
        %v1610 = vrot.slane %v1564, 4
        %v1611 = vsel %vm1572, %v1569, %v1610
        %v1613 = vunpack.c.l.s4 1983009808
        %v1614 = vunpack.c.0.s8 %v1613
        %v1615 = vperm.slane %v1609, %v1614
        %v1617 = vunpack.c.l.s4 1983009808
        %v1618 = vunpack.c.0.s8 %v1617
        %v1619 = vperm.slane %v1611, %v1618
        %v1620 = vrot.slane %v1591, 4
        %v1621 = vsel %vm1572, %v1620, %v1579
        %v1622 = vrot.slane %v1579, 4
        %v1623 = vsel %vm1572, %v1591, %v1622
        %v1625 = vunpack.c.l.s4 1934713408
        %v1626 = vunpack.c.0.s8 %v1625
        %v1627 = vperm.slane %v1621, %v1626
        %v1629 = vunpack.c.l.s4 1934713408
        %v1630 = vunpack.c.0.s8 %v1629
        %v1631 = vperm.slane %v1623, %v1630
        %v1632 = vrot.slane %v1595, 4
        %v1633 = vsel %vm1572, %v1632, %v1583
        %v1634 = vrot.slane %v1583, 4
        %v1635 = vsel %vm1572, %v1595, %v1634
        %v1637 = vunpack.c.l.s4 1934713408
        %v1638 = vunpack.c.0.s8 %v1637
        %v1639 = vperm.slane %v1633, %v1638
        %v1641 = vunpack.c.l.s4 1934713408
        %v1642 = vunpack.c.0.s8 %v1641
        %v1643 = vperm.slane %v1635, %v1642
        %v1644 = vrot.slane %v1615, 4
        %v1645 = vsel %vm1572, %v1644, %v1603
        %v1646 = vrot.slane %v1603, 4
        %v1647 = vsel %vm1572, %v1615, %v1646
        %v1649 = vunpack.c.l.s4 1934713408
        %v1650 = vunpack.c.0.s8 %v1649
        %v1651 = vperm.slane %v1645, %v1650
        %v1653 = vunpack.c.l.s4 1934713408
        %v1654 = vunpack.c.0.s8 %v1653
        %v1655 = vperm.slane %v1647, %v1654
        %v1656 = vrot.slane %v1619, 4
        %v1657 = vsel %vm1572, %v1656, %v1607
        %v1658 = vrot.slane %v1607, 4
        %v1659 = vsel %vm1572, %v1619, %v1658
        %v1661 = vunpack.c.l.s4 1934713408
        %v1662 = vunpack.c.0.s8 %v1661
        %v1663 = vperm.slane %v1657, %v1662
        %v1665 = vunpack.c.l.s4 1934713408
        %v1666 = vunpack.c.0.s8 %v1665
        %v1667 = vperm.slane %v1659, %v1666
        %v1668 = vrot.slane %v1651, 4
        %v1669 = vsel %vm1572, %v1668, %v1627
        %v1670 = vrot.slane %v1627, 4
        %v1671 = vsel %vm1572, %v1651, %v1670
        %v1672 = vrot.slane %v1655, 4
        %v1673 = vsel %vm1572, %v1672, %v1631
        %v1674 = vrot.slane %v1631, 4
        %v1675 = vsel %vm1572, %v1655, %v1674
        %v1676 = vrot.slane %v1663, 4
        %v1677 = vsel %vm1572, %v1676, %v1639
        %v1678 = vrot.slane %v1639, 4
        %v1679 = vsel %vm1572, %v1663, %v1678
        %v1680 = vrot.slane %v1667, 4
        %v1681 = vsel %vm1572, %v1680, %v1643
        %v1682 = vrot.slane %v1643, 4
        %v1683 = vsel %vm1572, %v1667, %v1682
        %1684 = vst [vmem:[%s371] sm:$0xff] %v1669
        %1685 = vst [vmem:[%s371 + $0x8] sm:$0xff] %v1671
        %1686 = vst [vmem:[%s371 + $0x10] sm:$0xff] %v1673
        %1687 = vst [vmem:[%s371 + $0x18] sm:$0xff] %v1675
        %1688 = vst [vmem:[%s371 + $0x20] sm:$0xff] %v1677
        %1689 = vst [vmem:[%s371 + $0x28] sm:$0xff] %v1679
        %1690 = vst [vmem:[%s371 + $0x30] sm:$0xff] %v1681
        %1691 = vst [vmem:[%s371 + $0x38] sm:$0xff] %v1683
        %p1692 = scmp.eq.s32.totalorder %s28, 1
        // Predicated region
        $region90: #{tpu_custom_call.1} parent=76 // pred_check
          %p1693 = pneg %p1692
        $region91: #{tpu_custom_call.1} parent=76 // pred_check_branch
          %1695 = sbr.rel (%p1693) target = $region93
        $region92: #{tpu_custom_call.1} parent=76 // pred_region
          %v1696 = vld [vmem:[#allocation2] sm:$0xff]
          %1697 = vst [vmem:[#allocation9] sm:$0xff] %v1696
        $region93: #{tpu_custom_call.1} parent=76 // pred_fallthru
          _
        %s1698 = sand.u32 %s162, 1
        %s1699 = scalar_lea.sflag [#allocation7], %s1698
        %s1700 = sand.u32 %s162, 1
        %s1701 = smul.addr %s1700, 64
        %s1702 = scalar_lea.vmem [#allocation8], %s1701
        // Predicated region
        $region94: #{tpu_custom_call.1} parent=76 // pred_check
          %p1703 = pneg %p172
        $region95: #{tpu_custom_call.1} parent=76 // pred_check_branch
          %1705 = sbr.rel (%p1703) target = $region97
        $region96: #{tpu_custom_call.1} parent=76 // pred_region
          %s1706 = smul.u32 8, %s27
          %1708 = vsyncadd %s1699, 0
          %s1709 = smul.addr %s1706, 2
          %s1710 = sadd.s32 %s28, %s1709
          %s1711 = smul.addr %s1710, 8
          %s1712 = scalar_lea.hbm %s5, %s1711
          %s1713 = sshll.u32 %s1702, 4
          %s1714 = int_to_ptr.vmem [resolvable:$true] %s1713
          %s1715 = sshll.u32 %s1712, 4
          %s1716 = int_to_ptr.hbm [resolvable:$true] %s1715
          %1721 = dma.vmem_to_hbm [thread:$0]  %s1714, 1024, %s1716, %s1699, 128, 256, 8
        $region97: #{tpu_custom_call.1} parent=76 // pred_fallthru
          _
        // Predicated region
        $region98: #{tpu_custom_call.1} parent=76 // pred_check
          %p1722 = pneg %p198
        $region99: #{tpu_custom_call.1} parent=76 // pred_check_branch
          %1724 = sbr.rel (%p1722) target = $region101
        $region100: #{tpu_custom_call.1} parent=76 // pred_region
          %1726 = vsyncadd [#allocation10], 0
          %s1727 = smul.addr %s27, 8
          %s1728 = scalar_lea.hbm %s6, %s1727
          %s1730 = sshll.u32 [#allocation9], 4
          %s1731 = int_to_ptr.vmem [resolvable:$true] %s1730
          %s1732 = sshll.u32 %s1728, 4
          %s1733 = int_to_ptr.hbm [resolvable:$true] %s1732
          %1735 = dma.vmem_to_hbm [thread:$0]  %s1731, 128, %s1733, [#allocation10]
        $region101: #{tpu_custom_call.1} parent=76 // pred_fallthru
          _
        // Predicated region
        $region102: #{tpu_custom_call.1} parent=76 // pred_check
          %p1736 = pneg %p198
        $region103: #{tpu_custom_call.1} parent=76 // pred_check_branch
          %1738 = sbr.rel (%p1736) target = $region105
        $region104: #{tpu_custom_call.1} parent=76 // pred_region
          %1740 = dma.done [#allocation10], 128
        $region105: #{tpu_custom_call.1} parent=76 // pred_fallthru
          _
      $region77: #{tpu_custom_call.1} parent=5 // pred_fallthru
        _
      %p1741 = scmp.le.s32.totalorder 2, %s18
      // Predicated region
      $region106: #{tpu_custom_call.1} parent=5 // pred_check
        %p1742 = pneg %p1741
      $region107: #{tpu_custom_call.1} parent=5 // pred_check_branch
        %1744 = sbr.rel (%p1742) target = $region109
      $region108: #{tpu_custom_call.1} parent=5 // pred_region
        %s1745 = ssub.s32 %s18, 2
        // Predicated region
        $region110: #{tpu_custom_call.1} parent=108 // pred_check
          %p1746 = pneg %p178
        $region111: #{tpu_custom_call.1} parent=108 // pred_check_branch
          %1748 = sbr.rel (%p1746) target = $region113
        $region112: #{tpu_custom_call.1} parent=108 // pred_region
          %s1749 = sand.u32 %s163, 1
          %s1750 = scalar_lea.sflag [#allocation7], %s1749
          %s1751 = sand.u32 %s163, 1
          %s1752 = smul.addr %s1751, 64
          %s1753 = scalar_lea.vmem [#allocation8], %s1752
          %1755 = dma.done %s1750, 1024
        $region113: #{tpu_custom_call.1} parent=108 // pred_fallthru
          _
      $region109: #{tpu_custom_call.1} parent=5 // pred_fallthru
        _
    $region6: #{tpu_custom_call.1} parent=1 // loop_footer
      %s22 = sadd.s32 1, %s18
    $region7: #{tpu_custom_call.1} parent=1 // loop_footer_branch
      %17 = sbr.rel target = $region3
    $region8: #{tpu_custom_call.1} parent=1 // loop_exit
      _
    %1756 = vsyncpa [#allocation6], 1
    %s1757 = scalar_lea.sflag [#allocation6], 1
    %1758 = vsyncpa %s1757, 1
    %1759 = vsyncpa [#allocation7], 1
    %s1760 = scalar_lea.sflag [#allocation7], 1
    %1761 = vsyncpa %s1760, 1
    %1762 = vsyncpa [#allocation10], 1

// kernel: tpu_custom_call.1
$region0: #{tpu_custom_call.1}
  #allocation0 [shape = 'u32[]', space=smem, size = 0x4, offset = 0x4, fixed_abs, tag = 'smem constant byte address 0x4 - core index']
  #allocation1 [shape = 'u32[72,128]{1,0:T(1,128)}', space=vmem, size = 0x9000, scoped, tag = 'internal scratch']
  #allocation2 [shape = 'f32[8,128]{1,0:T(8,128)}', space=vmem, size = 0x1000, scoped, tag = 'scratch operand']
  #allocation3 [shape = 'f32[8,8,128]{2,1,0:T(8,128)}', space=vmem, size = 0x8000, scoped, tag = 'scratch operand']
  %s0 = inlined_call_operand.vmem [shape: bf16[8,16,4], index: 0, kind: input, shape index: {}]
  %s1 = inlined_call_operand.vmem [shape: bf16[4,384], index: 1, kind: input, shape index: {}]
  %s2 = inlined_call_operand.hbm [shape: bf16[128,384], index: 2, kind: input, shape index: {}]
  %s3 = inlined_call_operand.vmem [shape: bf16[128,128], index: 3, kind: input, shape index: {}]
  %s4 = inlined_call_operand.vmem [shape: f32[8,128], index: 4, kind: input, shape index: {}]
  %s5 = inlined_call_operand.hbm [shape: f32[8,16,128], index: 5, kind: output, shape index: {0}]
  %s6 = inlined_call_operand.hbm [shape: f32[8,128], index: 6, kind: output, shape index: {1}]
  %7 = xla_tuple %s5, %s6
  %s8 = sld [smem:[#allocation0]]
  $region114: #{tpu_custom_call.1} parent=0
    _
  %s10 = ssub.s32 1, %s8
  %s11 = scalar_select 0, %s10, %s8
  $region1: #{tpu_custom_call.1} parent=0
    #allocation4 [shape = 'u8[32768]{0}', space=vmem, size = 0x8000, scoped, tag = 'input window, operand 0']
    #allocation5 [shape = 'u8[98304]{0}', space=vmem, size = 0x18000, scoped, tag = 'input window, operand 2, single buffered']
    #allocation6 [shape = 's32[2]{0}', space=sflag, size = 0x8, scoped, tag = 'scoped memory for tpu_custom_call.1']
    #allocation7 [shape = 's32[2]{0}', space=sflag, size = 0x8, scoped, tag = 'scoped memory for tpu_custom_call.1']
    #allocation8 [shape = 'u8[65536]{0}', space=vmem, size = 0x10000, scoped, tag = 'output window, operand 0']
    #allocation9 [shape = 'u8[4096]{0}', space=vmem, size = 0x1000, scoped, tag = 'output window, operand 1, single buffered']
    #allocation10 [shape = 's32[1]{0}', space=sflag, size = 0x4, scoped, tag = 'scoped memory for tpu_custom_call.1']
    %12 = vsyncpa [#allocation6], 0
    %13 = vsyncpa [#allocation7], 0
    %s14 = scalar_lea.sflag [#allocation7], 1
    %15 = vsyncpa %s14, 0
    %16 = vsyncpa [#allocation10], 0
    loop: start=0, step=1, limit=4
    $region2: #{tpu_custom_call.1} parent=1 // loop_pre_header
      _
    $region3: #{tpu_custom_call.1} parent=1 // loop_header
      %s18 = sphi 0, %s22
      %p19 = scmp.ge.s32.totalorder %s18, 4
      %s25 = sphi 0, %s37
      %s26 = sphi 0, %s33
      %s27 = sphi 0, %s25
      %s28 = sphi 0, %s26
      %s29 = sphi 0, %s27
      %s30 = sphi 0, %s28
      %s42 = sphi 0, %s44
      %s45 = sphi 0, %s42
      %s46 = sphi 0, %s45
      %s62 = sphi 0, %s46
      %s66 = sphi 0, %s66
      %s68 = sphi 0, %s66
      %s69 = sphi 0, %s68
      %s83 = sphi 0, %s69
      %s87 = sphi 0, %s87
      %s89 = sphi 0, %s87
      %s90 = sphi 0, %s89
      %s104 = sphi 0, %s90
      %s108 = sphi 0, %s108
      %s110 = sphi 0, %s108
      %s111 = sphi 0, %s110
      %s125 = sphi 0, %s111
      %s131 = sphi 0, %s133
      %s134 = sphi 0, %s131
      %s135 = sphi 0, %s134
      %s151 = sphi 0, %s135
      %s159 = sphi 0, %s161
      %s162 = sphi 0, %s159
      %s163 = sphi 0, %s162
      %s179 = sphi 0, %s163
      %s185 = sphi 0, %s187
      %s188 = sphi 0, %s185
      %s189 = sphi 0, %s188
      %s205 = sphi 0, %s189
    $region4: #{tpu_custom_call.1} parent=1 // loop_header_branch
      %21 = sbr.rel (%p19) target = $region8
    $region5: #{tpu_custom_call.1} parent=1 // loop_body
      %s23 = ssub.s32 %s18, 1
      %s24 = ssub.s32 %s18, 2
      %s31 = sadd.s32 1, %s26
      %p32 = scmp.ge.s32.totalorder %s31, 2
      %s33 = scalar_select %p32, 0, %s31
      %s34 = sadd.s32 1, %s25
      %s35 = scalar_select %p32, %s34, %s25
      %p36 = scmp.ge.s32.totalorder %s35, 1
      %s37 = scalar_select %p36, 0, %s35
      %s38 = ssub.s32 %s25, %s37
      %s39 = ssub.s32 %s26, %s33
      %s40 = sor.u32 %s38, %s39
      %p41 = scmp.eq.s32.totalorder %s40, 0
      %s43 = sadd.s32 %s42, 1
      %s44 = scalar_select %p41, %s42, %s43
      %p47 = pneg %p41
      %p48 = scmp.eq.s32.totalorder %s18, 1
      %p49 = por %p47, %p48
      %p50 = scmp.ne.s32.totalorder %s42, %s45
      %p51 = scmp.eq.s32.totalorder %s18, 0
      %p52 = por %p50, %p51
      %p53 = scmp.ne.s32.totalorder %s42, %s45
      %p54 = scmp.eq.s32.totalorder %s23, 1
      %p55 = por %p53, %p54
      %p56 = scmp.ne.s32.totalorder %s45, %s46
      %p57 = scmp.eq.s32.totalorder %s23, 0
      %p58 = por %p56, %p57
      %p59 = scmp.ne.s32.totalorder %s45, %s46
      %p60 = scmp.eq.s32.totalorder %s24, 1
      %p61 = por %p59, %p60
      %p63 = scmp.ne.s32.totalorder %s46, %s62
      %p64 = scmp.eq.s32.totalorder %s24, 0
      %p65 = por %p63, %p64
      %s67 = sadd.s32 %s66, 1
      %p70 = scmp.eq.s32.totalorder %s18, 1
      %p71 = scmp.ne.s32.totalorder %s66, %s68
      %p72 = scmp.eq.s32.totalorder %s18, 0
      %p73 = por %p71, %p72
      %p74 = scmp.ne.s32.totalorder %s66, %s68
      %p75 = scmp.eq.s32.totalorder %s23, 1
      %p76 = por %p74, %p75
      %p77 = scmp.ne.s32.totalorder %s68, %s69
      %p78 = scmp.eq.s32.totalorder %s23, 0
      %p79 = por %p77, %p78
      %p80 = scmp.ne.s32.totalorder %s68, %s69
      %p81 = scmp.eq.s32.totalorder %s24, 1
      %p82 = por %p80, %p81
      %p84 = scmp.ne.s32.totalorder %s69, %s83
      %p85 = scmp.eq.s32.totalorder %s24, 0
      %p86 = por %p84, %p85
      %s88 = sadd.s32 %s87, 1
      %p91 = scmp.eq.s32.totalorder %s18, 1
      %p92 = scmp.ne.s32.totalorder %s87, %s89
      %p93 = scmp.eq.s32.totalorder %s18, 0
      %p94 = por %p92, %p93
      %p95 = scmp.ne.s32.totalorder %s87, %s89
      %p96 = scmp.eq.s32.totalorder %s23, 1
      %p97 = por %p95, %p96
      %p98 = scmp.ne.s32.totalorder %s89, %s90
      %p99 = scmp.eq.s32.totalorder %s23, 0
      %p100 = por %p98, %p99
      %p101 = scmp.ne.s32.totalorder %s89, %s90
      %p102 = scmp.eq.s32.totalorder %s24, 1
      %p103 = por %p101, %p102
      %p105 = scmp.ne.s32.totalorder %s90, %s104
      %p106 = scmp.eq.s32.totalorder %s24, 0
      %p107 = por %p105, %p106
      %s109 = sadd.s32 %s108, 1
      %p112 = scmp.eq.s32.totalorder %s18, 1
      %p113 = scmp.ne.s32.totalorder %s108, %s110
      %p114 = scmp.eq.s32.totalorder %s18, 0
      %p115 = por %p113, %p114
      %p116 = scmp.ne.s32.totalorder %s108, %s110
      %p117 = scmp.eq.s32.totalorder %s23, 1
      %p118 = por %p116, %p117
      %p119 = scmp.ne.s32.totalorder %s110, %s111
      %p120 = scmp.eq.s32.totalorder %s23, 0
      %p121 = por %p119, %p120
      %p122 = scmp.ne.s32.totalorder %s110, %s111
      %p123 = scmp.eq.s32.totalorder %s24, 1
      %p124 = por %p122, %p123
      %p126 = scmp.ne.s32.totalorder %s111, %s125
      %p127 = scmp.eq.s32.totalorder %s24, 0
      %p128 = por %p126, %p127
      %s129 = ssub.s32 %s25, %s37
      %p130 = scmp.eq.s32.totalorder %s129, 0
      %s132 = sadd.s32 %s131, 1
      %s133 = scalar_select %p130, %s131, %s132
      %p136 = pneg %p130
      %p137 = scmp.eq.s32.totalorder %s18, 1
      %p138 = por %p136, %p137
      %p139 = scmp.ne.s32.totalorder %s131, %s134
      %p140 = scmp.eq.s32.totalorder %s18, 0
      %p141 = por %p139, %p140
      %p142 = scmp.ne.s32.totalorder %s131, %s134
      %p143 = scmp.eq.s32.totalorder %s23, 1
      %p144 = por %p142, %p143
      %p145 = scmp.ne.s32.totalorder %s134, %s135
      %p146 = scmp.eq.s32.totalorder %s23, 0
      %p147 = por %p145, %p146
      %p148 = scmp.ne.s32.totalorder %s134, %s135
      %p149 = scmp.eq.s32.totalorder %s24, 1
      %p150 = por %p148, %p149
      %p152 = scmp.ne.s32.totalorder %s135, %s151
      %p153 = scmp.eq.s32.totalorder %s24, 0
      %p154 = por %p152, %p153
      %s155 = ssub.s32 %s25, %s37
      %s156 = ssub.s32 %s26, %s33
      %s157 = sor.u32 %s155, %s156
      %p158 = scmp.eq.s32.totalorder %s157, 0
      %s160 = sadd.s32 %s159, 1
      %s161 = scalar_select %p158, %s159, %s160
      %p164 = pneg %p158
      %p165 = scmp.eq.s32.totalorder %s18, 1
      %p166 = por %p164, %p165
      %p167 = scmp.ne.s32.totalorder %s159, %s162
      %p168 = scmp.eq.s32.totalorder %s18, 0
      %p169 = por %p167, %p168
      %p170 = scmp.ne.s32.totalorder %s159, %s162
      %p171 = scmp.eq.s32.totalorder %s23, 1
      %p172 = por %p170, %p171
      %p173 = scmp.ne.s32.totalorder %s162, %s163
      %p174 = scmp.eq.s32.totalorder %s23, 0
      %p175 = por %p173, %p174
      %p176 = scmp.ne.s32.totalorder %s162, %s163
      %p177 = scmp.eq.s32.totalorder %s24, 1
      %p178 = por %p176, %p177
      %p180 = scmp.ne.s32.totalorder %s163, %s179
      %p181 = scmp.eq.s32.totalorder %s24, 0
      %p182 = por %p180, %p181
      %s183 = ssub.s32 %s25, %s37
      %p184 = scmp.eq.s32.totalorder %s183, 0
      %s186 = sadd.s32 %s185, 1
      %s187 = scalar_select %p184, %s185, %s186
      %p190 = pneg %p184
      %p191 = scmp.eq.s32.totalorder %s18, 1
      %p192 = por %p190, %p191
      %p193 = scmp.ne.s32.totalorder %s185, %s188
      %p194 = scmp.eq.s32.totalorder %s18, 0
      %p195 = por %p193, %p194
      %p196 = scmp.ne.s32.totalorder %s185, %s188
      %p197 = scmp.eq.s32.totalorder %s23, 1
      %p198 = por %p196, %p197
      %p199 = scmp.ne.s32.totalorder %s188, %s189
      %p200 = scmp.eq.s32.totalorder %s23, 0
      %p201 = por %p199, %p200
      %p202 = scmp.ne.s32.totalorder %s188, %s189
      %p203 = scmp.eq.s32.totalorder %s24, 1
      %p204 = por %p202, %p203
      %p206 = scmp.ne.s32.totalorder %s189, %s205
      %p207 = scmp.eq.s32.totalorder %s24, 0
      %p208 = por %p206, %p207
      %p209 = scmp.le.s32.totalorder 1, %s18
      %p210 = scmp.lt.s32.totalorder %s18, 3
      %p211 = pnand %p209, %p210
      %p212 = pneg %p211
      // Predicated region
      $region9: #{tpu_custom_call.1} parent=5 // pred_check
        _
      $region10: #{tpu_custom_call.1} parent=5 // pred_check_branch
        %214 = sbr.rel (%p211) target = $region12
      $region11: #{tpu_custom_call.1} parent=5 // pred_region
        %s215 = ssub.s32 %s18, 1
        // Predicated region
        $region13: #{tpu_custom_call.1} parent=11 // pred_check
          %p216 = pneg %p79
        $region14: #{tpu_custom_call.1} parent=11 // pred_check_branch
          %218 = sbr.rel (%p216) target = $region16
        $region15: #{tpu_custom_call.1} parent=11 // pred_region
          _
        $region16: #{tpu_custom_call.1} parent=11 // pred_fallthru
          _
        // Predicated region
        $region17: #{tpu_custom_call.1} parent=11 // pred_check
          %p219 = pneg %p100
        $region18: #{tpu_custom_call.1} parent=11 // pred_check_branch
          %221 = sbr.rel (%p219) target = $region20
        $region19: #{tpu_custom_call.1} parent=11 // pred_region
          %223 = vsyncadd [#allocation6], 0
          %s224 = sshll.u32 %s2, 4
          %s225 = int_to_ptr.hbm [resolvable:$true] %s224
          %s226 = sshll.u32 [#allocation5], 4
          %s227 = int_to_ptr.vmem [resolvable:$true] %s226
          %232 = dma.hbm_to_vmem [thread:$0]  %s225, 3072, %s227, [#allocation6], 192, 192, 12
        $region20: #{tpu_custom_call.1} parent=11 // pred_fallthru
          _
        // Predicated region
        $region21: #{tpu_custom_call.1} parent=11 // pred_check
          %p233 = pneg %p121
        $region22: #{tpu_custom_call.1} parent=11 // pred_check_branch
          %235 = sbr.rel (%p233) target = $region24
        $region23: #{tpu_custom_call.1} parent=11 // pred_region
          _
        $region24: #{tpu_custom_call.1} parent=11 // pred_fallthru
          _
        // Predicated region
        $region25: #{tpu_custom_call.1} parent=11 // pred_check
          %p236 = pneg %p147
        $region26: #{tpu_custom_call.1} parent=11 // pred_check_branch
          %238 = sbr.rel (%p236) target = $region28
        $region27: #{tpu_custom_call.1} parent=11 // pred_region
          %p239 = scmp.lt.s32.totalorder %s27, 0
          %s240 = scalar_select %p239, %s27, 0
          %s241 = smul.addr %s240, 8
          %s242 = scalar_lea.vmem %s4, %s241
        $region28: #{tpu_custom_call.1} parent=11 // pred_fallthru
          _
      $region12: #{tpu_custom_call.1} parent=5 // pred_fallthru
        _
      %p243 = scmp.lt.s32.totalorder %s18, 2
      // Predicated region
      $region29: #{tpu_custom_call.1} parent=5 // pred_check
        %p244 = pneg %p243
      $region30: #{tpu_custom_call.1} parent=5 // pred_check_branch
        %246 = sbr.rel (%p244) target = $region32
      $region31: #{tpu_custom_call.1} parent=5 // pred_region
        // Predicated region
        $region33: #{tpu_custom_call.1} parent=31 // pred_check
          %p247 = pneg %p52
        $region34: #{tpu_custom_call.1} parent=31 // pred_check_branch
          %249 = sbr.rel (%p247) target = $region36
        $region35: #{tpu_custom_call.1} parent=31 // pred_region
          %s250 = sand.u32 %s42, 1
          %s251 = sand.u32 %s42, 1
          %s252 = smul.addr %s251, 32
          %s253 = scalar_lea.vmem [#allocation4], %s252
          %s254 = smul.u32 8, %s25
          %s255 = smul.addr %s254, 2
          %s256 = sadd.s32 %s26, %s255
          %s257 = smul.addr %s256, 4
          %s258 = scalar_lea.vmem %s0, %s257
          // Predicated region
          $region37: #{tpu_custom_call.1} parent=35 // pred_check
            _
          $region38: #{tpu_custom_call.1} parent=35 // pred_check_branch
            %260 = sbr.rel (0) target = $region40
          $region39: #{tpu_custom_call.1} parent=35 // pred_region
            // Predicated region
            $region41: #{tpu_custom_call.1} parent=39 // pred_check
              _
            $region42: #{tpu_custom_call.1} parent=39 // pred_check_branch
              %262 = sbr.rel target = $region44
            $region43: #{tpu_custom_call.1} parent=39 // pred_region
              // Predicated region
              $region56: #{tpu_custom_call.1} parent=43 // pred_check
                _
              $region57: #{tpu_custom_call.1} parent=43 // pred_check_branch
                %292 = sbr.rel (0) target = $region59
              $region58: #{tpu_custom_call.1} parent=43 // pred_region
                loop: start=0, step=1, limit=1
                $region60: #{tpu_custom_call.1} parent=58 // loop_pre_header
                  _
                $region61: #{tpu_custom_call.1} parent=58 // loop_header
                  %s294 = sphi 0, %s298
                  %p295 = scmp.ge.s32.totalorder %s294, 1
                  %s299 = sphi %s258, %s258
                  %s300 = sphi %s253, %s253
                $region62: #{tpu_custom_call.1} parent=58 // loop_header_branch
                  %297 = sbr.rel (%p295) target = $region66
                $region63: #{tpu_custom_call.1} parent=58 // loop_body
                  _
                $region64: #{tpu_custom_call.1} parent=58 // loop_footer
                  %s298 = sadd.s32 1, %s294
                $region65: #{tpu_custom_call.1} parent=58 // loop_footer_branch
                  %293 = sbr.rel target = $region61
                $region66: #{tpu_custom_call.1} parent=58 // loop_exit
                  _
                %s302 = ssub.s32 16, 1
                loop: start=0, step=1, limit=1
                $region67: #{tpu_custom_call.1} parent=58 // loop_pre_header
                  _
                $region68: #{tpu_custom_call.1} parent=58 // loop_header
                  %s304 = sphi 0, %s308
                  %p305 = scmp.ge.s32.totalorder %s304, 1
                  %s309 = sphi %s258, %s258
                  %s310 = sphi %s253, %s253
                $region69: #{tpu_custom_call.1} parent=58 // loop_header_branch
                  %307 = sbr.rel (%p305) target = $region73
                $region70: #{tpu_custom_call.1} parent=58 // loop_body
                  %v311 = vld [vmem:[%s309] sm:%s302]
                  %312 = vst [vmem:[%s310] sm:%s302] %v311
                  %v313 = vld [vmem:[%s309 + $0x8] sm:%s302]
                  %314 = vst [vmem:[%s310 + $0x4] sm:%s302] %v313
                  %v315 = vld [vmem:[%s309 + $0x10] sm:%s302]
                  %316 = vst [vmem:[%s310 + $0x8] sm:%s302] %v315
                  %v317 = vld [vmem:[%s309 + $0x18] sm:%s302]
                  %318 = vst [vmem:[%s310 + $0xc] sm:%s302] %v317
                  %v319 = vld [vmem:[%s309 + $0x20] sm:%s302]
                  %320 = vst [vmem:[%s310 + $0x10] sm:%s302] %v319
                  %v321 = vld [vmem:[%s309 + $0x28] sm:%s302]
                  %322 = vst [vmem:[%s310 + $0x14] sm:%s302] %v321
                  %v323 = vld [vmem:[%s309 + $0x30] sm:%s302]
                  %324 = vst [vmem:[%s310 + $0x18] sm:%s302] %v323
                  %v325 = vld [vmem:[%s309 + $0x38] sm:%s302]
                  %326 = vst [vmem:[%s310 + $0x1c] sm:%s302] %v325
                $region71: #{tpu_custom_call.1} parent=58 // loop_footer
                  %s308 = sadd.s32 1, %s304
                $region72: #{tpu_custom_call.1} parent=58 // loop_footer_branch
                  %303 = sbr.rel target = $region68
                $region73: #{tpu_custom_call.1} parent=58 // loop_exit
                  _
              $region59: #{tpu_custom_call.1} parent=43 // pred_fallthru
                _
            $region44: #{tpu_custom_call.1} parent=39 // pred_fallthru
              _
            // Predicated region
            $region45: #{tpu_custom_call.1} parent=39 // pred_check
              _
            $region46: #{tpu_custom_call.1} parent=39 // pred_check_branch
              %264 = sbr.rel (0) target = $region48
            $region47: #{tpu_custom_call.1} parent=39 // pred_region
              %s266 = ssub.s32 16, 1
              loop: start=0, step=1, limit=1
              $region49: #{tpu_custom_call.1} parent=47 // loop_pre_header
                _
              $region50: #{tpu_custom_call.1} parent=47 // loop_header
                %s268 = sphi 0, %s272
                %p269 = scmp.ge.s32.totalorder %s268, 1
                %s273 = sphi %s258, %s258
                %s274 = sphi %s253, %s253
              $region51: #{tpu_custom_call.1} parent=47 // loop_header_branch
                %271 = sbr.rel (%p269) target = $region55
              $region52: #{tpu_custom_call.1} parent=47 // loop_body
                %v275 = vld [vmem:[%s273] sm:%s266]
                %276 = vst [vmem:[%s274] sm:%s266] %v275
                %v277 = vld [vmem:[%s273 + $0x8] sm:%s266]
                %278 = vst [vmem:[%s274 + $0x4] sm:%s266] %v277
                %v279 = vld [vmem:[%s273 + $0x10] sm:%s266]
                %280 = vst [vmem:[%s274 + $0x8] sm:%s266] %v279
                %v281 = vld [vmem:[%s273 + $0x18] sm:%s266]
                %282 = vst [vmem:[%s274 + $0xc] sm:%s266] %v281
                %v283 = vld [vmem:[%s273 + $0x20] sm:%s266]
                %284 = vst [vmem:[%s274 + $0x10] sm:%s266] %v283
                %v285 = vld [vmem:[%s273 + $0x28] sm:%s266]
                %286 = vst [vmem:[%s274 + $0x14] sm:%s266] %v285
                %v287 = vld [vmem:[%s273 + $0x30] sm:%s266]
                %288 = vst [vmem:[%s274 + $0x18] sm:%s266] %v287
                %v289 = vld [vmem:[%s273 + $0x38] sm:%s266]
                %290 = vst [vmem:[%s274 + $0x1c] sm:%s266] %v289
              $region53: #{tpu_custom_call.1} parent=47 // loop_footer
                %s272 = sadd.s32 1, %s268
              $region54: #{tpu_custom_call.1} parent=47 // loop_footer_branch
                %267 = sbr.rel target = $region50
              $region55: #{tpu_custom_call.1} parent=47 // loop_exit
                _
            $region48: #{tpu_custom_call.1} parent=39 // pred_fallthru
              _
          $region40: #{tpu_custom_call.1} parent=35 // pred_fallthru
            _
          %327 = vnop
        $region36: #{tpu_custom_call.1} parent=31 // pred_fallthru
          _
      $region32: #{tpu_custom_call.1} parent=5 // pred_fallthru
        _
      %p328 = scmp.le.s32.totalorder 1, %s18
      %p329 = scmp.lt.s32.totalorder %s18, 3
      %p330 = pnand %p328, %p329
      %p331 = pneg %p330
      // Predicated region
      $region74: #{tpu_custom_call.1} parent=5 // pred_check
        _
      $region75: #{tpu_custom_call.1} parent=5 // pred_check_branch
        %333 = sbr.rel (%p330) target = $region77
      $region76: #{tpu_custom_call.1} parent=5 // pred_region
        %s334 = ssub.s32 %s18, 1
        %s335 = sand.u32 %s45, 1
        %s336 = sand.u32 %s45, 1
        %s337 = smul.addr %s336, 32
        %s338 = scalar_lea.vmem [#allocation4], %s337
        // Predicated region
        $region78: #{tpu_custom_call.1} parent=76 // pred_check
          %p339 = pneg %p58
        $region79: #{tpu_custom_call.1} parent=76 // pred_check_branch
          %341 = sbr.rel (%p339) target = $region81
        $region80: #{tpu_custom_call.1} parent=76 // pred_region
          _
        $region81: #{tpu_custom_call.1} parent=76 // pred_fallthru
          _
        // Predicated region
        $region82: #{tpu_custom_call.1} parent=76 // pred_check
          %p342 = pneg %p100
        $region83: #{tpu_custom_call.1} parent=76 // pred_check_branch
          %344 = sbr.rel (%p342) target = $region85
        $region84: #{tpu_custom_call.1} parent=76 // pred_region
          %346 = dma.done [#allocation6], 3072
        $region85: #{tpu_custom_call.1} parent=76 // pred_fallthru
          _
        %s347 = sand.u32 %s45, 1
        %s348 = sand.u32 %s45, 1
        %s349 = smul.addr %s348, 32
        %s350 = scalar_lea.vmem [#allocation4], %s349
        %p351 = pneg %p58
        %p352 = pneg %p55
        %p353 = pneg %p79
        %p354 = pneg %p76
        %p355 = pneg %p100
        %p356 = pneg %p97
        %p357 = pneg %p121
        %p358 = pneg %p118
        %p359 = scmp.lt.s32.totalorder %s27, 0
        %s360 = scalar_select %p359, %s27, 0
        %s361 = smul.addr %s360, 8
        %s362 = scalar_lea.vmem %s4, %s361
        %p363 = pneg %p147
        %p364 = pneg %p144
        %p365 = pneg %p175
        %p366 = pneg %p172
        %s367 = sand.u32 %s162, 1
        %s368 = scalar_lea.sflag [#allocation7], %s367
        %s369 = sand.u32 %s162, 1
        %s370 = smul.addr %s369, 64
        %s371 = scalar_lea.vmem [#allocation8], %s370
        %p372 = pneg %p201
        %p373 = pneg %p198
        %s374 = smul.u32 8, %s27
        %p375 = scmp.lt.s32.totalorder %s27, 0
        %s376 = scalar_select %p375, %s27, 0
        %s377 = smul.addr %s376, 8
        %s378 = scalar_lea.vmem %s4, %s377
        %s379 = smul.u32 8, %s27
        %p381 = scmp.eq.s32.totalorder %s28, 0
        // Predicated region
        $region86: #{tpu_custom_call.1} parent=76 // pred_check
          %p382 = pneg %p381
        $region87: #{tpu_custom_call.1} parent=76 // pred_check_branch
          %384 = sbr.rel (%p382) target = $region89
        $region88: #{tpu_custom_call.1} parent=76 // pred_region
          %v385 = vld [vmem:[%s378] sm:$0xff]
          %386 = vst [vmem:[#allocation2] sm:$0xff] %v385
        $region89: #{tpu_custom_call.1} parent=76 // pred_fallthru
          _
        %v387 = vld [vmem:[%s338] sm:$0xf]
        %v388 = vld [vmem:[%s338 + $0x4] sm:$0xf]
        %v389 = vld [vmem:[%s338 + $0x8] sm:$0xf]
        %v390 = vld [vmem:[%s338 + $0xc] sm:$0xf]
        %v391 = vld [vmem:[%s338 + $0x10] sm:$0xf]
        %v392 = vld [vmem:[%s338 + $0x14] sm:$0xf]
        %v393 = vld [vmem:[%s338 + $0x18] sm:$0xf]
        %v394 = vld [vmem:[%s338 + $0x1c] sm:$0xf]
        %v395 = vrot.slane %v391, 4
        %vm396 = vcmask 1047556
        %v397 = vsel %vm396, %v395, %v387
        %v399 = vunpack.c.l.s4 1983009808
        %v400 = vunpack.c.0.s8 %v399
        %v401 = vperm.slane %v397, %v400
        %v402 = vrot.slane %v393, 4
        %v403 = vsel %vm396, %v402, %v389
        %v405 = vunpack.c.l.s4 1983009808
        %v406 = vunpack.c.0.s8 %v405
        %v407 = vperm.slane %v403, %v406
        %v408 = vrot.slane %v407, 4
        %v409 = vsel %vm396, %v408, %v401
        %v410 = vrot.slane %v401, 4
        %v411 = vsel %vm396, %v407, %v410
        %v413 = vunpack.c.l.s4 1934713408
        %v414 = vunpack.c.0.s8 %v413
        %v415 = vperm.slane %v409, %v414
        %v417 = vunpack.c.l.s4 1934713408
        %v418 = vunpack.c.0.s8 %v417
        %v419 = vperm.slane %v411, %v418
        %v420 = vrot.slane %v415, 4
        %v421 = vsel %vm396, 0, %v420
        %v422 = vrot.slane %v419, 4
        %v423 = vsel %vm396, 0, %v422
        %v424 = vrot.slane %v392, 4
        %v425 = vsel %vm396, %v424, %v388
        %v427 = vunpack.c.l.s4 1983009808
        %v428 = vunpack.c.0.s8 %v427
        %v429 = vperm.slane %v425, %v428
        %v430 = vrot.slane %v394, 4
        %v431 = vsel %vm396, %v430, %v390
        %v433 = vunpack.c.l.s4 1983009808
        %v434 = vunpack.c.0.s8 %v433
        %v435 = vperm.slane %v431, %v434
        %v436 = vrot.slane %v435, 4
        %v437 = vsel %vm396, %v436, %v429
        %v438 = vrot.slane %v429, 4
        %v439 = vsel %vm396, %v435, %v438
        %v441 = vunpack.c.l.s4 1934713408
        %v442 = vunpack.c.0.s8 %v441
        %v443 = vperm.slane %v437, %v442
        %v445 = vunpack.c.l.s4 1934713408
        %v446 = vunpack.c.0.s8 %v445
        %v447 = vperm.slane %v439, %v446
        %v448 = vrot.slane %v443, 4
        %v449 = vsel %vm396, 0, %v448
        %v450 = vrot.slane %v447, 4
        %v451 = vsel %vm396, 0, %v450
        %v454 = vpack.i.b16 %v443, %v415
        %v455 = vshrl.u32 %v415, 16
        %v456 = vshrl.u32 %v443, 16
        %v457 = vpack.i.b16 %v456, %v455
        %v460 = vpack.i.b16 %v449, %v421
        %v461 = vshrl.u32 %v421, 16
        %v462 = vshrl.u32 %v449, 16
        %v463 = vpack.i.b16 %v462, %v461
        %v466 = vpack.i.b16 %v447, %v419
        %v467 = vshrl.u32 %v419, 16
        %v468 = vshrl.u32 %v447, 16
        %v469 = vpack.i.b16 %v468, %v467
        %v472 = vpack.i.b16 %v451, %v423
        %v473 = vshrl.u32 %v423, 16
        %v474 = vshrl.u32 %v451, 16
        %v475 = vpack.i.b16 %v474, %v473
        %v476 = vld [vmem:[%s1] sm:$0x3f]
        %v477 = vunpack.c.l.b16 %v454
        %v478 = vunpack.c.l.b16 %v457
        %v479 = vunpack.c.l.b16 %v460
        %v480 = vunpack.c.l.b16 %v463
        %v481 = vunpack.c.l.b16 %v466
        %v482 = vunpack.c.l.b16 %v469
        %v483 = vunpack.c.l.b16 %v472
        %v484 = vunpack.c.l.b16 %v475
        %v485 = vpack.c.b16 %v478, %v477
        %v486 = vpack.c.b16 %v480, %v479
        %v487 = vpack.c.b16 %v482, %v481
        %v488 = vpack.c.b16 %v484, %v483
        %490 = vst [vmem:[#allocation1] ss:$4 sm:$0xff] %v476
        %v491 = vld.sshfl [vmem:[#allocation1] sm:$0xff pattern:$0x73625140]
        %v492 = vld.sshfl [vmem:[#allocation1 + $0x8] sm:$0xff pattern:$0x73625140]
        %v493 = vld.sshfl [vmem:[#allocation1 + $0x10] sm:$0xff pattern:$0x73625140]
        %vm494 = vcmask 31744
        %v496 = vsel %vm494, %v485, 0
        %v499 = vsel %vm494, %v486, 0
        %v502 = vsel %vm494, %v487, 0
        %v505 = vsel %vm494, %v488, 0
        %vm507 = vcmask 1041408
        %v508 = vsel %vm507, %v491, 0
        %v510 = vsel %vm507, %v492, 0
        %v512 = vsel %vm507, %v493, 0
        %514 = vmatpush.bf16.msra.mxu0 0
        %515 = vmatpush.bf16.msra.mxu0 0
        %516 = vmatpush.bf16.msra.mxu0 0
        %517 = vmatpush.bf16.msra.mxu0 0
        %518 = vmatpush.bf16.msra.mxu0 0
        %519 = vmatpush.bf16.msra.mxu0 0
        %520 = vmatpush.bf16.msra.mxu0 0
        %521 = vmatpush.bf16.msra.mxu0 %v508
        %522 = vmatmul.bf16.gmra.mxu0 %v496
        %v523 = vpop.f32.mrf.mxu0
        %v524 = vadd.f32 0.0, %v523
        %v525 = vpop.f32.mrf.mxu0
        %v526 = vadd.f32 0.0, %v525
        %527 = vmatmul.bf16.gmra.mxu0 %v499
        %v528 = vpop.f32.mrf.mxu0
        %v529 = vadd.f32 0.0, %v528
        %v530 = vpop.f32.mrf.mxu0
        %v531 = vadd.f32 0.0, %v530
        %532 = vmatmul.bf16.gmra.mxu0 %v502
        %v533 = vpop.f32.mrf.mxu0
        %v534 = vadd.f32 0.0, %v533
        %v535 = vpop.f32.mrf.mxu0
        %v536 = vadd.f32 0.0, %v535
        %537 = vmatmul.bf16.gmra.mxu0 %v505
        %v538 = vpop.f32.mrf.mxu0
        %v539 = vadd.f32 0.0, %v538
        %v540 = vpop.f32.mrf.mxu0
        %v541 = vadd.f32 0.0, %v540
        %542 = vdwg.mxu0
        %543 = vmatpush.bf16.msra.mxu0 0
        %544 = vmatpush.bf16.msra.mxu0 0
        %545 = vmatpush.bf16.msra.mxu0 0
        %546 = vmatpush.bf16.msra.mxu0 0
        %547 = vmatpush.bf16.msra.mxu0 0
        %548 = vmatpush.bf16.msra.mxu0 0
        %549 = vmatpush.bf16.msra.mxu0 0
        %550 = vmatpush.bf16.msra.mxu0 %v510
        %551 = vmatmul.bf16.gmra.mxu0 %v496
        %v552 = vpop.f32.mrf.mxu0
        %v553 = vadd.f32 0.0, %v552
        %v554 = vpop.f32.mrf.mxu0
        %v555 = vadd.f32 0.0, %v554
        %556 = vmatmul.bf16.gmra.mxu0 %v499
        %v557 = vpop.f32.mrf.mxu0
        %v558 = vadd.f32 0.0, %v557
        %v559 = vpop.f32.mrf.mxu0
        %v560 = vadd.f32 0.0, %v559
        %561 = vmatmul.bf16.gmra.mxu0 %v502
        %v562 = vpop.f32.mrf.mxu0
        %v563 = vadd.f32 0.0, %v562
        %v564 = vpop.f32.mrf.mxu0
        %v565 = vadd.f32 0.0, %v564
        %566 = vmatmul.bf16.gmra.mxu0 %v505
        %v567 = vpop.f32.mrf.mxu0
        %v568 = vadd.f32 0.0, %v567
        %v569 = vpop.f32.mrf.mxu0
        %v570 = vadd.f32 0.0, %v569
        %571 = vdwg.mxu0
        %572 = vmatpush.bf16.msra.mxu0 0
        %573 = vmatpush.bf16.msra.mxu0 0
        %574 = vmatpush.bf16.msra.mxu0 0
        %575 = vmatpush.bf16.msra.mxu0 0
        %576 = vmatpush.bf16.msra.mxu0 0
        %577 = vmatpush.bf16.msra.mxu0 0
        %578 = vmatpush.bf16.msra.mxu0 0
        %579 = vmatpush.bf16.msra.mxu0 %v512
        %580 = vmatmul.bf16.gmra.mxu0 %v496
        %v581 = vpop.f32.mrf.mxu0
        %v582 = vadd.f32 0.0, %v581
        %v583 = vpop.f32.mrf.mxu0
        %v584 = vadd.f32 0.0, %v583
        %585 = vmatmul.bf16.gmra.mxu0 %v499
        %v586 = vpop.f32.mrf.mxu0
        %v587 = vadd.f32 0.0, %v586
        %v588 = vpop.f32.mrf.mxu0
        %v589 = vadd.f32 0.0, %v588
        %590 = vmatmul.bf16.gmra.mxu0 %v502
        %v591 = vpop.f32.mrf.mxu0
        %v592 = vadd.f32 0.0, %v591
        %v593 = vpop.f32.mrf.mxu0
        %v594 = vadd.f32 0.0, %v593
        %595 = vmatmul.bf16.gmra.mxu0 %v505
        %v596 = vpop.f32.mrf.mxu0
        %v597 = vadd.f32 0.0, %v596
        %v598 = vpop.f32.mrf.mxu0
        %v599 = vadd.f32 0.0, %v598
        %600 = vdwg.mxu0
        %v601 = vld [vmem:[#allocation5] sm:$0xff]
        %v602 = vld [vmem:[#allocation5 + $0x8] sm:$0xf]
        %v603 = vld [vmem:[#allocation5 + $0xc] sm:$0xff]
        %v604 = vld [vmem:[#allocation5 + $0x14] sm:$0xf]
        %v605 = vld [vmem:[#allocation5 + $0x18] sm:$0xff]
        %v606 = vld [vmem:[#allocation5 + $0x20] sm:$0xf]
        %v607 = vld [vmem:[#allocation5 + $0x24] sm:$0xff]
        %v608 = vld [vmem:[#allocation5 + $0x2c] sm:$0xf]
        %v609 = vld [vmem:[#allocation5 + $0x30] sm:$0xff]
        %v610 = vld [vmem:[#allocation5 + $0x38] sm:$0xf]
        %v611 = vld [vmem:[#allocation5 + $0x3c] sm:$0xff]
        %v612 = vld [vmem:[#allocation5 + $0x44] sm:$0xf]
        %v613 = vld [vmem:[#allocation5 + $0x48] sm:$0xff]
        %v614 = vld [vmem:[#allocation5 + $0x50] sm:$0xf]
        %v615 = vld [vmem:[#allocation5 + $0x54] sm:$0xff]
        %v616 = vld [vmem:[#allocation5 + $0x5c] sm:$0xf]
        %v617 = vld [vmem:[#allocation5 + $0x60] sm:$0xff]
        %v618 = vld [vmem:[#allocation5 + $0x68] sm:$0xf]
        %v619 = vld [vmem:[#allocation5 + $0x6c] sm:$0xff]
        %v620 = vld [vmem:[#allocation5 + $0x74] sm:$0xf]
        %v621 = vld [vmem:[#allocation5 + $0x78] sm:$0xff]
        %v622 = vld [vmem:[#allocation5 + $0x80] sm:$0xf]
        %v623 = vld [vmem:[#allocation5 + $0x84] sm:$0xff]
        %v624 = vld [vmem:[#allocation5 + $0x8c] sm:$0xf]
        %v625 = vld [vmem:[#allocation5 + $0x90] sm:$0xff]
        %v626 = vld [vmem:[#allocation5 + $0x98] sm:$0xf]
        %v627 = vld [vmem:[#allocation5 + $0x9c] sm:$0xff]
        %v628 = vld [vmem:[#allocation5 + $0xa4] sm:$0xf]
        %v629 = vld [vmem:[#allocation5 + $0xa8] sm:$0xff]
        %v630 = vld [vmem:[#allocation5 + $0xb0] sm:$0xf]
        %v631 = vld [vmem:[#allocation5 + $0xb4] sm:$0xff]
        %v632 = vld [vmem:[#allocation5 + $0xbc] sm:$0xf]
        %v633 = vld [vmem:[#allocation2] sm:$0xff]
        %v634 = vpack.c.bf16 %v633, %v633
        %v667 = vunpack.c.l.b16 %v601
        %v668 = vunpack.c.h.b16 %v601
        %v669 = vunpack.c.l.b16 %v602
        %v670 = vunpack.c.l.b16 %v603
        %v671 = vunpack.c.h.b16 %v603
        %v672 = vunpack.c.l.b16 %v604
        %v673 = vunpack.c.l.b16 %v605
        %v674 = vunpack.c.h.b16 %v605
        %v675 = vunpack.c.l.b16 %v606
        %v676 = vunpack.c.l.b16 %v607
        %v677 = vunpack.c.h.b16 %v607
        %v678 = vunpack.c.l.b16 %v608
        %v679 = vunpack.c.l.b16 %v609
        %v680 = vunpack.c.h.b16 %v609
        %v681 = vunpack.c.l.b16 %v610
        %v682 = vunpack.c.l.b16 %v611
        %v683 = vunpack.c.h.b16 %v611
        %v684 = vunpack.c.l.b16 %v612
        %v685 = vunpack.c.l.b16 %v613
        %v686 = vunpack.c.h.b16 %v613
        %v687 = vunpack.c.l.b16 %v614
        %v688 = vunpack.c.l.b16 %v615
        %v689 = vunpack.c.h.b16 %v615
        %v690 = vunpack.c.l.b16 %v616
        %v691 = vunpack.c.l.b16 %v617
        %v692 = vunpack.c.h.b16 %v617
        %v693 = vunpack.c.l.b16 %v618
        %v694 = vunpack.c.l.b16 %v619
        %v695 = vunpack.c.h.b16 %v619
        %v696 = vunpack.c.l.b16 %v620
        %v697 = vunpack.c.l.b16 %v621
        %v698 = vunpack.c.h.b16 %v621
        %v699 = vunpack.c.l.b16 %v622
        %v700 = vunpack.c.l.b16 %v623
        %v701 = vunpack.c.h.b16 %v623
        %v702 = vunpack.c.l.b16 %v624
        %v703 = vunpack.c.l.b16 %v625
        %v704 = vunpack.c.h.b16 %v625
        %v705 = vunpack.c.l.b16 %v626
        %v706 = vunpack.c.l.b16 %v627
        %v707 = vunpack.c.h.b16 %v627
        %v708 = vunpack.c.l.b16 %v628
        %v709 = vunpack.c.l.b16 %v629
        %v710 = vunpack.c.h.b16 %v629
        %v711 = vunpack.c.l.b16 %v630
        %v712 = vunpack.c.l.b16 %v631
        %v713 = vunpack.c.h.b16 %v631
        %v714 = vunpack.c.l.b16 %v632
        %v715 = vpack.c.b16 %v670, %v667
        %v716 = vpack.c.b16 %v671, %v668
        %v717 = vpack.c.b16 %v672, %v669
        %v718 = vpack.c.b16 %v676, %v673
        %v719 = vpack.c.b16 %v677, %v674
        %v720 = vpack.c.b16 %v678, %v675
        %v721 = vpack.c.b16 %v682, %v679
        %v722 = vpack.c.b16 %v683, %v680
        %v723 = vpack.c.b16 %v684, %v681
        %v724 = vpack.c.b16 %v688, %v685
        %v725 = vpack.c.b16 %v689, %v686
        %v726 = vpack.c.b16 %v690, %v687
        %v727 = vpack.c.b16 %v694, %v691
        %v728 = vpack.c.b16 %v695, %v692
        %v729 = vpack.c.b16 %v696, %v693
        %v730 = vpack.c.b16 %v700, %v697
        %v731 = vpack.c.b16 %v701, %v698
        %v732 = vpack.c.b16 %v702, %v699
        %v733 = vpack.c.b16 %v706, %v703
        %v734 = vpack.c.b16 %v707, %v704
        %v735 = vpack.c.b16 %v708, %v705
        %v736 = vpack.c.b16 %v712, %v709
        %v737 = vpack.c.b16 %v713, %v710
        %v738 = vpack.c.b16 %v714, %v711
        %763 = vmatpush.bf16.msra.mxu0 %v736
        %764 = vmatpush.bf16.msra.mxu0 %v733
        %765 = vmatpush.bf16.msra.mxu0 %v730
        %766 = vmatpush.bf16.msra.mxu0 %v727
        %767 = vmatpush.bf16.msra.mxu0 %v724
        %768 = vmatpush.bf16.msra.mxu0 %v721
        %769 = vmatpush.bf16.msra.mxu0 %v718
        %770 = vmatpush.bf16.msra.mxu0 %v715
        %771 = vmatmul.bf16.gmra.mxu0 %v634
        %v772 = vpop.f32.mrf.mxu0
        %v773 = vadd.f32 0.0, %v772
        %v774 = vpop.f32.mrf.mxu0
        %775 = vdwg.mxu0
        %776 = vmatpush.bf16.msra.mxu0 %v737
        %777 = vmatpush.bf16.msra.mxu0 %v734
        %778 = vmatpush.bf16.msra.mxu0 %v731
        %779 = vmatpush.bf16.msra.mxu0 %v728
        %780 = vmatpush.bf16.msra.mxu0 %v725
        %781 = vmatpush.bf16.msra.mxu0 %v722
        %782 = vmatpush.bf16.msra.mxu0 %v719
        %783 = vmatpush.bf16.msra.mxu0 %v716
        %784 = vmatmul.bf16.gmra.mxu0 %v634
        %v785 = vpop.f32.mrf.mxu0
        %v786 = vadd.f32 0.0, %v785
        %v787 = vpop.f32.mrf.mxu0
        %788 = vdwg.mxu0
        %789 = vmatpush.bf16.msra.mxu0 %v738
        %790 = vmatpush.bf16.msra.mxu0 %v735
        %791 = vmatpush.bf16.msra.mxu0 %v732
        %792 = vmatpush.bf16.msra.mxu0 %v729
        %793 = vmatpush.bf16.msra.mxu0 %v726
        %794 = vmatpush.bf16.msra.mxu0 %v723
        %795 = vmatpush.bf16.msra.mxu0 %v720
        %796 = vmatpush.bf16.msra.mxu0 %v717
        %797 = vmatmul.bf16.gmra.mxu0 %v634
        %v798 = vpop.f32.mrf.mxu0
        %v799 = vadd.f32 0.0, %v798
        %v800 = vpop.f32.mrf.mxu0
        %801 = vdwg.mxu0
        %v802 = vadd.f32 %v524, %v773
        %v803 = vxor.u32 %v802, 2147483648
        %v804 = vmul.f32 %v803, 1.442695
        %v805 = vpow.pop %v804
        %v806 = vadd.f32 %v805, 1.0
        %v807 = vrcp.pop %v806
        %v808 = vmul.f32 %v806, %v807
        %v809 = vsub.f32 1.0, %v808
        %v810 = vmul.f32 %v807, %v809
        %v811 = vadd.f32 %v807, %v810
        %vm812 = vweird.f32 %v806
        %vm813 = vweird.f32 %v807
        %vm814 = vmor %vm812, %vm813
        %v815 = vsel %vm814, %v807, %v811
        %v816 = vand.u32 2147483647, %v806
        %vm817 = vcmp.eq.f32.partialorder %v816, 8.507059e+37
        %v818 = vand.u32 %v806, 2147483648
        %v819 = vor.u32 1.1754944e-38, %v818
        %v820 = vsel %vm817, %v819, %v815
        %v821 = vmul.f32 1.0, %v820
        %v822 = vadd.f32 %v553, %v786
        %v823 = vxor.u32 %v822, 2147483648
        %v824 = vmul.f32 %v823, 1.442695
        %v825 = vpow.pop %v824
        %v826 = vadd.f32 %v825, 1.0
        %v827 = vrcp.pop %v826
        %v828 = vmul.f32 %v826, %v827
        %v829 = vsub.f32 1.0, %v828
        %v830 = vmul.f32 %v827, %v829
        %v831 = vadd.f32 %v827, %v830
        %vm832 = vweird.f32 %v826
        %vm833 = vweird.f32 %v827
        %vm834 = vmor %vm832, %vm833
        %v835 = vsel %vm834, %v827, %v831
        %v836 = vand.u32 2147483647, %v826
        %vm837 = vcmp.eq.f32.partialorder %v836, 8.507059e+37
        %v838 = vand.u32 %v826, 2147483648
        %v839 = vor.u32 1.1754944e-38, %v838
        %v840 = vsel %vm837, %v839, %v835
        %v841 = vmul.f32 1.0, %v840
        %v842 = vmul.f32 %v821, %v799
        %v843 = vadd.f32 %v582, %v842
        %v844 = vtanh.pop %v843
        %v845 = vsub.f32 %v633, %v844
        %v846 = vmul.f32 %v841, %v845
        %v847 = vadd.f32 %v844, %v846
        %848 = vst [vmem:[#allocation3] sm:$0xff] %v847
        %v849 = vpack.c.bf16 %v847, %v847
        %850 = vmatpush.bf16.msra.mxu0 %v736
        %851 = vmatpush.bf16.msra.mxu0 %v733
        %852 = vmatpush.bf16.msra.mxu0 %v730
        %853 = vmatpush.bf16.msra.mxu0 %v727
        %854 = vmatpush.bf16.msra.mxu0 %v724
        %855 = vmatpush.bf16.msra.mxu0 %v721
        %856 = vmatpush.bf16.msra.mxu0 %v718
        %857 = vmatpush.bf16.msra.mxu0 %v715
        %858 = vmatmul.bf16.gmra.mxu0 %v849
        %v859 = vpop.f32.mrf.mxu0
        %v860 = vadd.f32 0.0, %v859
        %v861 = vpop.f32.mrf.mxu0
        %862 = vdwg.mxu0
        %863 = vmatpush.bf16.msra.mxu0 %v737
        %864 = vmatpush.bf16.msra.mxu0 %v734
        %865 = vmatpush.bf16.msra.mxu0 %v731
        %866 = vmatpush.bf16.msra.mxu0 %v728
        %867 = vmatpush.bf16.msra.mxu0 %v725
        %868 = vmatpush.bf16.msra.mxu0 %v722
        %869 = vmatpush.bf16.msra.mxu0 %v719
        %870 = vmatpush.bf16.msra.mxu0 %v716
        %871 = vmatmul.bf16.gmra.mxu0 %v849
        %v872 = vpop.f32.mrf.mxu0
        %v873 = vadd.f32 0.0, %v872
        %v874 = vpop.f32.mrf.mxu0
        %875 = vdwg.mxu0
        %876 = vmatpush.bf16.msra.mxu0 %v738
        %877 = vmatpush.bf16.msra.mxu0 %v735
        %878 = vmatpush.bf16.msra.mxu0 %v732
        %879 = vmatpush.bf16.msra.mxu0 %v729
        %880 = vmatpush.bf16.msra.mxu0 %v726
        %881 = vmatpush.bf16.msra.mxu0 %v723
        %882 = vmatpush.bf16.msra.mxu0 %v720
        %883 = vmatpush.bf16.msra.mxu0 %v717
        %884 = vmatmul.bf16.gmra.mxu0 %v849
        %v885 = vpop.f32.mrf.mxu0
        %v886 = vadd.f32 0.0, %v885
        %v887 = vpop.f32.mrf.mxu0
        %888 = vdwg.mxu0
        %v889 = vadd.f32 %v526, %v860
        %v890 = vxor.u32 %v889, 2147483648
        %v891 = vmul.f32 %v890, 1.442695
        %v892 = vpow.pop %v891
        %v893 = vadd.f32 %v892, 1.0
        %v894 = vrcp.pop %v893
        %v895 = vmul.f32 %v893, %v894
        %v896 = vsub.f32 1.0, %v895
        %v897 = vmul.f32 %v894, %v896
        %v898 = vadd.f32 %v894, %v897
        %vm899 = vweird.f32 %v893
        %vm900 = vweird.f32 %v894
        %vm901 = vmor %vm899, %vm900
        %v902 = vsel %vm901, %v894, %v898
        %v903 = vand.u32 2147483647, %v893
        %vm904 = vcmp.eq.f32.partialorder %v903, 8.507059e+37
        %v905 = vand.u32 %v893, 2147483648
        %v906 = vor.u32 1.1754944e-38, %v905
        %v907 = vsel %vm904, %v906, %v902
        %v908 = vmul.f32 1.0, %v907
        %v909 = vadd.f32 %v555, %v873
        %v910 = vxor.u32 %v909, 2147483648
        %v911 = vmul.f32 %v910, 1.442695
        %v912 = vpow.pop %v911
        %v913 = vadd.f32 %v912, 1.0
        %v914 = vrcp.pop %v913
        %v915 = vmul.f32 %v913, %v914
        %v916 = vsub.f32 1.0, %v915
        %v917 = vmul.f32 %v914, %v916
        %v918 = vadd.f32 %v914, %v917
        %vm919 = vweird.f32 %v913
        %vm920 = vweird.f32 %v914
        %vm921 = vmor %vm919, %vm920
        %v922 = vsel %vm921, %v914, %v918
        %v923 = vand.u32 2147483647, %v913
        %vm924 = vcmp.eq.f32.partialorder %v923, 8.507059e+37
        %v925 = vand.u32 %v913, 2147483648
        %v926 = vor.u32 1.1754944e-38, %v925
        %v927 = vsel %vm924, %v926, %v922
        %v928 = vmul.f32 1.0, %v927
        %v929 = vmul.f32 %v908, %v886
        %v930 = vadd.f32 %v584, %v929
        %v931 = vtanh.pop %v930
        %v932 = vsub.f32 %v847, %v931
        %v933 = vmul.f32 %v928, %v932
        %v934 = vadd.f32 %v931, %v933
        %s935 = scalar_lea.vmem [#allocation3], 8
        %936 = vst [vmem:[%s935] sm:$0xff] %v934
        %v937 = vpack.c.bf16 %v934, %v934
        %938 = vmatpush.bf16.msra.mxu0 %v736
        %939 = vmatpush.bf16.msra.mxu0 %v733
        %940 = vmatpush.bf16.msra.mxu0 %v730
        %941 = vmatpush.bf16.msra.mxu0 %v727
        %942 = vmatpush.bf16.msra.mxu0 %v724
        %943 = vmatpush.bf16.msra.mxu0 %v721
        %944 = vmatpush.bf16.msra.mxu0 %v718
        %945 = vmatpush.bf16.msra.mxu0 %v715
        %946 = vmatmul.bf16.gmra.mxu0 %v937
        %v947 = vpop.f32.mrf.mxu0
        %v948 = vadd.f32 0.0, %v947
        %v949 = vpop.f32.mrf.mxu0
        %950 = vdwg.mxu0
        %951 = vmatpush.bf16.msra.mxu0 %v737
        %952 = vmatpush.bf16.msra.mxu0 %v734
        %953 = vmatpush.bf16.msra.mxu0 %v731
        %954 = vmatpush.bf16.msra.mxu0 %v728
        %955 = vmatpush.bf16.msra.mxu0 %v725
        %956 = vmatpush.bf16.msra.mxu0 %v722
        %957 = vmatpush.bf16.msra.mxu0 %v719
        %958 = vmatpush.bf16.msra.mxu0 %v716
        %959 = vmatmul.bf16.gmra.mxu0 %v937
        %v960 = vpop.f32.mrf.mxu0
        %v961 = vadd.f32 0.0, %v960
        %v962 = vpop.f32.mrf.mxu0
        %963 = vdwg.mxu0
        %964 = vmatpush.bf16.msra.mxu0 %v738
        %965 = vmatpush.bf16.msra.mxu0 %v735
        %966 = vmatpush.bf16.msra.mxu0 %v732
        %967 = vmatpush.bf16.msra.mxu0 %v729
        %968 = vmatpush.bf16.msra.mxu0 %v726
        %969 = vmatpush.bf16.msra.mxu0 %v723
        %970 = vmatpush.bf16.msra.mxu0 %v720
        %971 = vmatpush.bf16.msra.mxu0 %v717
        %972 = vmatmul.bf16.gmra.mxu0 %v937
        %v973 = vpop.f32.mrf.mxu0
        %v974 = vadd.f32 0.0, %v973
        %v975 = vpop.f32.mrf.mxu0
        %976 = vdwg.mxu0
        %v977 = vadd.f32 %v529, %v948
        %v978 = vxor.u32 %v977, 2147483648
        %v979 = vmul.f32 %v978, 1.442695
        %v980 = vpow.pop %v979
        %v981 = vadd.f32 %v980, 1.0
        %v982 = vrcp.pop %v981
        %v983 = vmul.f32 %v981, %v982
        %v984 = vsub.f32 1.0, %v983
        %v985 = vmul.f32 %v982, %v984
        %v986 = vadd.f32 %v982, %v985
        %vm987 = vweird.f32 %v981
        %vm988 = vweird.f32 %v982
        %vm989 = vmor %vm987, %vm988
        %v990 = vsel %vm989, %v982, %v986
        %v991 = vand.u32 2147483647, %v981
        %vm992 = vcmp.eq.f32.partialorder %v991, 8.507059e+37
        %v993 = vand.u32 %v981, 2147483648
        %v994 = vor.u32 1.1754944e-38, %v993
        %v995 = vsel %vm992, %v994, %v990
        %v996 = vmul.f32 1.0, %v995
        %v997 = vadd.f32 %v558, %v961
        %v998 = vxor.u32 %v997, 2147483648
        %v999 = vmul.f32 %v998, 1.442695
        %v1000 = vpow.pop %v999
        %v1001 = vadd.f32 %v1000, 1.0
        %v1002 = vrcp.pop %v1001
        %v1003 = vmul.f32 %v1001, %v1002
        %v1004 = vsub.f32 1.0, %v1003
        %v1005 = vmul.f32 %v1002, %v1004
        %v1006 = vadd.f32 %v1002, %v1005
        %vm1007 = vweird.f32 %v1001
        %vm1008 = vweird.f32 %v1002
        %vm1009 = vmor %vm1007, %vm1008
        %v1010 = vsel %vm1009, %v1002, %v1006
        %v1011 = vand.u32 2147483647, %v1001
        %vm1012 = vcmp.eq.f32.partialorder %v1011, 8.507059e+37
        %v1013 = vand.u32 %v1001, 2147483648
        %v1014 = vor.u32 1.1754944e-38, %v1013
        %v1015 = vsel %vm1012, %v1014, %v1010
        %v1016 = vmul.f32 1.0, %v1015
        %v1017 = vmul.f32 %v996, %v974
        %v1018 = vadd.f32 %v587, %v1017
        %v1019 = vtanh.pop %v1018
        %v1020 = vsub.f32 %v934, %v1019
        %v1021 = vmul.f32 %v1016, %v1020
        %v1022 = vadd.f32 %v1019, %v1021
        %s1023 = scalar_lea.vmem [#allocation3], 16
        %1024 = vst [vmem:[%s1023] sm:$0xff] %v1022
        %v1025 = vpack.c.bf16 %v1022, %v1022
        %1026 = vmatpush.bf16.msra.mxu0 %v736
        %1027 = vmatpush.bf16.msra.mxu0 %v733
        %1028 = vmatpush.bf16.msra.mxu0 %v730
        %1029 = vmatpush.bf16.msra.mxu0 %v727
        %1030 = vmatpush.bf16.msra.mxu0 %v724
        %1031 = vmatpush.bf16.msra.mxu0 %v721
        %1032 = vmatpush.bf16.msra.mxu0 %v718
        %1033 = vmatpush.bf16.msra.mxu0 %v715
        %1034 = vmatmul.bf16.gmra.mxu0 %v1025
        %v1035 = vpop.f32.mrf.mxu0
        %v1036 = vadd.f32 0.0, %v1035
        %v1037 = vpop.f32.mrf.mxu0
        %1038 = vdwg.mxu0
        %1039 = vmatpush.bf16.msra.mxu0 %v737
        %1040 = vmatpush.bf16.msra.mxu0 %v734
        %1041 = vmatpush.bf16.msra.mxu0 %v731
        %1042 = vmatpush.bf16.msra.mxu0 %v728
        %1043 = vmatpush.bf16.msra.mxu0 %v725
        %1044 = vmatpush.bf16.msra.mxu0 %v722
        %1045 = vmatpush.bf16.msra.mxu0 %v719
        %1046 = vmatpush.bf16.msra.mxu0 %v716
        %1047 = vmatmul.bf16.gmra.mxu0 %v1025
        %v1048 = vpop.f32.mrf.mxu0
        %v1049 = vadd.f32 0.0, %v1048
        %v1050 = vpop.f32.mrf.mxu0
        %1051 = vdwg.mxu0
        %1052 = vmatpush.bf16.msra.mxu0 %v738
        %1053 = vmatpush.bf16.msra.mxu0 %v735
        %1054 = vmatpush.bf16.msra.mxu0 %v732
        %1055 = vmatpush.bf16.msra.mxu0 %v729
        %1056 = vmatpush.bf16.msra.mxu0 %v726
        %1057 = vmatpush.bf16.msra.mxu0 %v723
        %1058 = vmatpush.bf16.msra.mxu0 %v720
        %1059 = vmatpush.bf16.msra.mxu0 %v717
        %1060 = vmatmul.bf16.gmra.mxu0 %v1025
        %v1061 = vpop.f32.mrf.mxu0
        %v1062 = vadd.f32 0.0, %v1061
        %v1063 = vpop.f32.mrf.mxu0
        %1064 = vdwg.mxu0
        %v1065 = vadd.f32 %v531, %v1036
        %v1066 = vxor.u32 %v1065, 2147483648
        %v1067 = vmul.f32 %v1066, 1.442695
        %v1068 = vpow.pop %v1067
        %v1069 = vadd.f32 %v1068, 1.0
        %v1070 = vrcp.pop %v1069
        %v1071 = vmul.f32 %v1069, %v1070
        %v1072 = vsub.f32 1.0, %v1071
        %v1073 = vmul.f32 %v1070, %v1072
        %v1074 = vadd.f32 %v1070, %v1073
        %vm1075 = vweird.f32 %v1069
        %vm1076 = vweird.f32 %v1070
        %vm1077 = vmor %vm1075, %vm1076
        %v1078 = vsel %vm1077, %v1070, %v1074
        %v1079 = vand.u32 2147483647, %v1069
        %vm1080 = vcmp.eq.f32.partialorder %v1079, 8.507059e+37
        %v1081 = vand.u32 %v1069, 2147483648
        %v1082 = vor.u32 1.1754944e-38, %v1081
        %v1083 = vsel %vm1080, %v1082, %v1078
        %v1084 = vmul.f32 1.0, %v1083
        %v1085 = vadd.f32 %v560, %v1049
        %v1086 = vxor.u32 %v1085, 2147483648
        %v1087 = vmul.f32 %v1086, 1.442695
        %v1088 = vpow.pop %v1087
        %v1089 = vadd.f32 %v1088, 1.0
        %v1090 = vrcp.pop %v1089
        %v1091 = vmul.f32 %v1089, %v1090
        %v1092 = vsub.f32 1.0, %v1091
        %v1093 = vmul.f32 %v1090, %v1092
        %v1094 = vadd.f32 %v1090, %v1093
        %vm1095 = vweird.f32 %v1089
        %vm1096 = vweird.f32 %v1090
        %vm1097 = vmor %vm1095, %vm1096
        %v1098 = vsel %vm1097, %v1090, %v1094
        %v1099 = vand.u32 2147483647, %v1089
        %vm1100 = vcmp.eq.f32.partialorder %v1099, 8.507059e+37
        %v1101 = vand.u32 %v1089, 2147483648
        %v1102 = vor.u32 1.1754944e-38, %v1101
        %v1103 = vsel %vm1100, %v1102, %v1098
        %v1104 = vmul.f32 1.0, %v1103
        %v1105 = vmul.f32 %v1084, %v1062
        %v1106 = vadd.f32 %v589, %v1105
        %v1107 = vtanh.pop %v1106
        %v1108 = vsub.f32 %v1022, %v1107
        %v1109 = vmul.f32 %v1104, %v1108
        %v1110 = vadd.f32 %v1107, %v1109
        %s1111 = scalar_lea.vmem [#allocation3], 24
        %1112 = vst [vmem:[%s1111] sm:$0xff] %v1110
        %v1113 = vpack.c.bf16 %v1110, %v1110
        %1114 = vmatpush.bf16.msra.mxu0 %v736
        %1115 = vmatpush.bf16.msra.mxu0 %v733
        %1116 = vmatpush.bf16.msra.mxu0 %v730
        %1117 = vmatpush.bf16.msra.mxu0 %v727
        %1118 = vmatpush.bf16.msra.mxu0 %v724
        %1119 = vmatpush.bf16.msra.mxu0 %v721
        %1120 = vmatpush.bf16.msra.mxu0 %v718
        %1121 = vmatpush.bf16.msra.mxu0 %v715
        %1122 = vmatmul.bf16.gmra.mxu0 %v1113
        %v1123 = vpop.f32.mrf.mxu0
        %v1124 = vadd.f32 0.0, %v1123
        %v1125 = vpop.f32.mrf.mxu0
        %1126 = vdwg.mxu0
        %1127 = vmatpush.bf16.msra.mxu0 %v737
        %1128 = vmatpush.bf16.msra.mxu0 %v734
        %1129 = vmatpush.bf16.msra.mxu0 %v731
        %1130 = vmatpush.bf16.msra.mxu0 %v728
        %1131 = vmatpush.bf16.msra.mxu0 %v725
        %1132 = vmatpush.bf16.msra.mxu0 %v722
        %1133 = vmatpush.bf16.msra.mxu0 %v719
        %1134 = vmatpush.bf16.msra.mxu0 %v716
        %1135 = vmatmul.bf16.gmra.mxu0 %v1113
        %v1136 = vpop.f32.mrf.mxu0
        %v1137 = vadd.f32 0.0, %v1136
        %v1138 = vpop.f32.mrf.mxu0
        %1139 = vdwg.mxu0
        %1140 = vmatpush.bf16.msra.mxu0 %v738
        %1141 = vmatpush.bf16.msra.mxu0 %v735
        %1142 = vmatpush.bf16.msra.mxu0 %v732
        %1143 = vmatpush.bf16.msra.mxu0 %v729
        %1144 = vmatpush.bf16.msra.mxu0 %v726
        %1145 = vmatpush.bf16.msra.mxu0 %v723
        %1146 = vmatpush.bf16.msra.mxu0 %v720
        %1147 = vmatpush.bf16.msra.mxu0 %v717
        %1148 = vmatmul.bf16.gmra.mxu0 %v1113
        %v1149 = vpop.f32.mrf.mxu0
        %v1150 = vadd.f32 0.0, %v1149
        %v1151 = vpop.f32.mrf.mxu0
        %1152 = vdwg.mxu0
        %v1153 = vadd.f32 %v534, %v1124
        %v1154 = vxor.u32 %v1153, 2147483648
        %v1155 = vmul.f32 %v1154, 1.442695
        %v1156 = vpow.pop %v1155
        %v1157 = vadd.f32 %v1156, 1.0
        %v1158 = vrcp.pop %v1157
        %v1159 = vmul.f32 %v1157, %v1158
        %v1160 = vsub.f32 1.0, %v1159
        %v1161 = vmul.f32 %v1158, %v1160
        %v1162 = vadd.f32 %v1158, %v1161
        %vm1163 = vweird.f32 %v1157
        %vm1164 = vweird.f32 %v1158
        %vm1165 = vmor %vm1163, %vm1164
        %v1166 = vsel %vm1165, %v1158, %v1162
        %v1167 = vand.u32 2147483647, %v1157
        %vm1168 = vcmp.eq.f32.partialorder %v1167, 8.507059e+37
        %v1169 = vand.u32 %v1157, 2147483648
        %v1170 = vor.u32 1.1754944e-38, %v1169
        %v1171 = vsel %vm1168, %v1170, %v1166
        %v1172 = vmul.f32 1.0, %v1171
        %v1173 = vadd.f32 %v563, %v1137
        %v1174 = vxor.u32 %v1173, 2147483648
        %v1175 = vmul.f32 %v1174, 1.442695
        %v1176 = vpow.pop %v1175
        %v1177 = vadd.f32 %v1176, 1.0
        %v1178 = vrcp.pop %v1177
        %v1179 = vmul.f32 %v1177, %v1178
        %v1180 = vsub.f32 1.0, %v1179
        %v1181 = vmul.f32 %v1178, %v1180
        %v1182 = vadd.f32 %v1178, %v1181
        %vm1183 = vweird.f32 %v1177
        %vm1184 = vweird.f32 %v1178
        %vm1185 = vmor %vm1183, %vm1184
        %v1186 = vsel %vm1185, %v1178, %v1182
        %v1187 = vand.u32 2147483647, %v1177
        %vm1188 = vcmp.eq.f32.partialorder %v1187, 8.507059e+37
        %v1189 = vand.u32 %v1177, 2147483648
        %v1190 = vor.u32 1.1754944e-38, %v1189
        %v1191 = vsel %vm1188, %v1190, %v1186
        %v1192 = vmul.f32 1.0, %v1191
        %v1193 = vmul.f32 %v1172, %v1150
        %v1194 = vadd.f32 %v592, %v1193
        %v1195 = vtanh.pop %v1194
        %v1196 = vsub.f32 %v1110, %v1195
        %v1197 = vmul.f32 %v1192, %v1196
        %v1198 = vadd.f32 %v1195, %v1197
        %s1199 = scalar_lea.vmem [#allocation3], 32
        %1200 = vst [vmem:[%s1199] sm:$0xff] %v1198
        %v1201 = vpack.c.bf16 %v1198, %v1198
        %1202 = vmatpush.bf16.msra.mxu0 %v736
        %1203 = vmatpush.bf16.msra.mxu0 %v733
        %1204 = vmatpush.bf16.msra.mxu0 %v730
        %1205 = vmatpush.bf16.msra.mxu0 %v727
        %1206 = vmatpush.bf16.msra.mxu0 %v724
        %1207 = vmatpush.bf16.msra.mxu0 %v721
        %1208 = vmatpush.bf16.msra.mxu0 %v718
        %1209 = vmatpush.bf16.msra.mxu0 %v715
        %1210 = vmatmul.bf16.gmra.mxu0 %v1201
        %v1211 = vpop.f32.mrf.mxu0
        %v1212 = vadd.f32 0.0, %v1211
        %v1213 = vpop.f32.mrf.mxu0
        %1214 = vdwg.mxu0
        %1215 = vmatpush.bf16.msra.mxu0 %v737
        %1216 = vmatpush.bf16.msra.mxu0 %v734
        %1217 = vmatpush.bf16.msra.mxu0 %v731
        %1218 = vmatpush.bf16.msra.mxu0 %v728
        %1219 = vmatpush.bf16.msra.mxu0 %v725
        %1220 = vmatpush.bf16.msra.mxu0 %v722
        %1221 = vmatpush.bf16.msra.mxu0 %v719
        %1222 = vmatpush.bf16.msra.mxu0 %v716
        %1223 = vmatmul.bf16.gmra.mxu0 %v1201
        %v1224 = vpop.f32.mrf.mxu0
        %v1225 = vadd.f32 0.0, %v1224
        %v1226 = vpop.f32.mrf.mxu0
        %1227 = vdwg.mxu0
        %1228 = vmatpush.bf16.msra.mxu0 %v738
        %1229 = vmatpush.bf16.msra.mxu0 %v735
        %1230 = vmatpush.bf16.msra.mxu0 %v732
        %1231 = vmatpush.bf16.msra.mxu0 %v729
        %1232 = vmatpush.bf16.msra.mxu0 %v726
        %1233 = vmatpush.bf16.msra.mxu0 %v723
        %1234 = vmatpush.bf16.msra.mxu0 %v720
        %1235 = vmatpush.bf16.msra.mxu0 %v717
        %1236 = vmatmul.bf16.gmra.mxu0 %v1201
        %v1237 = vpop.f32.mrf.mxu0
        %v1238 = vadd.f32 0.0, %v1237
        %v1239 = vpop.f32.mrf.mxu0
        %1240 = vdwg.mxu0
        %v1241 = vadd.f32 %v536, %v1212
        %v1242 = vxor.u32 %v1241, 2147483648
        %v1243 = vmul.f32 %v1242, 1.442695
        %v1244 = vpow.pop %v1243
        %v1245 = vadd.f32 %v1244, 1.0
        %v1246 = vrcp.pop %v1245
        %v1247 = vmul.f32 %v1245, %v1246
        %v1248 = vsub.f32 1.0, %v1247
        %v1249 = vmul.f32 %v1246, %v1248
        %v1250 = vadd.f32 %v1246, %v1249
        %vm1251 = vweird.f32 %v1245
        %vm1252 = vweird.f32 %v1246
        %vm1253 = vmor %vm1251, %vm1252
        %v1254 = vsel %vm1253, %v1246, %v1250
        %v1255 = vand.u32 2147483647, %v1245
        %vm1256 = vcmp.eq.f32.partialorder %v1255, 8.507059e+37
        %v1257 = vand.u32 %v1245, 2147483648
        %v1258 = vor.u32 1.1754944e-38, %v1257
        %v1259 = vsel %vm1256, %v1258, %v1254
        %v1260 = vmul.f32 1.0, %v1259
        %v1261 = vadd.f32 %v565, %v1225
        %v1262 = vxor.u32 %v1261, 2147483648
        %v1263 = vmul.f32 %v1262, 1.442695
        %v1264 = vpow.pop %v1263
        %v1265 = vadd.f32 %v1264, 1.0
        %v1266 = vrcp.pop %v1265
        %v1267 = vmul.f32 %v1265, %v1266
        %v1268 = vsub.f32 1.0, %v1267
        %v1269 = vmul.f32 %v1266, %v1268
        %v1270 = vadd.f32 %v1266, %v1269
        %vm1271 = vweird.f32 %v1265
        %vm1272 = vweird.f32 %v1266
        %vm1273 = vmor %vm1271, %vm1272
        %v1274 = vsel %vm1273, %v1266, %v1270
        %v1275 = vand.u32 2147483647, %v1265
        %vm1276 = vcmp.eq.f32.partialorder %v1275, 8.507059e+37
        %v1277 = vand.u32 %v1265, 2147483648
        %v1278 = vor.u32 1.1754944e-38, %v1277
        %v1279 = vsel %vm1276, %v1278, %v1274
        %v1280 = vmul.f32 1.0, %v1279
        %v1281 = vmul.f32 %v1260, %v1238
        %v1282 = vadd.f32 %v594, %v1281
        %v1283 = vtanh.pop %v1282
        %v1284 = vsub.f32 %v1198, %v1283
        %v1285 = vmul.f32 %v1280, %v1284
        %v1286 = vadd.f32 %v1283, %v1285
        %s1287 = scalar_lea.vmem [#allocation3], 40
        %1288 = vst [vmem:[%s1287] sm:$0xff] %v1286
        %v1289 = vpack.c.bf16 %v1286, %v1286
        %1290 = vmatpush.bf16.msra.mxu0 %v736
        %1291 = vmatpush.bf16.msra.mxu0 %v733
        %1292 = vmatpush.bf16.msra.mxu0 %v730
        %1293 = vmatpush.bf16.msra.mxu0 %v727
        %1294 = vmatpush.bf16.msra.mxu0 %v724
        %1295 = vmatpush.bf16.msra.mxu0 %v721
        %1296 = vmatpush.bf16.msra.mxu0 %v718
        %1297 = vmatpush.bf16.msra.mxu0 %v715
        %1298 = vmatmul.bf16.gmra.mxu0 %v1289
        %v1299 = vpop.f32.mrf.mxu0
        %v1300 = vadd.f32 0.0, %v1299
        %v1301 = vpop.f32.mrf.mxu0
        %1302 = vdwg.mxu0
        %1303 = vmatpush.bf16.msra.mxu0 %v737
        %1304 = vmatpush.bf16.msra.mxu0 %v734
        %1305 = vmatpush.bf16.msra.mxu0 %v731
        %1306 = vmatpush.bf16.msra.mxu0 %v728
        %1307 = vmatpush.bf16.msra.mxu0 %v725
        %1308 = vmatpush.bf16.msra.mxu0 %v722
        %1309 = vmatpush.bf16.msra.mxu0 %v719
        %1310 = vmatpush.bf16.msra.mxu0 %v716
        %1311 = vmatmul.bf16.gmra.mxu0 %v1289
        %v1312 = vpop.f32.mrf.mxu0
        %v1313 = vadd.f32 0.0, %v1312
        %v1314 = vpop.f32.mrf.mxu0
        %1315 = vdwg.mxu0
        %1316 = vmatpush.bf16.msra.mxu0 %v738
        %1317 = vmatpush.bf16.msra.mxu0 %v735
        %1318 = vmatpush.bf16.msra.mxu0 %v732
        %1319 = vmatpush.bf16.msra.mxu0 %v729
        %1320 = vmatpush.bf16.msra.mxu0 %v726
        %1321 = vmatpush.bf16.msra.mxu0 %v723
        %1322 = vmatpush.bf16.msra.mxu0 %v720
        %1323 = vmatpush.bf16.msra.mxu0 %v717
        %1324 = vmatmul.bf16.gmra.mxu0 %v1289
        %v1325 = vpop.f32.mrf.mxu0
        %v1326 = vadd.f32 0.0, %v1325
        %v1327 = vpop.f32.mrf.mxu0
        %1328 = vdwg.mxu0
        %v1329 = vadd.f32 %v539, %v1300
        %v1330 = vxor.u32 %v1329, 2147483648
        %v1331 = vmul.f32 %v1330, 1.442695
        %v1332 = vpow.pop %v1331
        %v1333 = vadd.f32 %v1332, 1.0
        %v1334 = vrcp.pop %v1333
        %v1335 = vmul.f32 %v1333, %v1334
        %v1336 = vsub.f32 1.0, %v1335
        %v1337 = vmul.f32 %v1334, %v1336
        %v1338 = vadd.f32 %v1334, %v1337
        %vm1339 = vweird.f32 %v1333
        %vm1340 = vweird.f32 %v1334
        %vm1341 = vmor %vm1339, %vm1340
        %v1342 = vsel %vm1341, %v1334, %v1338
        %v1343 = vand.u32 2147483647, %v1333
        %vm1344 = vcmp.eq.f32.partialorder %v1343, 8.507059e+37
        %v1345 = vand.u32 %v1333, 2147483648
        %v1346 = vor.u32 1.1754944e-38, %v1345
        %v1347 = vsel %vm1344, %v1346, %v1342
        %v1348 = vmul.f32 1.0, %v1347
        %v1349 = vadd.f32 %v568, %v1313
        %v1350 = vxor.u32 %v1349, 2147483648
        %v1351 = vmul.f32 %v1350, 1.442695
        %v1352 = vpow.pop %v1351
        %v1353 = vadd.f32 %v1352, 1.0
        %v1354 = vrcp.pop %v1353
        %v1355 = vmul.f32 %v1353, %v1354
        %v1356 = vsub.f32 1.0, %v1355
        %v1357 = vmul.f32 %v1354, %v1356
        %v1358 = vadd.f32 %v1354, %v1357
        %vm1359 = vweird.f32 %v1353
        %vm1360 = vweird.f32 %v1354
        %vm1361 = vmor %vm1359, %vm1360
        %v1362 = vsel %vm1361, %v1354, %v1358
        %v1363 = vand.u32 2147483647, %v1353
        %vm1364 = vcmp.eq.f32.partialorder %v1363, 8.507059e+37
        %v1365 = vand.u32 %v1353, 2147483648
        %v1366 = vor.u32 1.1754944e-38, %v1365
        %v1367 = vsel %vm1364, %v1366, %v1362
        %v1368 = vmul.f32 1.0, %v1367
        %v1369 = vmul.f32 %v1348, %v1326
        %v1370 = vadd.f32 %v597, %v1369
        %v1371 = vtanh.pop %v1370
        %v1372 = vsub.f32 %v1286, %v1371
        %v1373 = vmul.f32 %v1368, %v1372
        %v1374 = vadd.f32 %v1371, %v1373
        %s1375 = scalar_lea.vmem [#allocation3], 48
        %1376 = vst [vmem:[%s1375] sm:$0xff] %v1374
        %v1377 = vpack.c.bf16 %v1374, %v1374
        %1378 = vmatpush.bf16.msra.mxu0 %v736
        %1379 = vmatpush.bf16.msra.mxu0 %v733
        %1380 = vmatpush.bf16.msra.mxu0 %v730
        %1381 = vmatpush.bf16.msra.mxu0 %v727
        %1382 = vmatpush.bf16.msra.mxu0 %v724
        %1383 = vmatpush.bf16.msra.mxu0 %v721
        %1384 = vmatpush.bf16.msra.mxu0 %v718
        %1385 = vmatpush.bf16.msra.mxu0 %v715
        %1386 = vmatmul.bf16.gmra.mxu0 %v1377
        %v1387 = vpop.f32.mrf.mxu0
        %v1388 = vadd.f32 0.0, %v1387
        %v1389 = vpop.f32.mrf.mxu0
        %1390 = vdwg.mxu0
        %1391 = vmatpush.bf16.msra.mxu0 %v737
        %1392 = vmatpush.bf16.msra.mxu0 %v734
        %1393 = vmatpush.bf16.msra.mxu0 %v731
        %1394 = vmatpush.bf16.msra.mxu0 %v728
        %1395 = vmatpush.bf16.msra.mxu0 %v725
        %1396 = vmatpush.bf16.msra.mxu0 %v722
        %1397 = vmatpush.bf16.msra.mxu0 %v719
        %1398 = vmatpush.bf16.msra.mxu0 %v716
        %1399 = vmatmul.bf16.gmra.mxu0 %v1377
        %v1400 = vpop.f32.mrf.mxu0
        %v1401 = vadd.f32 0.0, %v1400
        %v1402 = vpop.f32.mrf.mxu0
        %1403 = vdwg.mxu0
        %1404 = vmatpush.bf16.msra.mxu0 %v738
        %1405 = vmatpush.bf16.msra.mxu0 %v735
        %1406 = vmatpush.bf16.msra.mxu0 %v732
        %1407 = vmatpush.bf16.msra.mxu0 %v729
        %1408 = vmatpush.bf16.msra.mxu0 %v726
        %1409 = vmatpush.bf16.msra.mxu0 %v723
        %1410 = vmatpush.bf16.msra.mxu0 %v720
        %1411 = vmatpush.bf16.msra.mxu0 %v717
        %1412 = vmatmul.bf16.gmra.mxu0 %v1377
        %v1413 = vpop.f32.mrf.mxu0
        %v1414 = vadd.f32 0.0, %v1413
        %v1415 = vpop.f32.mrf.mxu0
        %1416 = vdwg.mxu0
        %v1417 = vadd.f32 %v541, %v1388
        %v1418 = vxor.u32 %v1417, 2147483648
        %v1419 = vmul.f32 %v1418, 1.442695
        %v1420 = vpow.pop %v1419
        %v1421 = vadd.f32 %v1420, 1.0
        %v1422 = vrcp.pop %v1421
        %v1423 = vmul.f32 %v1421, %v1422
        %v1424 = vsub.f32 1.0, %v1423
        %v1425 = vmul.f32 %v1422, %v1424
        %v1426 = vadd.f32 %v1422, %v1425
        %vm1427 = vweird.f32 %v1421
        %vm1428 = vweird.f32 %v1422
        %vm1429 = vmor %vm1427, %vm1428
        %v1430 = vsel %vm1429, %v1422, %v1426
        %v1431 = vand.u32 2147483647, %v1421
        %vm1432 = vcmp.eq.f32.partialorder %v1431, 8.507059e+37
        %v1433 = vand.u32 %v1421, 2147483648
        %v1434 = vor.u32 1.1754944e-38, %v1433
        %v1435 = vsel %vm1432, %v1434, %v1430
        %v1436 = vmul.f32 1.0, %v1435
        %v1437 = vadd.f32 %v570, %v1401
        %v1438 = vxor.u32 %v1437, 2147483648
        %v1439 = vmul.f32 %v1438, 1.442695
        %v1440 = vpow.pop %v1439
        %v1441 = vadd.f32 %v1440, 1.0
        %v1442 = vrcp.pop %v1441
        %v1443 = vmul.f32 %v1441, %v1442
        %v1444 = vsub.f32 1.0, %v1443
        %v1445 = vmul.f32 %v1442, %v1444
        %v1446 = vadd.f32 %v1442, %v1445
        %vm1447 = vweird.f32 %v1441
        %vm1448 = vweird.f32 %v1442
        %vm1449 = vmor %vm1447, %vm1448
        %v1450 = vsel %vm1449, %v1442, %v1446
        %v1451 = vand.u32 2147483647, %v1441
        %vm1452 = vcmp.eq.f32.partialorder %v1451, 8.507059e+37
        %v1453 = vand.u32 %v1441, 2147483648
        %v1454 = vor.u32 1.1754944e-38, %v1453
        %v1455 = vsel %vm1452, %v1454, %v1450
        %v1456 = vmul.f32 1.0, %v1455
        %v1457 = vmul.f32 %v1436, %v1414
        %v1458 = vadd.f32 %v599, %v1457
        %v1459 = vtanh.pop %v1458
        %v1460 = vsub.f32 %v1374, %v1459
        %v1461 = vmul.f32 %v1456, %v1460
        %v1462 = vadd.f32 %v1459, %v1461
        %s1463 = scalar_lea.vmem [#allocation3], 56
        %1464 = vst [vmem:[%s1463] sm:$0xff] %v1462
        %1465 = vst [vmem:[#allocation2] sm:$0xff] %v1462
        %v1466 = vld [vmem:[#allocation3] sm:$0xff]
        %v1467 = vld [vmem:[#allocation3 + $0x8] sm:$0xff]
        %v1468 = vld [vmem:[#allocation3 + $0x10] sm:$0xff]
        %v1469 = vld [vmem:[#allocation3 + $0x18] sm:$0xff]
        %v1470 = vld [vmem:[#allocation3 + $0x20] sm:$0xff]
        %v1471 = vld [vmem:[#allocation3 + $0x28] sm:$0xff]
        %v1472 = vld [vmem:[#allocation3 + $0x30] sm:$0xff]
        %v1473 = vld [vmem:[#allocation3 + $0x38] sm:$0xff]
        %v1474 = vpack.c.bf16 %v1467, %v1466
        %v1475 = vpack.c.bf16 %v1469, %v1468
        %v1476 = vpack.c.bf16 %v1471, %v1470
        %v1477 = vpack.c.bf16 %v1473, %v1472
        %v1478 = vld [vmem:[%s3] sm:$0xf]
        %v1479 = vld [vmem:[%s3 + $0x4] sm:$0xf]
        %v1480 = vld [vmem:[%s3 + $0x8] sm:$0xf]
        %v1481 = vld [vmem:[%s3 + $0xc] sm:$0xf]
        %v1482 = vld [vmem:[%s3 + $0x10] sm:$0xf]
        %v1483 = vld [vmem:[%s3 + $0x14] sm:$0xf]
        %v1484 = vld [vmem:[%s3 + $0x18] sm:$0xf]
        %v1485 = vld [vmem:[%s3 + $0x1c] sm:$0xf]
        %v1486 = vld [vmem:[%s3 + $0x20] sm:$0xf]
        %v1487 = vld [vmem:[%s3 + $0x24] sm:$0xf]
        %v1488 = vld [vmem:[%s3 + $0x28] sm:$0xf]
        %v1489 = vld [vmem:[%s3 + $0x2c] sm:$0xf]
        %v1490 = vld [vmem:[%s3 + $0x30] sm:$0xf]
        %v1491 = vld [vmem:[%s3 + $0x34] sm:$0xf]
        %v1492 = vld [vmem:[%s3 + $0x38] sm:$0xf]
        %v1493 = vld [vmem:[%s3 + $0x3c] sm:$0xf]
        %v1510 = vunpack.c.l.b16 %v1478
        %v1511 = vunpack.c.l.b16 %v1479
        %v1512 = vunpack.c.l.b16 %v1480
        %v1513 = vunpack.c.l.b16 %v1481
        %v1514 = vunpack.c.l.b16 %v1482
        %v1515 = vunpack.c.l.b16 %v1483
        %v1516 = vunpack.c.l.b16 %v1484
        %v1517 = vunpack.c.l.b16 %v1485
        %v1518 = vunpack.c.l.b16 %v1486
        %v1519 = vunpack.c.l.b16 %v1487
        %v1520 = vunpack.c.l.b16 %v1488
        %v1521 = vunpack.c.l.b16 %v1489
        %v1522 = vunpack.c.l.b16 %v1490
        %v1523 = vunpack.c.l.b16 %v1491
        %v1524 = vunpack.c.l.b16 %v1492
        %v1525 = vunpack.c.l.b16 %v1493
        %v1526 = vpack.c.b16 %v1511, %v1510
        %v1527 = vpack.c.b16 %v1513, %v1512
        %v1528 = vpack.c.b16 %v1515, %v1514
        %v1529 = vpack.c.b16 %v1517, %v1516
        %v1530 = vpack.c.b16 %v1519, %v1518
        %v1531 = vpack.c.b16 %v1521, %v1520
        %v1532 = vpack.c.b16 %v1523, %v1522
        %v1533 = vpack.c.b16 %v1525, %v1524
        %1542 = vmatpush.bf16.msra.mxu0 %v1533
        %1543 = vmatpush.bf16.msra.mxu0 %v1532
        %1544 = vmatpush.bf16.msra.mxu0 %v1531
        %1545 = vmatpush.bf16.msra.mxu0 %v1530
        %1546 = vmatpush.bf16.msra.mxu0 %v1529
        %1547 = vmatpush.bf16.msra.mxu0 %v1528
        %1548 = vmatpush.bf16.msra.mxu0 %v1527
        %1549 = vmatpush.bf16.msra.mxu0 %v1526
        %1550 = vmatmul.bf16.gmra.mxu0 %v1474
        %v1551 = vpop.f32.mrf.mxu0
        %v1552 = vadd.f32 0.0, %v1551
        %v1553 = vpop.f32.mrf.mxu0
        %v1554 = vadd.f32 0.0, %v1553
        %1555 = vmatmul.bf16.gmra.mxu0 %v1475
        %v1556 = vpop.f32.mrf.mxu0
        %v1557 = vadd.f32 0.0, %v1556
        %v1558 = vpop.f32.mrf.mxu0
        %v1559 = vadd.f32 0.0, %v1558
        %1560 = vmatmul.bf16.gmra.mxu0 %v1476
        %v1561 = vpop.f32.mrf.mxu0
        %v1562 = vadd.f32 0.0, %v1561
        %v1563 = vpop.f32.mrf.mxu0
        %v1564 = vadd.f32 0.0, %v1563
        %1565 = vmatmul.bf16.gmra.mxu0 %v1477
        %v1566 = vpop.f32.mrf.mxu0
        %v1567 = vadd.f32 0.0, %v1566
        %v1568 = vpop.f32.mrf.mxu0
        %v1569 = vadd.f32 0.0, %v1568
        %1570 = vdwg.mxu0
        %v1571 = vrot.slane %v1557, 4
        %vm1572 = vcmask 1047556
        %v1573 = vsel %vm1572, %v1571, %v1552
        %v1574 = vrot.slane %v1552, 4
        %v1575 = vsel %vm1572, %v1557, %v1574
        %v1577 = vunpack.c.l.s4 1983009808
        %v1578 = vunpack.c.0.s8 %v1577
        %v1579 = vperm.slane %v1573, %v1578
        %v1581 = vunpack.c.l.s4 1983009808
        %v1582 = vunpack.c.0.s8 %v1581
        %v1583 = vperm.slane %v1575, %v1582
        %v1584 = vrot.slane %v1559, 4
        %v1585 = vsel %vm1572, %v1584, %v1554
        %v1586 = vrot.slane %v1554, 4
        %v1587 = vsel %vm1572, %v1559, %v1586
        %v1589 = vunpack.c.l.s4 1983009808
        %v1590 = vunpack.c.0.s8 %v1589
        %v1591 = vperm.slane %v1585, %v1590
        %v1593 = vunpack.c.l.s4 1983009808
        %v1594 = vunpack.c.0.s8 %v1593
        %v1595 = vperm.slane %v1587, %v1594
        %v1596 = vrot.slane %v1567, 4
        %v1597 = vsel %vm1572, %v1596, %v1562
        %v1598 = vrot.slane %v1562, 4
        %v1599 = vsel %vm1572, %v1567, %v1598
        %v1601 = vunpack.c.l.s4 1983009808
        %v1602 = vunpack.c.0.s8 %v1601
        %v1603 = vperm.slane %v1597, %v1602
        %v1605 = vunpack.c.l.s4 1983009808
        %v1606 = vunpack.c.0.s8 %v1605
        %v1607 = vperm.slane %v1599, %v1606
        %v1608 = vrot.slane %v1569, 4
        %v1609 = vsel %vm1572, %v1608, %v1564
        %v1610 = vrot.slane %v1564, 4
        %v1611 = vsel %vm1572, %v1569, %v1610
        %v1613 = vunpack.c.l.s4 1983009808
        %v1614 = vunpack.c.0.s8 %v1613
        %v1615 = vperm.slane %v1609, %v1614
        %v1617 = vunpack.c.l.s4 1983009808
        %v1618 = vunpack.c.0.s8 %v1617
        %v1619 = vperm.slane %v1611, %v1618
        %v1620 = vrot.slane %v1591, 4
        %v1621 = vsel %vm1572, %v1620, %v1579
        %v1622 = vrot.slane %v1579, 4
        %v1623 = vsel %vm1572, %v1591, %v1622
        %v1625 = vunpack.c.l.s4 1934713408
        %v1626 = vunpack.c.0.s8 %v1625
        %v1627 = vperm.slane %v1621, %v1626
        %v1629 = vunpack.c.l.s4 1934713408
        %v1630 = vunpack.c.0.s8 %v1629
        %v1631 = vperm.slane %v1623, %v1630
        %v1632 = vrot.slane %v1595, 4
        %v1633 = vsel %vm1572, %v1632, %v1583
        %v1634 = vrot.slane %v1583, 4
        %v1635 = vsel %vm1572, %v1595, %v1634
        %v1637 = vunpack.c.l.s4 1934713408
        %v1638 = vunpack.c.0.s8 %v1637
        %v1639 = vperm.slane %v1633, %v1638
        %v1641 = vunpack.c.l.s4 1934713408
        %v1642 = vunpack.c.0.s8 %v1641
        %v1643 = vperm.slane %v1635, %v1642
        %v1644 = vrot.slane %v1615, 4
        %v1645 = vsel %vm1572, %v1644, %v1603
        %v1646 = vrot.slane %v1603, 4
        %v1647 = vsel %vm1572, %v1615, %v1646
        %v1649 = vunpack.c.l.s4 1934713408
        %v1650 = vunpack.c.0.s8 %v1649
        %v1651 = vperm.slane %v1645, %v1650
        %v1653 = vunpack.c.l.s4 1934713408
        %v1654 = vunpack.c.0.s8 %v1653
        %v1655 = vperm.slane %v1647, %v1654
        %v1656 = vrot.slane %v1619, 4
        %v1657 = vsel %vm1572, %v1656, %v1607
        %v1658 = vrot.slane %v1607, 4
        %v1659 = vsel %vm1572, %v1619, %v1658
        %v1661 = vunpack.c.l.s4 1934713408
        %v1662 = vunpack.c.0.s8 %v1661
        %v1663 = vperm.slane %v1657, %v1662
        %v1665 = vunpack.c.l.s4 1934713408
        %v1666 = vunpack.c.0.s8 %v1665
        %v1667 = vperm.slane %v1659, %v1666
        %v1668 = vrot.slane %v1651, 4
        %v1669 = vsel %vm1572, %v1668, %v1627
        %v1670 = vrot.slane %v1627, 4
        %v1671 = vsel %vm1572, %v1651, %v1670
        %v1672 = vrot.slane %v1655, 4
        %v1673 = vsel %vm1572, %v1672, %v1631
        %v1674 = vrot.slane %v1631, 4
        %v1675 = vsel %vm1572, %v1655, %v1674
        %v1676 = vrot.slane %v1663, 4
        %v1677 = vsel %vm1572, %v1676, %v1639
        %v1678 = vrot.slane %v1639, 4
        %v1679 = vsel %vm1572, %v1663, %v1678
        %v1680 = vrot.slane %v1667, 4
        %v1681 = vsel %vm1572, %v1680, %v1643
        %v1682 = vrot.slane %v1643, 4
        %v1683 = vsel %vm1572, %v1667, %v1682
        %1684 = vst [vmem:[%s371] sm:$0xff] %v1669
        %1685 = vst [vmem:[%s371 + $0x8] sm:$0xff] %v1671
        %1686 = vst [vmem:[%s371 + $0x10] sm:$0xff] %v1673
        %1687 = vst [vmem:[%s371 + $0x18] sm:$0xff] %v1675
        %1688 = vst [vmem:[%s371 + $0x20] sm:$0xff] %v1677
        %1689 = vst [vmem:[%s371 + $0x28] sm:$0xff] %v1679
        %1690 = vst [vmem:[%s371 + $0x30] sm:$0xff] %v1681
        %1691 = vst [vmem:[%s371 + $0x38] sm:$0xff] %v1683
        %p1692 = scmp.eq.s32.totalorder %s28, 1
        // Predicated region
        $region90: #{tpu_custom_call.1} parent=76 // pred_check
          %p1693 = pneg %p1692
        $region91: #{tpu_custom_call.1} parent=76 // pred_check_branch
          %1695 = sbr.rel (%p1693) target = $region93
        $region92: #{tpu_custom_call.1} parent=76 // pred_region
          %v1696 = vld [vmem:[#allocation2] sm:$0xff]
          %1697 = vst [vmem:[#allocation9] sm:$0xff] %v1696
        $region93: #{tpu_custom_call.1} parent=76 // pred_fallthru
          _
        %s1698 = sand.u32 %s162, 1
        %s1699 = scalar_lea.sflag [#allocation7], %s1698
        %s1700 = sand.u32 %s162, 1
        %s1701 = smul.addr %s1700, 64
        %s1702 = scalar_lea.vmem [#allocation8], %s1701
        // Predicated region
        $region94: #{tpu_custom_call.1} parent=76 // pred_check
          %p1703 = pneg %p172
        $region95: #{tpu_custom_call.1} parent=76 // pred_check_branch
          %1705 = sbr.rel (%p1703) target = $region97
        $region96: #{tpu_custom_call.1} parent=76 // pred_region
          %s1706 = smul.u32 8, %s27
          %1708 = vsyncadd %s1699, 0
          %s1709 = smul.addr %s1706, 2
          %s1710 = sadd.s32 %s28, %s1709
          %s1711 = smul.addr %s1710, 8
          %s1712 = scalar_lea.hbm %s5, %s1711
          %s1713 = sshll.u32 %s1702, 4
          %s1714 = int_to_ptr.vmem [resolvable:$true] %s1713
          %s1715 = sshll.u32 %s1712, 4
          %s1716 = int_to_ptr.hbm [resolvable:$true] %s1715
          %1721 = dma.vmem_to_hbm [thread:$0]  %s1714, 1024, %s1716, %s1699, 128, 256, 8
        $region97: #{tpu_custom_call.1} parent=76 // pred_fallthru
          _
        // Predicated region
        $region98: #{tpu_custom_call.1} parent=76 // pred_check
          %p1722 = pneg %p198
        $region99: #{tpu_custom_call.1} parent=76 // pred_check_branch
          %1724 = sbr.rel (%p1722) target = $region101
        $region100: #{tpu_custom_call.1} parent=76 // pred_region
          %1726 = vsyncadd [#allocation10], 0
          %s1727 = smul.addr %s27, 8
          %s1728 = scalar_lea.hbm %s6, %s1727
          %s1730 = sshll.u32 [#allocation9], 4
          %s1731 = int_to_ptr.vmem [resolvable:$true] %s1730
          %s1732 = sshll.u32 %s1728, 4
          %s1733 = int_to_ptr.hbm [resolvable:$true] %s1732
          %1735 = dma.vmem_to_hbm [thread:$0]  %s1731, 128, %s1733, [#allocation10]
        $region101: #{tpu_custom_call.1} parent=76 // pred_fallthru
          _
        // Predicated region
        $region102: #{tpu_custom_call.1} parent=76 // pred_check
          %p1736 = pneg %p198
        $region103: #{tpu_custom_call.1} parent=76 // pred_check_branch
          %1738 = sbr.rel (%p1736) target = $region105
        $region104: #{tpu_custom_call.1} parent=76 // pred_region
          %1740 = dma.done [#allocation10], 128
        $region105: #{tpu_custom_call.1} parent=76 // pred_fallthru
          _
      $region77: #{tpu_custom_call.1} parent=5 // pred_fallthru
        _
      %p1741 = scmp.le.s32.totalorder 2, %s18
      // Predicated region
      $region106: #{tpu_custom_call.1} parent=5 // pred_check
        %p1742 = pneg %p1741
      $region107: #{tpu_custom_call.1} parent=5 // pred_check_branch
        %1744 = sbr.rel (%p1742) target = $region109
      $region108: #{tpu_custom_call.1} parent=5 // pred_region
        %s1745 = ssub.s32 %s18, 2
        // Predicated region
        $region110: #{tpu_custom_call.1} parent=108 // pred_check
          %p1746 = pneg %p178
        $region111: #{tpu_custom_call.1} parent=108 // pred_check_branch
          %1748 = sbr.rel (%p1746) target = $region113
        $region112: #{tpu_custom_call.1} parent=108 // pred_region
          %s1749 = sand.u32 %s163, 1
          %s1750 = scalar_lea.sflag [#allocation7], %s1749
          %s1751 = sand.u32 %s163, 1
          %s1752 = smul.addr %s1751, 64
          %s1753 = scalar_lea.vmem [#allocation8], %s1752
          %1755 = dma.done %s1750, 1024
        $region113: #{tpu_custom_call.1} parent=108 // pred_fallthru
          _
      $region109: #{tpu_custom_call.1} parent=5 // pred_fallthru
        _
    $region6: #{tpu_custom_call.1} parent=1 // loop_footer
      %s22 = sadd.s32 1, %s18
    $region7: #{tpu_custom_call.1} parent=1 // loop_footer_branch
      %17 = sbr.rel target = $region3
    $region8: #{tpu_custom_call.1} parent=1 // loop_exit
      _
    %1756 = vsyncpa [#allocation6], 1
    %s1757 = scalar_lea.sflag [#allocation6], 1
    %1758 = vsyncpa %s1757, 1
    %1759 = vsyncpa [#allocation7], 1
    %s1760 = scalar_lea.sflag [#allocation7], 1
    %1761 = vsyncpa %s1760, 1
    %1762 = vsyncpa [#allocation10], 1

</llo_original>
